<compile_context>
chip_gen: v7x
topology: tpu7x:2x2x1
jax: 0.10.0
libtpu: 0.0.40
codegen_flags: <defaults>
</compile_context>

<pallas_src>
from functools import partial

import jax
import jax.numpy as jnp
from jax import lax
from jax.experimental import pallas as pl
from jax.experimental.pallas import tpu as pltpu

KSIZE = 7
PAD = 3  # padding for kernel_size=7


def spatial_attention_kernel(x_ref, w_ref, o_ref, sum_ref, max_ref, pad_ref,
                             *, H, W):
    # x_ref  : (Bn, Bc, H*W)              VMEM  — lane-dense (H*W on lanes)
    # w_ref  : (2*49,)                    SMEM  — flat taps, idx = c*49+ky*7+kx
    #                                             (avg-channel taps pre-scaled by 1/C)
    # o_ref  : (Bn, 1, H*W)               VMEM  — resident across the channel axis
    # sum_ref: (Bn, H*W) f32              VMEM scratch — running channel sum
    # max_ref: (Bn, H*W) f32              VMEM scratch — running channel max
    # pad_ref: (Bn, H+2P, 2*(W+2P)) f32   VMEM scratch — [avg | max] padded planes
    Bn = x_ref.shape[0]
    WP = W + 2 * PAD

    c_i = pl.program_id(1)
    n_c = pl.num_programs(1)

    # ---- running channel sum & max: widen fused into the reduce (no f32 copy) ----
    x = x_ref[...]
    part_sum = jnp.sum(x, axis=1, dtype=jnp.float32)      # (Bn, H*W)
    part_max = jnp.max(x, axis=1).astype(jnp.float32)     # (Bn, H*W)

    @pl.when(c_i == 0)
    def _():
        sum_ref[...] = part_sum
        max_ref[...] = part_max
        # Zero only the conv-padding border of the scratch (it is never
        # overwritten below); the interior is fully rewritten each batch block.
        zrow = jnp.zeros((Bn, PAD, 2 * WP), jnp.float32)
        pad_ref[:, :PAD, :] = zrow
        pad_ref[:, PAD + H:, :] = zrow
        zedge = jnp.zeros((Bn, H, PAD), jnp.float32)
        zmid = jnp.zeros((Bn, H, 2 * PAD), jnp.float32)
        pad_ref[:, PAD:PAD + H, :PAD] = zedge
        pad_ref[:, PAD:PAD + H, PAD + W:WP + PAD] = zmid
        pad_ref[:, PAD:PAD + H, WP + PAD + W:] = zedge

    @pl.when(c_i > 0)
    def _():
        sum_ref[...] = sum_ref[...] + part_sum
        max_ref[...] = jnp.maximum(max_ref[...], part_max)

    # ---- last channel block: 7x7 conv (2 in -> 1 out, pad=3, no bias) + sigmoid ----
    @pl.when(c_i == n_c - 1)
    def _():
        # Scatter the flat accumulators into the 2-D padded conv input:
        # sum (1/C folded into its taps) in lanes [PAD, PAD+W), max in lanes
        # [WP+PAD, WP+PAD+W) of the same rows. Once per batch block.
        for y in range(H):
            lo, hi = y * W, (y + 1) * W
            pad_ref[:, PAD + y:PAD + y + 1, PAD:PAD + W] = (
                sum_ref[:, lo:hi][:, None, :])
            pad_ref[:, PAD + y:PAD + y + 1, WP + PAD:WP + PAD + W] = (
                max_ref[:, lo:hi][:, None, :])

        # PyTorch conv2d = cross-correlation:
        #   out[y, x] += w[c, ky, kx] * padded_c[y + ky, x + kx]
        # 7 hoisted row-band loads feed both input channels; the 49 taps
        # lane-slice the loaded band (slices lower to XLU lane shifts that
        # overlap the VPU MACs; pltpu.roll would still need the same
        # half-plane slices afterwards, so slices are kept).
        acc = jnp.zeros((Bn, H, W), jnp.float32)
        for dy in range(KSIZE):
            band = pad_ref[:, dy:dy + H, :]                  # (Bn, H, 2*WP)
            for dx in range(KSIZE):
                w_avg = w_ref[0 * KSIZE * KSIZE + dy * KSIZE + dx]
                w_max = w_ref[1 * KSIZE * KSIZE + dy * KSIZE + dx]
                acc = acc + (w_avg * band[:, :, dx:dx + W]
                             + w_max * band[:, :, WP + dx:WP + dx + W])

        # sigmoid(z) = 0.5*(tanh(z/2)+1): tanh on the EUP, no VPU divide.
        out = 0.5 * (jnp.tanh(0.5 * acc) + 1.0)

        # Gather back into the lane-dense output block (dense HBM writeback).
        for y in range(H):
            lo, hi = y * W, (y + 1) * W
            o_ref[:, :, lo:hi] = out[:, y:y + 1, :].astype(o_ref.dtype)


def _divisors_desc(n):
    return [d for d in range(n, 0, -1) if n % d == 0]


def _num_tensorcores():
    # Only multi-TensorCore parts (v4 megacore / v5p / v7x) benefit from
    # splitting the "parallel" batch axis; v5e / v6e have a single TC.
    try:
        kind = jax.devices()[0].device_kind.lower()
    except Exception:
        return 1
    return 2 if any(t in kind for t in ("v7", "v4", "v5p")) else 1


def _vmem_capacity_bytes():
    try:
        cap = int(getattr(pltpu.get_tpu_info(), "vmem_capacity_bytes", 0))
        if cap > 0:
            return cap
    except Exception:
        pass
    return 64 << 20   # conservative default (v7x per-core VMEM)


def spatial_attention(x, weight):
    """x: (N, C, H, W); weight: (1, 2, 7, 7) OIHW conv weight, no bias."""
    N, C, H, W = x.shape
    HW = H * W
    assert weight.shape == (1, 2, KSIZE, KSIZE)

    # Fold the 1/C of the channel mean into the avg-channel taps (host-side,
    # 49 scalars — not the "pre-scale the input tensor" anti-pattern).
    w = weight.astype(jnp.float32)
    w = w.at[:, 0].multiply(1.0 / C)
    w_flat = w.reshape(-1)                                 # idx = c*49 + ky*7 + kx

    # Lane-dense layout plumbing: spatial dims flattened onto the lane axis.
    x_flat = x.reshape(N, C, HW)

    itemsize = jnp.dtype(x.dtype).itemsize
    n_cores = _num_tensorcores()
    phys_vmem = _vmem_capacity_bytes()
    # Scoped-VMEM target with headroom for compiler temps, re-derived per
    # generation (64 MiB physical on v7x vs 128 MiB on v5e/v6e).
    vmem_limit = max(16 << 20, min((phys_vmem * 3) // 4, 96 << 20))
    budget = vmem_limit // 2

    def vmem_bytes(bn, bc):
        x_buf = 2 * bn * bc * HW * itemsize                # double-buffered input
        o_buf = 2 * bn * HW * itemsize                     # double-buffered output
        scr = bn * (2 * HW + (H + 2 * PAD) * 2 * (W + 2 * PAD)) * 4
        return x_buf + o_buf + scr

    divs_n = _divisors_desc(N)
    divs_c = _divisors_desc(C)

    # Batch blocking: one even share per TensorCore on multi-core parts,
    # a single batch block (grid_n == 1) preferred on single-core parts.
    if n_cores > 1 and N >= n_cores:
        bn_candidates = ([d for d in divs_n if (N // d) % n_cores == 0]
                         or divs_n)
    else:
        bn_candidates = divs_n

    def largest_fitting_bc(bn):
        for bc in divs_c:
            if vmem_bytes(bn, bc) <= budget:
                return bc
        return None

    # Joint (block_n, block_c) selection with a binding VMEM budget:
    # shrink block_n until a useful channel block (>= min(4, C)) fits.
    target_bc = min(4, C)
    block_n, block_c = 1, 1
    for bn in bn_candidates:                               # largest block_n first
        bc = largest_fitting_bc(bn)
        if bc is not None and bc >= target_bc:
            block_n, block_c = bn, bc
            break
    else:
        block_n = 1
        block_c = largest_fitting_bc(1) or 1

    grid_n = N // block_n
    grid_c = C // block_c

    # Make sure the scoped limit covers the chosen tiling (clamped to physical).
    vmem_limit = int(min(phys_vmem,
                         max(vmem_limit, 2 * vmem_bytes(block_n, block_c))))

    kernel = partial(spatial_attention_kernel, H=H, W=W)

    out_flat = pl.pallas_call(
        kernel,
        out_shape=jax.ShapeDtypeStruct((N, 1, HW), x.dtype),
        grid=(grid_n, grid_c),
        in_specs=[
            pl.BlockSpec((block_n, block_c, HW), lambda n, c: (n, c, 0)),
            pl.BlockSpec(memory_space=pltpu.MemorySpace.SMEM),
        ],
        out_specs=pl.BlockSpec((block_n, 1, HW), lambda n, c: (n, 0, 0)),
        scratch_shapes=[
            pltpu.VMEM((block_n, HW), jnp.float32),
            pltpu.VMEM((block_n, HW), jnp.float32),
            pltpu.VMEM((block_n, H + 2 * PAD, 2 * (W + 2 * PAD)), jnp.float32),
        ],
        compiler_params=pltpu.CompilerParams(
            dimension_semantics=("parallel", "arbitrary"),
            vmem_limit_bytes=vmem_limit),
    )(x_flat, w_flat)

    return out_flat.reshape(N, 1, H, W)


if __name__ == "__main__":
    key = jax.random.PRNGKey(0)
    kx, kw = jax.random.split(key)

    # small shapes consistent with the module: N=2, C=4, H=W=16
    x = jax.random.normal(kx, (2, 4, 16, 16), dtype=jnp.float32)
    # deterministic synthetic conv weight (nn.Conv2d(2, 1, 7, bias=False) shape)
    weight = jax.random.normal(kw, (1, 2, KSIZE, KSIZE), dtype=jnp.float32) * 0.1

    out = spatial_attention(x, weight)
    out = jax.block_until_ready(out)

    # pure-JAX reference (exact forward-pass semantics)
    avg_ref = jnp.mean(x, axis=1, keepdims=True)
    max_ref = jnp.max(x, axis=1, keepdims=True)
    cat = jnp.concatenate([avg_ref, max_ref], axis=1)
    conv = lax.conv_general_dilated(
        cat, weight, window_strides=(1, 1), padding=((PAD, PAD), (PAD, PAD)),
        dimension_numbers=("NCHW", "OIHW", "NCHW"))
    ref = jax.nn.sigmoid(conv)

    assert out.shape == (2, 1, 16, 16), out.shape
    assert jnp.allclose(out, ref, atol=1e-5, rtol=1e-5), float(
        jnp.max(jnp.abs(out - ref)))
    print("KERNEL_OK")
</pallas_src>

<mosaic_0001>
module attributes {stable_mosaic.version = 11 : i64} {
  func.func @spatial_attention_kernel(%arg0: i32, %arg1: i32, %arg2: memref<2x4x256xf32, #tpu.memory_space<vmem>>, %arg3: memref<98xf32, #tpu.memory_space<smem>>, %arg4: memref<2x1x256xf32, #tpu.memory_space<vmem>>, %arg5: memref<2x256xf32, #tpu.memory_space<vmem>>, %arg6: memref<2x256xf32, #tpu.memory_space<vmem>>, %arg7: memref<2x22x44xf32, #tpu.memory_space<vmem>>) attributes {dimension_semantics = [#tpu.dimension_semantics<parallel>, #tpu.dimension_semantics<arbitrary>], iteration_bounds = array<i64: 1, 1>, scalar_prefetch = 0 : i64, scratch_operands = 3 : i64, tpu.core_type = #tpu.core_type<tc>, window_params = [{transform_indices = @transform_0, window_bounds = array<i64: 2, 4, 256>}, {transform_indices = @transform_1, window_bounds = array<i64: 98>}, {transform_indices = @transform_2, window_bounds = array<i64: 2, 1, 256>}]} {
    %c0 = arith.constant 0 : index
    %c0_0 = arith.constant 0 : index
    %c0_1 = arith.constant 0 : index
    %0 = vector.load %arg2[%c0, %c0_0, %c0_1] : memref<2x4x256xf32, #tpu.memory_space<vmem>>, vector<2x4x256xf32>
    %cst = arith.constant dense<0.000000e+00> : vector<2x256xf32>
    %1 = vector.multi_reduction <add>, %0, %cst [1] : vector<2x4x256xf32> to vector<2x256xf32>
    %cst_2 = arith.constant dense<0xFF800000> : vector<2x256xf32>
    %2 = vector.multi_reduction <maximumf>, %0, %cst_2 [1] : vector<2x4x256xf32> to vector<2x256xf32>
    %c0_i32 = arith.constant 0 : i32
    %3 = arith.cmpi eq, %arg1, %c0_i32 : i32
    %4 = arith.extui %3 : i1 to i32
    %c0_i32_3 = arith.constant 0 : i32
    %5 = arith.cmpi ne, %4, %c0_i32_3 : i32
    scf.if %5 {
      %c0_8 = arith.constant 0 : index
      %c0_9 = arith.constant 0 : index
      %12 = vector.load %arg5[%c0_8, %c0_9] : memref<2x256xf32, #tpu.memory_space<vmem>>, vector<2x256xf32>
      tpu.vector_store %arg5[%c0_8, %c0_9], %1 {strides = array<i32>} : memref<2x256xf32, #tpu.memory_space<vmem>>, vector<2x256xf32>,
      %c0_10 = arith.constant 0 : index
      %c0_11 = arith.constant 0 : index
      %13 = vector.load %arg6[%c0_10, %c0_11] : memref<2x256xf32, #tpu.memory_space<vmem>>, vector<2x256xf32>
      tpu.vector_store %arg6[%c0_10, %c0_11], %2 {strides = array<i32>} : memref<2x256xf32, #tpu.memory_space<vmem>>, vector<2x256xf32>,
      %cst_12 = arith.constant 0.000000e+00 : f32
      %14 = vector.broadcast %cst_12 : f32 to vector<2x3x44xf32>
      %c0_13 = arith.constant 0 : index
      %c0_14 = arith.constant 0 : index
      %c0_15 = arith.constant 0 : index
      %15 = vector.load %arg7[%c0_13, %c0_14, %c0_15] : memref<2x22x44xf32, #tpu.memory_space<vmem>>, vector<2x3x44xf32>
      tpu.vector_store %arg7[%c0_13, %c0_14, %c0_15], %14 {strides = array<i32>} : memref<2x22x44xf32, #tpu.memory_space<vmem>>, vector<2x3x44xf32>,
      %c0_16 = arith.constant 0 : index
      %c19 = arith.constant 19 : index
      %c0_17 = arith.constant 0 : index
      %16 = vector.load %arg7[%c0_16, %c19, %c0_17] : memref<2x22x44xf32, #tpu.memory_space<vmem>>, vector<2x3x44xf32>
      tpu.vector_store %arg7[%c0_16, %c19, %c0_17], %14 {strides = array<i32>} : memref<2x22x44xf32, #tpu.memory_space<vmem>>, vector<2x3x44xf32>,
      %cst_18 = arith.constant 0.000000e+00 : f32
      %17 = vector.broadcast %cst_18 : f32 to vector<2x16x3xf32>
      %cst_19 = arith.constant 0.000000e+00 : f32
      %18 = vector.broadcast %cst_19 : f32 to vector<2x16x6xf32>
      %c0_20 = arith.constant 0 : index
      %c3 = arith.constant 3 : index
      %c0_21 = arith.constant 0 : index
      %19 = vector.load %arg7[%c0_20, %c3, %c0_21] : memref<2x22x44xf32, #tpu.memory_space<vmem>>, vector<2x16x3xf32>
      tpu.vector_store %arg7[%c0_20, %c3, %c0_21], %17 {strides = array<i32>} : memref<2x22x44xf32, #tpu.memory_space<vmem>>, vector<2x16x3xf32>,
      %c0_22 = arith.constant 0 : index
      %c3_23 = arith.constant 3 : index
      %c19_24 = arith.constant 19 : index
      %20 = vector.load %arg7[%c0_22, %c3_23, %c19_24] : memref<2x22x44xf32, #tpu.memory_space<vmem>>, vector<2x16x6xf32>
      tpu.vector_store %arg7[%c0_22, %c3_23, %c19_24], %18 {strides = array<i32>} : memref<2x22x44xf32, #tpu.memory_space<vmem>>, vector<2x16x6xf32>,
      %c0_25 = arith.constant 0 : index
      %c3_26 = arith.constant 3 : index
      %c41 = arith.constant 41 : index
      %21 = vector.load %arg7[%c0_25, %c3_26, %c41] : memref<2x22x44xf32, #tpu.memory_space<vmem>>, vector<2x16x3xf32>
      tpu.vector_store %arg7[%c0_25, %c3_26, %c41], %17 {strides = array<i32>} : memref<2x22x44xf32, #tpu.memory_space<vmem>>, vector<2x16x3xf32>,
    } else {
    }
    %c0_i32_4 = arith.constant 0 : i32
    %6 = arith.cmpi sgt, %arg1, %c0_i32_4 : i32
    %7 = arith.extui %6 : i1 to i32
    %c0_i32_5 = arith.constant 0 : i32
    %8 = arith.cmpi ne, %7, %c0_i32_5 : i32
    scf.if %8 {
      %c0_8 = arith.constant 0 : index
      %c0_9 = arith.constant 0 : index
      %12 = vector.load %arg5[%c0_8, %c0_9] : memref<2x256xf32, #tpu.memory_space<vmem>>, vector<2x256xf32>
      %13 = arith.addf %12, %1 : vector<2x256xf32>
      %c0_10 = arith.constant 0 : index
      %c0_11 = arith.constant 0 : index
      %14 = vector.load %arg5[%c0_10, %c0_11] : memref<2x256xf32, #tpu.memory_space<vmem>>, vector<2x256xf32>
      tpu.vector_store %arg5[%c0_10, %c0_11], %13 {strides = array<i32>} : memref<2x256xf32, #tpu.memory_space<vmem>>, vector<2x256xf32>,
      %c0_12 = arith.constant 0 : index
      %c0_13 = arith.constant 0 : index
      %15 = vector.load %arg6[%c0_12, %c0_13] : memref<2x256xf32, #tpu.memory_space<vmem>>, vector<2x256xf32>
      %16 = arith.maximumf %15, %2 : vector<2x256xf32>
      %c0_14 = arith.constant 0 : index
      %c0_15 = arith.constant 0 : index
      %17 = vector.load %arg6[%c0_14, %c0_15] : memref<2x256xf32, #tpu.memory_space<vmem>>, vector<2x256xf32>
      tpu.vector_store %arg6[%c0_14, %c0_15], %16 {strides = array<i32>} : memref<2x256xf32, #tpu.memory_space<vmem>>, vector<2x256xf32>,
    } else {
    }
    %c0_i32_6 = arith.constant 0 : i32
    %9 = arith.cmpi eq, %arg1, %c0_i32_6 : i32
    %10 = arith.extui %9 : i1 to i32
    %c0_i32_7 = arith.constant 0 : i32
    %11 = arith.cmpi ne, %10, %c0_i32_7 : i32
    scf.if %11 {
      %c0_8 = arith.constant 0 : index
      %c0_9 = arith.constant 0 : index
      %12 = vector.load %arg5[%c0_8, %c0_9] : memref<2x256xf32, #tpu.memory_space<vmem>>, vector<2x16xf32>
      %13 = vector.shape_cast %12 : vector<2x16xf32> to vector<2x1x16xf32>
      %c0_10 = arith.constant 0 : index
      %c3 = arith.constant 3 : index
      %c3_11 = arith.constant 3 : index
      %14 = vector.load %arg7[%c0_10, %c3, %c3_11] : memref<2x22x44xf32, #tpu.memory_space<vmem>>, vector<2x1x16xf32>
      tpu.vector_store %arg7[%c0_10, %c3, %c3_11], %13 {strides = array<i32>} : memref<2x22x44xf32, #tpu.memory_space<vmem>>, vector<2x1x16xf32>,
      %c0_12 = arith.constant 0 : index
      %c0_13 = arith.constant 0 : index
      %15 = vector.load %arg6[%c0_12, %c0_13] : memref<2x256xf32, #tpu.memory_space<vmem>>, vector<2x16xf32>
      %16 = vector.shape_cast %15 : vector<2x16xf32> to vector<2x1x16xf32>
      %c0_14 = arith.constant 0 : index
      %c3_15 = arith.constant 3 : index
      %c25 = arith.constant 25 : index
      %17 = vector.load %arg7[%c0_14, %c3_15, %c25] : memref<2x22x44xf32, #tpu.memory_space<vmem>>, vector<2x1x16xf32>
      tpu.vector_store %arg7[%c0_14, %c3_15, %c25], %16 {strides = array<i32>} : memref<2x22x44xf32, #tpu.memory_space<vmem>>, vector<2x1x16xf32>,
      %c0_16 = arith.constant 0 : index
      %c16 = arith.constant 16 : index
      %18 = vector.load %arg5[%c0_16, %c16] : memref<2x256xf32, #tpu.memory_space<vmem>>, vector<2x16xf32>
      %19 = vector.shape_cast %18 : vector<2x16xf32> to vector<2x1x16xf32>
      %c0_17 = arith.constant 0 : index
      %c4 = arith.constant 4 : index
      %c3_18 = arith.constant 3 : index
      %20 = vector.load %arg7[%c0_17, %c4, %c3_18] : memref<2x22x44xf32, #tpu.memory_space<vmem>>, vector<2x1x16xf32>
      tpu.vector_store %arg7[%c0_17, %c4, %c3_18], %19 {strides = array<i32>} : memref<2x22x44xf32, #tpu.memory_space<vmem>>, vector<2x1x16xf32>,
      %c0_19 = arith.constant 0 : index
      %c16_20 = arith.constant 16 : index
      %21 = vector.load %arg6[%c0_19, %c16_20] : memref<2x256xf32, #tpu.memory_space<vmem>>, vector<2x16xf32>
      %22 = vector.shape_cast %21 : vector<2x16xf32> to vector<2x1x16xf32>
      %c0_21 = arith.constant 0 : index
      %c4_22 = arith.constant 4 : index
      %c25_23 = arith.constant 25 : index
      %23 = vector.load %arg7[%c0_21, %c4_22, %c25_23] : memref<2x22x44xf32, #tpu.memory_space<vmem>>, vector<2x1x16xf32>
      tpu.vector_store %arg7[%c0_21, %c4_22, %c25_23], %22 {strides = array<i32>} : memref<2x22x44xf32, #tpu.memory_space<vmem>>, vector<2x1x16xf32>,
      %c0_24 = arith.constant 0 : index
      %c32 = arith.constant 32 : index
      %24 = vector.load %arg5[%c0_24, %c32] : memref<2x256xf32, #tpu.memory_space<vmem>>, vector<2x16xf32>
      %25 = vector.shape_cast %24 : vector<2x16xf32> to vector<2x1x16xf32>
      %c0_25 = arith.constant 0 : index
      %c5 = arith.constant 5 : index
      %c3_26 = arith.constant 3 : index
      %26 = vector.load %arg7[%c0_25, %c5, %c3_26] : memref<2x22x44xf32, #tpu.memory_space<vmem>>, vector<2x1x16xf32>
      tpu.vector_store %arg7[%c0_25, %c5, %c3_26], %25 {strides = array<i32>} : memref<2x22x44xf32, #tpu.memory_space<vmem>>, vector<2x1x16xf32>,
      %c0_27 = arith.constant 0 : index
      %c32_28 = arith.constant 32 : index
      %27 = vector.load %arg6[%c0_27, %c32_28] : memref<2x256xf32, #tpu.memory_space<vmem>>, vector<2x16xf32>
      %28 = vector.shape_cast %27 : vector<2x16xf32> to vector<2x1x16xf32>
      %c0_29 = arith.constant 0 : index
      %c5_30 = arith.constant 5 : index
      %c25_31 = arith.constant 25 : index
      %29 = vector.load %arg7[%c0_29, %c5_30, %c25_31] : memref<2x22x44xf32, #tpu.memory_space<vmem>>, vector<2x1x16xf32>
      tpu.vector_store %arg7[%c0_29, %c5_30, %c25_31], %28 {strides = array<i32>} : memref<2x22x44xf32, #tpu.memory_space<vmem>>, vector<2x1x16xf32>,
      %c0_32 = arith.constant 0 : index
      %c48 = arith.constant 48 : index
      %30 = vector.load %arg5[%c0_32, %c48] : memref<2x256xf32, #tpu.memory_space<vmem>>, vector<2x16xf32>
      %31 = vector.shape_cast %30 : vector<2x16xf32> to vector<2x1x16xf32>
      %c0_33 = arith.constant 0 : index
      %c6 = arith.constant 6 : index
      %c3_34 = arith.constant 3 : index
      %32 = vector.load %arg7[%c0_33, %c6, %c3_34] : memref<2x22x44xf32, #tpu.memory_space<vmem>>, vector<2x1x16xf32>
      tpu.vector_store %arg7[%c0_33, %c6, %c3_34], %31 {strides = array<i32>} : memref<2x22x44xf32, #tpu.memory_space<vmem>>, vector<2x1x16xf32>,
      %c0_35 = arith.constant 0 : index
      %c48_36 = arith.constant 48 : index
      %33 = vector.load %arg6[%c0_35, %c48_36] : memref<2x256xf32, #tpu.memory_space<vmem>>, vector<2x16xf32>
      %34 = vector.shape_cast %33 : vector<2x16xf32> to vector<2x1x16xf32>
      %c0_37 = arith.constant 0 : index
      %c6_38 = arith.constant 6 : index
      %c25_39 = arith.constant 25 : index
      %35 = vector.load %arg7[%c0_37, %c6_38, %c25_39] : memref<2x22x44xf32, #tpu.memory_space<vmem>>, vector<2x1x16xf32>
      tpu.vector_store %arg7[%c0_37, %c6_38, %c25_39], %34 {strides = array<i32>} : memref<2x22x44xf32, #tpu.memory_space<vmem>>, vector<2x1x16xf32>,
      %c0_40 = arith.constant 0 : index
      %c64 = arith.constant 64 : index
      %36 = vector.load %arg5[%c0_40, %c64] : memref<2x256xf32, #tpu.memory_space<vmem>>, vector<2x16xf32>
      %37 = vector.shape_cast %36 : vector<2x16xf32> to vector<2x1x16xf32>
      %c0_41 = arith.constant 0 : index
      %c7 = arith.constant 7 : index
      %c3_42 = arith.constant 3 : index
      %38 = vector.load %arg7[%c0_41, %c7, %c3_42] : memref<2x22x44xf32, #tpu.memory_space<vmem>>, vector<2x1x16xf32>
      tpu.vector_store %arg7[%c0_41, %c7, %c3_42], %37 {strides = array<i32>} : memref<2x22x44xf32, #tpu.memory_space<vmem>>, vector<2x1x16xf32>,
      %c0_43 = arith.constant 0 : index
      %c64_44 = arith.constant 64 : index
      %39 = vector.load %arg6[%c0_43, %c64_44] : memref<2x256xf32, #tpu.memory_space<vmem>>, vector<2x16xf32>
      %40 = vector.shape_cast %39 : vector<2x16xf32> to vector<2x1x16xf32>
      %c0_45 = arith.constant 0 : index
      %c7_46 = arith.constant 7 : index
      %c25_47 = arith.constant 25 : index
      %41 = vector.load %arg7[%c0_45, %c7_46, %c25_47] : memref<2x22x44xf32, #tpu.memory_space<vmem>>, vector<2x1x16xf32>
      tpu.vector_store %arg7[%c0_45, %c7_46, %c25_47], %40 {strides = array<i32>} : memref<2x22x44xf32, #tpu.memory_space<vmem>>, vector<2x1x16xf32>,
      %c0_48 = arith.constant 0 : index
      %c80 = arith.constant 80 : index
      %42 = vector.load %arg5[%c0_48, %c80] : memref<2x256xf32, #tpu.memory_space<vmem>>, vector<2x16xf32>
      %43 = vector.shape_cast %42 : vector<2x16xf32> to vector<2x1x16xf32>
      %c0_49 = arith.constant 0 : index
      %c8 = arith.constant 8 : index
      %c3_50 = arith.constant 3 : index
      %44 = vector.load %arg7[%c0_49, %c8, %c3_50] : memref<2x22x44xf32, #tpu.memory_space<vmem>>, vector<2x1x16xf32>
      tpu.vector_store %arg7[%c0_49, %c8, %c3_50], %43 {strides = array<i32>} : memref<2x22x44xf32, #tpu.memory_space<vmem>>, vector<2x1x16xf32>,
      %c0_51 = arith.constant 0 : index
      %c80_52 = arith.constant 80 : index
      %45 = vector.load %arg6[%c0_51, %c80_52] : memref<2x256xf32, #tpu.memory_space<vmem>>, vector<2x16xf32>
      %46 = vector.shape_cast %45 : vector<2x16xf32> to vector<2x1x16xf32>
      %c0_53 = arith.constant 0 : index
      %c8_54 = arith.constant 8 : index
      %c25_55 = arith.constant 25 : index
      %47 = vector.load %arg7[%c0_53, %c8_54, %c25_55] : memref<2x22x44xf32, #tpu.memory_space<vmem>>, vector<2x1x16xf32>
      tpu.vector_store %arg7[%c0_53, %c8_54, %c25_55], %46 {strides = array<i32>} : memref<2x22x44xf32, #tpu.memory_space<vmem>>, vector<2x1x16xf32>,
      %c0_56 = arith.constant 0 : index
      %c96 = arith.constant 96 : index
      %48 = vector.load %arg5[%c0_56, %c96] : memref<2x256xf32, #tpu.memory_space<vmem>>, vector<2x16xf32>
      %49 = vector.shape_cast %48 : vector<2x16xf32> to vector<2x1x16xf32>
      %c0_57 = arith.constant 0 : index
      %c9 = arith.constant 9 : index
      %c3_58 = arith.constant 3 : index
      %50 = vector.load %arg7[%c0_57, %c9, %c3_58] : memref<2x22x44xf32, #tpu.memory_space<vmem>>, vector<2x1x16xf32>
      tpu.vector_store %arg7[%c0_57, %c9, %c3_58], %49 {strides = array<i32>} : memref<2x22x44xf32, #tpu.memory_space<vmem>>, vector<2x1x16xf32>,
      %c0_59 = arith.constant 0 : index
      %c96_60 = arith.constant 96 : index
      %51 = vector.load %arg6[%c0_59, %c96_60] : memref<2x256xf32, #tpu.memory_space<vmem>>, vector<2x16xf32>
      %52 = vector.shape_cast %51 : vector<2x16xf32> to vector<2x1x16xf32>
      %c0_61 = arith.constant 0 : index
      %c9_62 = arith.constant 9 : index
      %c25_63 = arith.constant 25 : index
      %53 = vector.load %arg7[%c0_61, %c9_62, %c25_63] : memref<2x22x44xf32, #tpu.memory_space<vmem>>, vector<2x1x16xf32>
      tpu.vector_store %arg7[%c0_61, %c9_62, %c25_63], %52 {strides = array<i32>} : memref<2x22x44xf32, #tpu.memory_space<vmem>>, vector<2x1x16xf32>,
      %c0_64 = arith.constant 0 : index
      %c112 = arith.constant 112 : index
      %54 = vector.load %arg5[%c0_64, %c112] : memref<2x256xf32, #tpu.memory_space<vmem>>, vector<2x16xf32>
      %55 = vector.shape_cast %54 : vector<2x16xf32> to vector<2x1x16xf32>
      %c0_65 = arith.constant 0 : index
      %c10 = arith.constant 10 : index
      %c3_66 = arith.constant 3 : index
      %56 = vector.load %arg7[%c0_65, %c10, %c3_66] : memref<2x22x44xf32, #tpu.memory_space<vmem>>, vector<2x1x16xf32>
      tpu.vector_store %arg7[%c0_65, %c10, %c3_66], %55 {strides = array<i32>} : memref<2x22x44xf32, #tpu.memory_space<vmem>>, vector<2x1x16xf32>,
      %c0_67 = arith.constant 0 : index
      %c112_68 = arith.constant 112 : index
      %57 = vector.load %arg6[%c0_67, %c112_68] : memref<2x256xf32, #tpu.memory_space<vmem>>, vector<2x16xf32>
      %58 = vector.shape_cast %57 : vector<2x16xf32> to vector<2x1x16xf32>
      %c0_69 = arith.constant 0 : index
      %c10_70 = arith.constant 10 : index
      %c25_71 = arith.constant 25 : index
      %59 = vector.load %arg7[%c0_69, %c10_70, %c25_71] : memref<2x22x44xf32, #tpu.memory_space<vmem>>, vector<2x1x16xf32>
      tpu.vector_store %arg7[%c0_69, %c10_70, %c25_71], %58 {strides = array<i32>} : memref<2x22x44xf32, #tpu.memory_space<vmem>>, vector<2x1x16xf32>,
      %c0_72 = arith.constant 0 : index
      %c128 = arith.constant 128 : index
      %60 = vector.load %arg5[%c0_72, %c128] : memref<2x256xf32, #tpu.memory_space<vmem>>, vector<2x16xf32>
      %61 = vector.shape_cast %60 : vector<2x16xf32> to vector<2x1x16xf32>
      %c0_73 = arith.constant 0 : index
      %c11 = arith.constant 11 : index
      %c3_74 = arith.constant 3 : index
      %62 = vector.load %arg7[%c0_73, %c11, %c3_74] : memref<2x22x44xf32, #tpu.memory_space<vmem>>, vector<2x1x16xf32>
      tpu.vector_store %arg7[%c0_73, %c11, %c3_74], %61 {strides = array<i32>} : memref<2x22x44xf32, #tpu.memory_space<vmem>>, vector<2x1x16xf32>,
      %c0_75 = arith.constant 0 : index
      %c128_76 = arith.constant 128 : index
      %63 = vector.load %arg6[%c0_75, %c128_76] : memref<2x256xf32, #tpu.memory_space<vmem>>, vector<2x16xf32>
      %64 = vector.shape_cast %63 : vector<2x16xf32> to vector<2x1x16xf32>
      %c0_77 = arith.constant 0 : index
      %c11_78 = arith.constant 11 : index
      %c25_79 = arith.constant 25 : index
      %65 = vector.load %arg7[%c0_77, %c11_78, %c25_79] : memref<2x22x44xf32, #tpu.memory_space<vmem>>, vector<2x1x16xf32>
      tpu.vector_store %arg7[%c0_77, %c11_78, %c25_79], %64 {strides = array<i32>} : memref<2x22x44xf32, #tpu.memory_space<vmem>>, vector<2x1x16xf32>,
      %c0_80 = arith.constant 0 : index
      %c144 = arith.constant 144 : index
      %66 = vector.load %arg5[%c0_80, %c144] : memref<2x256xf32, #tpu.memory_space<vmem>>, vector<2x16xf32>
      %67 = vector.shape_cast %66 : vector<2x16xf32> to vector<2x1x16xf32>
      %c0_81 = arith.constant 0 : index
      %c12 = arith.constant 12 : index
      %c3_82 = arith.constant 3 : index
      %68 = vector.load %arg7[%c0_81, %c12, %c3_82] : memref<2x22x44xf32, #tpu.memory_space<vmem>>, vector<2x1x16xf32>
      tpu.vector_store %arg7[%c0_81, %c12, %c3_82], %67 {strides = array<i32>} : memref<2x22x44xf32, #tpu.memory_space<vmem>>, vector<2x1x16xf32>,
      %c0_83 = arith.constant 0 : index
      %c144_84 = arith.constant 144 : index
      %69 = vector.load %arg6[%c0_83, %c144_84] : memref<2x256xf32, #tpu.memory_space<vmem>>, vector<2x16xf32>
      %70 = vector.shape_cast %69 : vector<2x16xf32> to vector<2x1x16xf32>
      %c0_85 = arith.constant 0 : index
      %c12_86 = arith.constant 12 : index
      %c25_87 = arith.constant 25 : index
      %71 = vector.load %arg7[%c0_85, %c12_86, %c25_87] : memref<2x22x44xf32, #tpu.memory_space<vmem>>, vector<2x1x16xf32>
      tpu.vector_store %arg7[%c0_85, %c12_86, %c25_87], %70 {strides = array<i32>} : memref<2x22x44xf32, #tpu.memory_space<vmem>>, vector<2x1x16xf32>,
      %c0_88 = arith.constant 0 : index
      %c160 = arith.constant 160 : index
      %72 = vector.load %arg5[%c0_88, %c160] : memref<2x256xf32, #tpu.memory_space<vmem>>, vector<2x16xf32>
      %73 = vector.shape_cast %72 : vector<2x16xf32> to vector<2x1x16xf32>
      %c0_89 = arith.constant 0 : index
      %c13 = arith.constant 13 : index
      %c3_90 = arith.constant 3 : index
      %74 = vector.load %arg7[%c0_89, %c13, %c3_90] : memref<2x22x44xf32, #tpu.memory_space<vmem>>, vector<2x1x16xf32>
      tpu.vector_store %arg7[%c0_89, %c13, %c3_90], %73 {strides = array<i32>} : memref<2x22x44xf32, #tpu.memory_space<vmem>>, vector<2x1x16xf32>,
      %c0_91 = arith.constant 0 : index
      %c160_92 = arith.constant 160 : index
      %75 = vector.load %arg6[%c0_91, %c160_92] : memref<2x256xf32, #tpu.memory_space<vmem>>, vector<2x16xf32>
      %76 = vector.shape_cast %75 : vector<2x16xf32> to vector<2x1x16xf32>
      %c0_93 = arith.constant 0 : index
      %c13_94 = arith.constant 13 : index
      %c25_95 = arith.constant 25 : index
      %77 = vector.load %arg7[%c0_93, %c13_94, %c25_95] : memref<2x22x44xf32, #tpu.memory_space<vmem>>, vector<2x1x16xf32>
      tpu.vector_store %arg7[%c0_93, %c13_94, %c25_95], %76 {strides = array<i32>} : memref<2x22x44xf32, #tpu.memory_space<vmem>>, vector<2x1x16xf32>,
      %c0_96 = arith.constant 0 : index
      %c176 = arith.constant 176 : index
      %78 = vector.load %arg5[%c0_96, %c176] : memref<2x256xf32, #tpu.memory_space<vmem>>, vector<2x16xf32>
      %79 = vector.shape_cast %78 : vector<2x16xf32> to vector<2x1x16xf32>
      %c0_97 = arith.constant 0 : index
      %c14 = arith.constant 14 : index
      %c3_98 = arith.constant 3 : index
      %80 = vector.load %arg7[%c0_97, %c14, %c3_98] : memref<2x22x44xf32, #tpu.memory_space<vmem>>, vector<2x1x16xf32>
      tpu.vector_store %arg7[%c0_97, %c14, %c3_98], %79 {strides = array<i32>} : memref<2x22x44xf32, #tpu.memory_space<vmem>>, vector<2x1x16xf32>,
      %c0_99 = arith.constant 0 : index
      %c176_100 = arith.constant 176 : index
      %81 = vector.load %arg6[%c0_99, %c176_100] : memref<2x256xf32, #tpu.memory_space<vmem>>, vector<2x16xf32>
      %82 = vector.shape_cast %81 : vector<2x16xf32> to vector<2x1x16xf32>
      %c0_101 = arith.constant 0 : index
      %c14_102 = arith.constant 14 : index
      %c25_103 = arith.constant 25 : index
      %83 = vector.load %arg7[%c0_101, %c14_102, %c25_103] : memref<2x22x44xf32, #tpu.memory_space<vmem>>, vector<2x1x16xf32>
      tpu.vector_store %arg7[%c0_101, %c14_102, %c25_103], %82 {strides = array<i32>} : memref<2x22x44xf32, #tpu.memory_space<vmem>>, vector<2x1x16xf32>,
      %c0_104 = arith.constant 0 : index
      %c192 = arith.constant 192 : index
      %84 = vector.load %arg5[%c0_104, %c192] : memref<2x256xf32, #tpu.memory_space<vmem>>, vector<2x16xf32>
      %85 = vector.shape_cast %84 : vector<2x16xf32> to vector<2x1x16xf32>
      %c0_105 = arith.constant 0 : index
      %c15 = arith.constant 15 : index
      %c3_106 = arith.constant 3 : index
      %86 = vector.load %arg7[%c0_105, %c15, %c3_106] : memref<2x22x44xf32, #tpu.memory_space<vmem>>, vector<2x1x16xf32>
      tpu.vector_store %arg7[%c0_105, %c15, %c3_106], %85 {strides = array<i32>} : memref<2x22x44xf32, #tpu.memory_space<vmem>>, vector<2x1x16xf32>,
      %c0_107 = arith.constant 0 : index
      %c192_108 = arith.constant 192 : index
      %87 = vector.load %arg6[%c0_107, %c192_108] : memref<2x256xf32, #tpu.memory_space<vmem>>, vector<2x16xf32>
      %88 = vector.shape_cast %87 : vector<2x16xf32> to vector<2x1x16xf32>
      %c0_109 = arith.constant 0 : index
      %c15_110 = arith.constant 15 : index
      %c25_111 = arith.constant 25 : index
      %89 = vector.load %arg7[%c0_109, %c15_110, %c25_111] : memref<2x22x44xf32, #tpu.memory_space<vmem>>, vector<2x1x16xf32>
      tpu.vector_store %arg7[%c0_109, %c15_110, %c25_111], %88 {strides = array<i32>} : memref<2x22x44xf32, #tpu.memory_space<vmem>>, vector<2x1x16xf32>,
      %c0_112 = arith.constant 0 : index
      %c208 = arith.constant 208 : index
      %90 = vector.load %arg5[%c0_112, %c208] : memref<2x256xf32, #tpu.memory_space<vmem>>, vector<2x16xf32>
      %91 = vector.shape_cast %90 : vector<2x16xf32> to vector<2x1x16xf32>
      %c0_113 = arith.constant 0 : index
      %c16_114 = arith.constant 16 : index
      %c3_115 = arith.constant 3 : index
      %92 = vector.load %arg7[%c0_113, %c16_114, %c3_115] : memref<2x22x44xf32, #tpu.memory_space<vmem>>, vector<2x1x16xf32>
      tpu.vector_store %arg7[%c0_113, %c16_114, %c3_115], %91 {strides = array<i32>} : memref<2x22x44xf32, #tpu.memory_space<vmem>>, vector<2x1x16xf32>,
      %c0_116 = arith.constant 0 : index
      %c208_117 = arith.constant 208 : index
      %93 = vector.load %arg6[%c0_116, %c208_117] : memref<2x256xf32, #tpu.memory_space<vmem>>, vector<2x16xf32>
      %94 = vector.shape_cast %93 : vector<2x16xf32> to vector<2x1x16xf32>
      %c0_118 = arith.constant 0 : index
      %c16_119 = arith.constant 16 : index
      %c25_120 = arith.constant 25 : index
      %95 = vector.load %arg7[%c0_118, %c16_119, %c25_120] : memref<2x22x44xf32, #tpu.memory_space<vmem>>, vector<2x1x16xf32>
      tpu.vector_store %arg7[%c0_118, %c16_119, %c25_120], %94 {strides = array<i32>} : memref<2x22x44xf32, #tpu.memory_space<vmem>>, vector<2x1x16xf32>,
      %c0_121 = arith.constant 0 : index
      %c224 = arith.constant 224 : index
      %96 = vector.load %arg5[%c0_121, %c224] : memref<2x256xf32, #tpu.memory_space<vmem>>, vector<2x16xf32>
      %97 = vector.shape_cast %96 : vector<2x16xf32> to vector<2x1x16xf32>
      %c0_122 = arith.constant 0 : index
      %c17 = arith.constant 17 : index
      %c3_123 = arith.constant 3 : index
      %98 = vector.load %arg7[%c0_122, %c17, %c3_123] : memref<2x22x44xf32, #tpu.memory_space<vmem>>, vector<2x1x16xf32>
      tpu.vector_store %arg7[%c0_122, %c17, %c3_123], %97 {strides = array<i32>} : memref<2x22x44xf32, #tpu.memory_space<vmem>>, vector<2x1x16xf32>,
      %c0_124 = arith.constant 0 : index
      %c224_125 = arith.constant 224 : index
      %99 = vector.load %arg6[%c0_124, %c224_125] : memref<2x256xf32, #tpu.memory_space<vmem>>, vector<2x16xf32>
      %100 = vector.shape_cast %99 : vector<2x16xf32> to vector<2x1x16xf32>
      %c0_126 = arith.constant 0 : index
      %c17_127 = arith.constant 17 : index
      %c25_128 = arith.constant 25 : index
      %101 = vector.load %arg7[%c0_126, %c17_127, %c25_128] : memref<2x22x44xf32, #tpu.memory_space<vmem>>, vector<2x1x16xf32>
      tpu.vector_store %arg7[%c0_126, %c17_127, %c25_128], %100 {strides = array<i32>} : memref<2x22x44xf32, #tpu.memory_space<vmem>>, vector<2x1x16xf32>,
      %c0_129 = arith.constant 0 : index
      %c240 = arith.constant 240 : index
      %102 = vector.load %arg5[%c0_129, %c240] : memref<2x256xf32, #tpu.memory_space<vmem>>, vector<2x16xf32>
      %103 = vector.shape_cast %102 : vector<2x16xf32> to vector<2x1x16xf32>
      %c0_130 = arith.constant 0 : index
      %c18 = arith.constant 18 : index
      %c3_131 = arith.constant 3 : index
      %104 = vector.load %arg7[%c0_130, %c18, %c3_131] : memref<2x22x44xf32, #tpu.memory_space<vmem>>, vector<2x1x16xf32>
      tpu.vector_store %arg7[%c0_130, %c18, %c3_131], %103 {strides = array<i32>} : memref<2x22x44xf32, #tpu.memory_space<vmem>>, vector<2x1x16xf32>,
      %c0_132 = arith.constant 0 : index
      %c240_133 = arith.constant 240 : index
      %105 = vector.load %arg6[%c0_132, %c240_133] : memref<2x256xf32, #tpu.memory_space<vmem>>, vector<2x16xf32>
      %106 = vector.shape_cast %105 : vector<2x16xf32> to vector<2x1x16xf32>
      %c0_134 = arith.constant 0 : index
      %c18_135 = arith.constant 18 : index
      %c25_136 = arith.constant 25 : index
      %107 = vector.load %arg7[%c0_134, %c18_135, %c25_136] : memref<2x22x44xf32, #tpu.memory_space<vmem>>, vector<2x1x16xf32>
      tpu.vector_store %arg7[%c0_134, %c18_135, %c25_136], %106 {strides = array<i32>} : memref<2x22x44xf32, #tpu.memory_space<vmem>>, vector<2x1x16xf32>,
      %cst_137 = arith.constant 0.000000e+00 : f32
      %108 = vector.broadcast %cst_137 : f32 to vector<2x16x16xf32>
      %c0_138 = arith.constant 0 : index
      %c0_139 = arith.constant 0 : index
      %c0_140 = arith.constant 0 : index
      %109 = vector.load %arg7[%c0_138, %c0_139, %c0_140] : memref<2x22x44xf32, #tpu.memory_space<vmem>>, vector<2x16x44xf32>
      %c0_141 = arith.constant 0 : index
      %110 = memref.load %arg3[%c0_141] : memref<98xf32, #tpu.memory_space<smem>>
      %c49 = arith.constant 49 : index
      %111 = memref.load %arg3[%c49] : memref<98xf32, #tpu.memory_space<smem>>
      %112 = vector.extract_strided_slice %109 {offsets = [0, 0, 0], sizes = [2, 16, 16], strides = [1, 1, 1]} : vector<2x16x44xf32> to vector<2x16x16xf32>
      %113 = vector.broadcast %110 : f32 to vector<2x16x16xf32>
      %114 = arith.mulf %113, %112 : vector<2x16x16xf32>
      %115 = vector.extract_strided_slice %109 {offsets = [0, 0, 22], sizes = [2, 16, 16], strides = [1, 1, 1]} : vector<2x16x44xf32> to vector<2x16x16xf32>
      %116 = vector.broadcast %111 : f32 to vector<2x16x16xf32>
      %117 = arith.mulf %116, %115 : vector<2x16x16xf32>
      %118 = arith.addf %114, %117 : vector<2x16x16xf32>
      %119 = arith.addf %108, %118 : vector<2x16x16xf32>
      %c1 = arith.constant 1 : index
      %120 = memref.load %arg3[%c1] : memref<98xf32, #tpu.memory_space<smem>>
      %c50 = arith.constant 50 : index
      %121 = memref.load %arg3[%c50] : memref<98xf32, #tpu.memory_space<smem>>
      %122 = vector.extract_strided_slice %109 {offsets = [0, 0, 1], sizes = [2, 16, 16], strides = [1, 1, 1]} : vector<2x16x44xf32> to vector<2x16x16xf32>
      %123 = vector.broadcast %120 : f32 to vector<2x16x16xf32>
      %124 = arith.mulf %123, %122 : vector<2x16x16xf32>
      %125 = vector.extract_strided_slice %109 {offsets = [0, 0, 23], sizes = [2, 16, 16], strides = [1, 1, 1]} : vector<2x16x44xf32> to vector<2x16x16xf32>
      %126 = vector.broadcast %121 : f32 to vector<2x16x16xf32>
      %127 = arith.mulf %126, %125 : vector<2x16x16xf32>
      %128 = arith.addf %124, %127 : vector<2x16x16xf32>
      %129 = arith.addf %119, %128 : vector<2x16x16xf32>
      %c2 = arith.constant 2 : index
      %130 = memref.load %arg3[%c2] : memref<98xf32, #tpu.memory_space<smem>>
      %c51 = arith.constant 51 : index
      %131 = memref.load %arg3[%c51] : memref<98xf32, #tpu.memory_space<smem>>
      %132 = vector.extract_strided_slice %109 {offsets = [0, 0, 2], sizes = [2, 16, 16], strides = [1, 1, 1]} : vector<2x16x44xf32> to vector<2x16x16xf32>
      %133 = vector.broadcast %130 : f32 to vector<2x16x16xf32>
      %134 = arith.mulf %133, %132 : vector<2x16x16xf32>
      %135 = vector.extract_strided_slice %109 {offsets = [0, 0, 24], sizes = [2, 16, 16], strides = [1, 1, 1]} : vector<2x16x44xf32> to vector<2x16x16xf32>
      %136 = vector.broadcast %131 : f32 to vector<2x16x16xf32>
      %137 = arith.mulf %136, %135 : vector<2x16x16xf32>
      %138 = arith.addf %134, %137 : vector<2x16x16xf32>
      %139 = arith.addf %129, %138 : vector<2x16x16xf32>
      %c3_142 = arith.constant 3 : index
      %140 = memref.load %arg3[%c3_142] : memref<98xf32, #tpu.memory_space<smem>>
      %c52 = arith.constant 52 : index
      %141 = memref.load %arg3[%c52] : memref<98xf32, #tpu.memory_space<smem>>
      %142 = vector.extract_strided_slice %109 {offsets = [0, 0, 3], sizes = [2, 16, 16], strides = [1, 1, 1]} : vector<2x16x44xf32> to vector<2x16x16xf32>
      %143 = vector.broadcast %140 : f32 to vector<2x16x16xf32>
      %144 = arith.mulf %143, %142 : vector<2x16x16xf32>
      %145 = vector.extract_strided_slice %109 {offsets = [0, 0, 25], sizes = [2, 16, 16], strides = [1, 1, 1]} : vector<2x16x44xf32> to vector<2x16x16xf32>
      %146 = vector.broadcast %141 : f32 to vector<2x16x16xf32>
      %147 = arith.mulf %146, %145 : vector<2x16x16xf32>
      %148 = arith.addf %144, %147 : vector<2x16x16xf32>
      %149 = arith.addf %139, %148 : vector<2x16x16xf32>
      %c4_143 = arith.constant 4 : index
      %150 = memref.load %arg3[%c4_143] : memref<98xf32, #tpu.memory_space<smem>>
      %c53 = arith.constant 53 : index
      %151 = memref.load %arg3[%c53] : memref<98xf32, #tpu.memory_space<smem>>
      %152 = vector.extract_strided_slice %109 {offsets = [0, 0, 4], sizes = [2, 16, 16], strides = [1, 1, 1]} : vector<2x16x44xf32> to vector<2x16x16xf32>
      %153 = vector.broadcast %150 : f32 to vector<2x16x16xf32>
      %154 = arith.mulf %153, %152 : vector<2x16x16xf32>
      %155 = vector.extract_strided_slice %109 {offsets = [0, 0, 26], sizes = [2, 16, 16], strides = [1, 1, 1]} : vector<2x16x44xf32> to vector<2x16x16xf32>
      %156 = vector.broadcast %151 : f32 to vector<2x16x16xf32>
      %157 = arith.mulf %156, %155 : vector<2x16x16xf32>
      %158 = arith.addf %154, %157 : vector<2x16x16xf32>
      %159 = arith.addf %149, %158 : vector<2x16x16xf32>
      %c5_144 = arith.constant 5 : index
      %160 = memref.load %arg3[%c5_144] : memref<98xf32, #tpu.memory_space<smem>>
      %c54 = arith.constant 54 : index
      %161 = memref.load %arg3[%c54] : memref<98xf32, #tpu.memory_space<smem>>
      %162 = vector.extract_strided_slice %109 {offsets = [0, 0, 5], sizes = [2, 16, 16], strides = [1, 1, 1]} : vector<2x16x44xf32> to vector<2x16x16xf32>
      %163 = vector.broadcast %160 : f32 to vector<2x16x16xf32>
      %164 = arith.mulf %163, %162 : vector<2x16x16xf32>
      %165 = vector.extract_strided_slice %109 {offsets = [0, 0, 27], sizes = [2, 16, 16], strides = [1, 1, 1]} : vector<2x16x44xf32> to vector<2x16x16xf32>
      %166 = vector.broadcast %161 : f32 to vector<2x16x16xf32>
      %167 = arith.mulf %166, %165 : vector<2x16x16xf32>
      %168 = arith.addf %164, %167 : vector<2x16x16xf32>
      %169 = arith.addf %159, %168 : vector<2x16x16xf32>
      %c6_145 = arith.constant 6 : index
      %170 = memref.load %arg3[%c6_145] : memref<98xf32, #tpu.memory_space<smem>>
      %c55 = arith.constant 55 : index
      %171 = memref.load %arg3[%c55] : memref<98xf32, #tpu.memory_space<smem>>
      %172 = vector.extract_strided_slice %109 {offsets = [0, 0, 6], sizes = [2, 16, 16], strides = [1, 1, 1]} : vector<2x16x44xf32> to vector<2x16x16xf32>
      %173 = vector.broadcast %170 : f32 to vector<2x16x16xf32>
      %174 = arith.mulf %173, %172 : vector<2x16x16xf32>
      %175 = vector.extract_strided_slice %109 {offsets = [0, 0, 28], sizes = [2, 16, 16], strides = [1, 1, 1]} : vector<2x16x44xf32> to vector<2x16x16xf32>
      %176 = vector.broadcast %171 : f32 to vector<2x16x16xf32>
      %177 = arith.mulf %176, %175 : vector<2x16x16xf32>
      %178 = arith.addf %174, %177 : vector<2x16x16xf32>
      %179 = arith.addf %169, %178 : vector<2x16x16xf32>
      %c0_146 = arith.constant 0 : index
      %c1_147 = arith.constant 1 : index
      %c0_148 = arith.constant 0 : index
      %180 = vector.load %arg7[%c0_146, %c1_147, %c0_148] : memref<2x22x44xf32, #tpu.memory_space<vmem>>, vector<2x16x44xf32>
      %c7_149 = arith.constant 7 : index
      %181 = memref.load %arg3[%c7_149] : memref<98xf32, #tpu.memory_space<smem>>
      %c56 = arith.constant 56 : index
      %182 = memref.load %arg3[%c56] : memref<98xf32, #tpu.memory_space<smem>>
      %183 = vector.extract_strided_slice %180 {offsets = [0, 0, 0], sizes = [2, 16, 16], strides = [1, 1, 1]} : vector<2x16x44xf32> to vector<2x16x16xf32>
      %184 = vector.broadcast %181 : f32 to vector<2x16x16xf32>
      %185 = arith.mulf %184, %183 : vector<2x16x16xf32>
      %186 = vector.extract_strided_slice %180 {offsets = [0, 0, 22], sizes = [2, 16, 16], strides = [1, 1, 1]} : vector<2x16x44xf32> to vector<2x16x16xf32>
      %187 = vector.broadcast %182 : f32 to vector<2x16x16xf32>
      %188 = arith.mulf %187, %186 : vector<2x16x16xf32>
      %189 = arith.addf %185, %188 : vector<2x16x16xf32>
      %190 = arith.addf %179, %189 : vector<2x16x16xf32>
      %c8_150 = arith.constant 8 : index
      %191 = memref.load %arg3[%c8_150] : memref<98xf32, #tpu.memory_space<smem>>
      %c57 = arith.constant 57 : index
      %192 = memref.load %arg3[%c57] : memref<98xf32, #tpu.memory_space<smem>>
      %193 = vector.extract_strided_slice %180 {offsets = [0, 0, 1], sizes = [2, 16, 16], strides = [1, 1, 1]} : vector<2x16x44xf32> to vector<2x16x16xf32>
      %194 = vector.broadcast %191 : f32 to vector<2x16x16xf32>
      %195 = arith.mulf %194, %193 : vector<2x16x16xf32>
      %196 = vector.extract_strided_slice %180 {offsets = [0, 0, 23], sizes = [2, 16, 16], strides = [1, 1, 1]} : vector<2x16x44xf32> to vector<2x16x16xf32>
      %197 = vector.broadcast %192 : f32 to vector<2x16x16xf32>
      %198 = arith.mulf %197, %196 : vector<2x16x16xf32>
      %199 = arith.addf %195, %198 : vector<2x16x16xf32>
      %200 = arith.addf %190, %199 : vector<2x16x16xf32>
      %c9_151 = arith.constant 9 : index
      %201 = memref.load %arg3[%c9_151] : memref<98xf32, #tpu.memory_space<smem>>
      %c58 = arith.constant 58 : index
      %202 = memref.load %arg3[%c58] : memref<98xf32, #tpu.memory_space<smem>>
      %203 = vector.extract_strided_slice %180 {offsets = [0, 0, 2], sizes = [2, 16, 16], strides = [1, 1, 1]} : vector<2x16x44xf32> to vector<2x16x16xf32>
      %204 = vector.broadcast %201 : f32 to vector<2x16x16xf32>
      %205 = arith.mulf %204, %203 : vector<2x16x16xf32>
      %206 = vector.extract_strided_slice %180 {offsets = [0, 0, 24], sizes = [2, 16, 16], strides = [1, 1, 1]} : vector<2x16x44xf32> to vector<2x16x16xf32>
      %207 = vector.broadcast %202 : f32 to vector<2x16x16xf32>
      %208 = arith.mulf %207, %206 : vector<2x16x16xf32>
      %209 = arith.addf %205, %208 : vector<2x16x16xf32>
      %210 = arith.addf %200, %209 : vector<2x16x16xf32>
      %c10_152 = arith.constant 10 : index
      %211 = memref.load %arg3[%c10_152] : memref<98xf32, #tpu.memory_space<smem>>
      %c59 = arith.constant 59 : index
      %212 = memref.load %arg3[%c59] : memref<98xf32, #tpu.memory_space<smem>>
      %213 = vector.extract_strided_slice %180 {offsets = [0, 0, 3], sizes = [2, 16, 16], strides = [1, 1, 1]} : vector<2x16x44xf32> to vector<2x16x16xf32>
      %214 = vector.broadcast %211 : f32 to vector<2x16x16xf32>
      %215 = arith.mulf %214, %213 : vector<2x16x16xf32>
      %216 = vector.extract_strided_slice %180 {offsets = [0, 0, 25], sizes = [2, 16, 16], strides = [1, 1, 1]} : vector<2x16x44xf32> to vector<2x16x16xf32>
      %217 = vector.broadcast %212 : f32 to vector<2x16x16xf32>
      %218 = arith.mulf %217, %216 : vector<2x16x16xf32>
      %219 = arith.addf %215, %218 : vector<2x16x16xf32>
      %220 = arith.addf %210, %219 : vector<2x16x16xf32>
      %c11_153 = arith.constant 11 : index
      %221 = memref.load %arg3[%c11_153] : memref<98xf32, #tpu.memory_space<smem>>
      %c60 = arith.constant 60 : index
      %222 = memref.load %arg3[%c60] : memref<98xf32, #tpu.memory_space<smem>>
      %223 = vector.extract_strided_slice %180 {offsets = [0, 0, 4], sizes = [2, 16, 16], strides = [1, 1, 1]} : vector<2x16x44xf32> to vector<2x16x16xf32>
      %224 = vector.broadcast %221 : f32 to vector<2x16x16xf32>
      %225 = arith.mulf %224, %223 : vector<2x16x16xf32>
      %226 = vector.extract_strided_slice %180 {offsets = [0, 0, 26], sizes = [2, 16, 16], strides = [1, 1, 1]} : vector<2x16x44xf32> to vector<2x16x16xf32>
      %227 = vector.broadcast %222 : f32 to vector<2x16x16xf32>
      %228 = arith.mulf %227, %226 : vector<2x16x16xf32>
      %229 = arith.addf %225, %228 : vector<2x16x16xf32>
      %230 = arith.addf %220, %229 : vector<2x16x16xf32>
      %c12_154 = arith.constant 12 : index
      %231 = memref.load %arg3[%c12_154] : memref<98xf32, #tpu.memory_space<smem>>
      %c61 = arith.constant 61 : index
      %232 = memref.load %arg3[%c61] : memref<98xf32, #tpu.memory_space<smem>>
      %233 = vector.extract_strided_slice %180 {offsets = [0, 0, 5], sizes = [2, 16, 16], strides = [1, 1, 1]} : vector<2x16x44xf32> to vector<2x16x16xf32>
      %234 = vector.broadcast %231 : f32 to vector<2x16x16xf32>
      %235 = arith.mulf %234, %233 : vector<2x16x16xf32>
      %236 = vector.extract_strided_slice %180 {offsets = [0, 0, 27], sizes = [2, 16, 16], strides = [1, 1, 1]} : vector<2x16x44xf32> to vector<2x16x16xf32>
      %237 = vector.broadcast %232 : f32 to vector<2x16x16xf32>
      %238 = arith.mulf %237, %236 : vector<2x16x16xf32>
      %239 = arith.addf %235, %238 : vector<2x16x16xf32>
      %240 = arith.addf %230, %239 : vector<2x16x16xf32>
      %c13_155 = arith.constant 13 : index
      %241 = memref.load %arg3[%c13_155] : memref<98xf32, #tpu.memory_space<smem>>
      %c62 = arith.constant 62 : index
      %242 = memref.load %arg3[%c62] : memref<98xf32, #tpu.memory_space<smem>>
      %243 = vector.extract_strided_slice %180 {offsets = [0, 0, 6], sizes = [2, 16, 16], strides = [1, 1, 1]} : vector<2x16x44xf32> to vector<2x16x16xf32>
      %244 = vector.broadcast %241 : f32 to vector<2x16x16xf32>
      %245 = arith.mulf %244, %243 : vector<2x16x16xf32>
      %246 = vector.extract_strided_slice %180 {offsets = [0, 0, 28], sizes = [2, 16, 16], strides = [1, 1, 1]} : vector<2x16x44xf32> to vector<2x16x16xf32>
      %247 = vector.broadcast %242 : f32 to vector<2x16x16xf32>
      %248 = arith.mulf %247, %246 : vector<2x16x16xf32>
      %249 = arith.addf %245, %248 : vector<2x16x16xf32>
      %250 = arith.addf %240, %249 : vector<2x16x16xf32>
      %c0_156 = arith.constant 0 : index
      %c2_157 = arith.constant 2 : index
      %c0_158 = arith.constant 0 : index
      %251 = vector.load %arg7[%c0_156, %c2_157, %c0_158] : memref<2x22x44xf32, #tpu.memory_space<vmem>>, vector<2x16x44xf32>
      %c14_159 = arith.constant 14 : index
      %252 = memref.load %arg3[%c14_159] : memref<98xf32, #tpu.memory_space<smem>>
      %c63 = arith.constant 63 : index
      %253 = memref.load %arg3[%c63] : memref<98xf32, #tpu.memory_space<smem>>
      %254 = vector.extract_strided_slice %251 {offsets = [0, 0, 0], sizes = [2, 16, 16], strides = [1, 1, 1]} : vector<2x16x44xf32> to vector<2x16x16xf32>
      %255 = vector.broadcast %252 : f32 to vector<2x16x16xf32>
      %256 = arith.mulf %255, %254 : vector<2x16x16xf32>
      %257 = vector.extract_strided_slice %251 {offsets = [0, 0, 22], sizes = [2, 16, 16], strides = [1, 1, 1]} : vector<2x16x44xf32> to vector<2x16x16xf32>
      %258 = vector.broadcast %253 : f32 to vector<2x16x16xf32>
      %259 = arith.mulf %258, %257 : vector<2x16x16xf32>
      %260 = arith.addf %256, %259 : vector<2x16x16xf32>
      %261 = arith.addf %250, %260 : vector<2x16x16xf32>
      %c15_160 = arith.constant 15 : index
      %262 = memref.load %arg3[%c15_160] : memref<98xf32, #tpu.memory_space<smem>>
      %c64_161 = arith.constant 64 : index
      %263 = memref.load %arg3[%c64_161] : memref<98xf32, #tpu.memory_space<smem>>
      %264 = vector.extract_strided_slice %251 {offsets = [0, 0, 1], sizes = [2, 16, 16], strides = [1, 1, 1]} : vector<2x16x44xf32> to vector<2x16x16xf32>
      %265 = vector.broadcast %262 : f32 to vector<2x16x16xf32>
      %266 = arith.mulf %265, %264 : vector<2x16x16xf32>
      %267 = vector.extract_strided_slice %251 {offsets = [0, 0, 23], sizes = [2, 16, 16], strides = [1, 1, 1]} : vector<2x16x44xf32> to vector<2x16x16xf32>
      %268 = vector.broadcast %263 : f32 to vector<2x16x16xf32>
      %269 = arith.mulf %268, %267 : vector<2x16x16xf32>
      %270 = arith.addf %266, %269 : vector<2x16x16xf32>
      %271 = arith.addf %261, %270 : vector<2x16x16xf32>
      %c16_162 = arith.constant 16 : index
      %272 = memref.load %arg3[%c16_162] : memref<98xf32, #tpu.memory_space<smem>>
      %c65 = arith.constant 65 : index
      %273 = memref.load %arg3[%c65] : memref<98xf32, #tpu.memory_space<smem>>
      %274 = vector.extract_strided_slice %251 {offsets = [0, 0, 2], sizes = [2, 16, 16], strides = [1, 1, 1]} : vector<2x16x44xf32> to vector<2x16x16xf32>
      %275 = vector.broadcast %272 : f32 to vector<2x16x16xf32>
      %276 = arith.mulf %275, %274 : vector<2x16x16xf32>
      %277 = vector.extract_strided_slice %251 {offsets = [0, 0, 24], sizes = [2, 16, 16], strides = [1, 1, 1]} : vector<2x16x44xf32> to vector<2x16x16xf32>
      %278 = vector.broadcast %273 : f32 to vector<2x16x16xf32>
      %279 = arith.mulf %278, %277 : vector<2x16x16xf32>
      %280 = arith.addf %276, %279 : vector<2x16x16xf32>
      %281 = arith.addf %271, %280 : vector<2x16x16xf32>
      %c17_163 = arith.constant 17 : index
      %282 = memref.load %arg3[%c17_163] : memref<98xf32, #tpu.memory_space<smem>>
      %c66 = arith.constant 66 : index
      %283 = memref.load %arg3[%c66] : memref<98xf32, #tpu.memory_space<smem>>
      %284 = vector.extract_strided_slice %251 {offsets = [0, 0, 3], sizes = [2, 16, 16], strides = [1, 1, 1]} : vector<2x16x44xf32> to vector<2x16x16xf32>
      %285 = vector.broadcast %282 : f32 to vector<2x16x16xf32>
      %286 = arith.mulf %285, %284 : vector<2x16x16xf32>
      %287 = vector.extract_strided_slice %251 {offsets = [0, 0, 25], sizes = [2, 16, 16], strides = [1, 1, 1]} : vector<2x16x44xf32> to vector<2x16x16xf32>
      %288 = vector.broadcast %283 : f32 to vector<2x16x16xf32>
      %289 = arith.mulf %288, %287 : vector<2x16x16xf32>
      %290 = arith.addf %286, %289 : vector<2x16x16xf32>
      %291 = arith.addf %281, %290 : vector<2x16x16xf32>
      %c18_164 = arith.constant 18 : index
      %292 = memref.load %arg3[%c18_164] : memref<98xf32, #tpu.memory_space<smem>>
      %c67 = arith.constant 67 : index
      %293 = memref.load %arg3[%c67] : memref<98xf32, #tpu.memory_space<smem>>
      %294 = vector.extract_strided_slice %251 {offsets = [0, 0, 4], sizes = [2, 16, 16], strides = [1, 1, 1]} : vector<2x16x44xf32> to vector<2x16x16xf32>
      %295 = vector.broadcast %292 : f32 to vector<2x16x16xf32>
      %296 = arith.mulf %295, %294 : vector<2x16x16xf32>
      %297 = vector.extract_strided_slice %251 {offsets = [0, 0, 26], sizes = [2, 16, 16], strides = [1, 1, 1]} : vector<2x16x44xf32> to vector<2x16x16xf32>
      %298 = vector.broadcast %293 : f32 to vector<2x16x16xf32>
      %299 = arith.mulf %298, %297 : vector<2x16x16xf32>
      %300 = arith.addf %296, %299 : vector<2x16x16xf32>
      %301 = arith.addf %291, %300 : vector<2x16x16xf32>
      %c19 = arith.constant 19 : index
      %302 = memref.load %arg3[%c19] : memref<98xf32, #tpu.memory_space<smem>>
      %c68 = arith.constant 68 : index
      %303 = memref.load %arg3[%c68] : memref<98xf32, #tpu.memory_space<smem>>
      %304 = vector.extract_strided_slice %251 {offsets = [0, 0, 5], sizes = [2, 16, 16], strides = [1, 1, 1]} : vector<2x16x44xf32> to vector<2x16x16xf32>
      %305 = vector.broadcast %302 : f32 to vector<2x16x16xf32>
      %306 = arith.mulf %305, %304 : vector<2x16x16xf32>
      %307 = vector.extract_strided_slice %251 {offsets = [0, 0, 27], sizes = [2, 16, 16], strides = [1, 1, 1]} : vector<2x16x44xf32> to vector<2x16x16xf32>
      %308 = vector.broadcast %303 : f32 to vector<2x16x16xf32>
      %309 = arith.mulf %308, %307 : vector<2x16x16xf32>
      %310 = arith.addf %306, %309 : vector<2x16x16xf32>
      %311 = arith.addf %301, %310 : vector<2x16x16xf32>
      %c20 = arith.constant 20 : index
      %312 = memref.load %arg3[%c20] : memref<98xf32, #tpu.memory_space<smem>>
      %c69 = arith.constant 69 : index
      %313 = memref.load %arg3[%c69] : memref<98xf32, #tpu.memory_space<smem>>
      %314 = vector.extract_strided_slice %251 {offsets = [0, 0, 6], sizes = [2, 16, 16], strides = [1, 1, 1]} : vector<2x16x44xf32> to vector<2x16x16xf32>
      %315 = vector.broadcast %312 : f32 to vector<2x16x16xf32>
      %316 = arith.mulf %315, %314 : vector<2x16x16xf32>
      %317 = vector.extract_strided_slice %251 {offsets = [0, 0, 28], sizes = [2, 16, 16], strides = [1, 1, 1]} : vector<2x16x44xf32> to vector<2x16x16xf32>
      %318 = vector.broadcast %313 : f32 to vector<2x16x16xf32>
      %319 = arith.mulf %318, %317 : vector<2x16x16xf32>
      %320 = arith.addf %316, %319 : vector<2x16x16xf32>
      %321 = arith.addf %311, %320 : vector<2x16x16xf32>
      %c0_165 = arith.constant 0 : index
      %c3_166 = arith.constant 3 : index
      %c0_167 = arith.constant 0 : index
      %322 = vector.load %arg7[%c0_165, %c3_166, %c0_167] : memref<2x22x44xf32, #tpu.memory_space<vmem>>, vector<2x16x44xf32>
      %c21 = arith.constant 21 : index
      %323 = memref.load %arg3[%c21] : memref<98xf32, #tpu.memory_space<smem>>
      %c70 = arith.constant 70 : index
      %324 = memref.load %arg3[%c70] : memref<98xf32, #tpu.memory_space<smem>>
      %325 = vector.extract_strided_slice %322 {offsets = [0, 0, 0], sizes = [2, 16, 16], strides = [1, 1, 1]} : vector<2x16x44xf32> to vector<2x16x16xf32>
      %326 = vector.broadcast %323 : f32 to vector<2x16x16xf32>
      %327 = arith.mulf %326, %325 : vector<2x16x16xf32>
      %328 = vector.extract_strided_slice %322 {offsets = [0, 0, 22], sizes = [2, 16, 16], strides = [1, 1, 1]} : vector<2x16x44xf32> to vector<2x16x16xf32>
      %329 = vector.broadcast %324 : f32 to vector<2x16x16xf32>
      %330 = arith.mulf %329, %328 : vector<2x16x16xf32>
      %331 = arith.addf %327, %330 : vector<2x16x16xf32>
      %332 = arith.addf %321, %331 : vector<2x16x16xf32>
      %c22 = arith.constant 22 : index
      %333 = memref.load %arg3[%c22] : memref<98xf32, #tpu.memory_space<smem>>
      %c71 = arith.constant 71 : index
      %334 = memref.load %arg3[%c71] : memref<98xf32, #tpu.memory_space<smem>>
      %335 = vector.extract_strided_slice %322 {offsets = [0, 0, 1], sizes = [2, 16, 16], strides = [1, 1, 1]} : vector<2x16x44xf32> to vector<2x16x16xf32>
      %336 = vector.broadcast %333 : f32 to vector<2x16x16xf32>
      %337 = arith.mulf %336, %335 : vector<2x16x16xf32>
      %338 = vector.extract_strided_slice %322 {offsets = [0, 0, 23], sizes = [2, 16, 16], strides = [1, 1, 1]} : vector<2x16x44xf32> to vector<2x16x16xf32>
      %339 = vector.broadcast %334 : f32 to vector<2x16x16xf32>
      %340 = arith.mulf %339, %338 : vector<2x16x16xf32>
      %341 = arith.addf %337, %340 : vector<2x16x16xf32>
      %342 = arith.addf %332, %341 : vector<2x16x16xf32>
      %c23 = arith.constant 23 : index
      %343 = memref.load %arg3[%c23] : memref<98xf32, #tpu.memory_space<smem>>
      %c72 = arith.constant 72 : index
      %344 = memref.load %arg3[%c72] : memref<98xf32, #tpu.memory_space<smem>>
      %345 = vector.extract_strided_slice %322 {offsets = [0, 0, 2], sizes = [2, 16, 16], strides = [1, 1, 1]} : vector<2x16x44xf32> to vector<2x16x16xf32>
      %346 = vector.broadcast %343 : f32 to vector<2x16x16xf32>
      %347 = arith.mulf %346, %345 : vector<2x16x16xf32>
      %348 = vector.extract_strided_slice %322 {offsets = [0, 0, 24], sizes = [2, 16, 16], strides = [1, 1, 1]} : vector<2x16x44xf32> to vector<2x16x16xf32>
      %349 = vector.broadcast %344 : f32 to vector<2x16x16xf32>
      %350 = arith.mulf %349, %348 : vector<2x16x16xf32>
      %351 = arith.addf %347, %350 : vector<2x16x16xf32>
      %352 = arith.addf %342, %351 : vector<2x16x16xf32>
      %c24 = arith.constant 24 : index
      %353 = memref.load %arg3[%c24] : memref<98xf32, #tpu.memory_space<smem>>
      %c73 = arith.constant 73 : index
      %354 = memref.load %arg3[%c73] : memref<98xf32, #tpu.memory_space<smem>>
      %355 = vector.extract_strided_slice %322 {offsets = [0, 0, 3], sizes = [2, 16, 16], strides = [1, 1, 1]} : vector<2x16x44xf32> to vector<2x16x16xf32>
      %356 = vector.broadcast %353 : f32 to vector<2x16x16xf32>
      %357 = arith.mulf %356, %355 : vector<2x16x16xf32>
      %358 = vector.extract_strided_slice %322 {offsets = [0, 0, 25], sizes = [2, 16, 16], strides = [1, 1, 1]} : vector<2x16x44xf32> to vector<2x16x16xf32>
      %359 = vector.broadcast %354 : f32 to vector<2x16x16xf32>
      %360 = arith.mulf %359, %358 : vector<2x16x16xf32>
      %361 = arith.addf %357, %360 : vector<2x16x16xf32>
      %362 = arith.addf %352, %361 : vector<2x16x16xf32>
      %c25_168 = arith.constant 25 : index
      %363 = memref.load %arg3[%c25_168] : memref<98xf32, #tpu.memory_space<smem>>
      %c74 = arith.constant 74 : index
      %364 = memref.load %arg3[%c74] : memref<98xf32, #tpu.memory_space<smem>>
      %365 = vector.extract_strided_slice %322 {offsets = [0, 0, 4], sizes = [2, 16, 16], strides = [1, 1, 1]} : vector<2x16x44xf32> to vector<2x16x16xf32>
      %366 = vector.broadcast %363 : f32 to vector<2x16x16xf32>
      %367 = arith.mulf %366, %365 : vector<2x16x16xf32>
      %368 = vector.extract_strided_slice %322 {offsets = [0, 0, 26], sizes = [2, 16, 16], strides = [1, 1, 1]} : vector<2x16x44xf32> to vector<2x16x16xf32>
      %369 = vector.broadcast %364 : f32 to vector<2x16x16xf32>
      %370 = arith.mulf %369, %368 : vector<2x16x16xf32>
      %371 = arith.addf %367, %370 : vector<2x16x16xf32>
      %372 = arith.addf %362, %371 : vector<2x16x16xf32>
      %c26 = arith.constant 26 : index
      %373 = memref.load %arg3[%c26] : memref<98xf32, #tpu.memory_space<smem>>
      %c75 = arith.constant 75 : index
      %374 = memref.load %arg3[%c75] : memref<98xf32, #tpu.memory_space<smem>>
      %375 = vector.extract_strided_slice %322 {offsets = [0, 0, 5], sizes = [2, 16, 16], strides = [1, 1, 1]} : vector<2x16x44xf32> to vector<2x16x16xf32>
      %376 = vector.broadcast %373 : f32 to vector<2x16x16xf32>
      %377 = arith.mulf %376, %375 : vector<2x16x16xf32>
      %378 = vector.extract_strided_slice %322 {offsets = [0, 0, 27], sizes = [2, 16, 16], strides = [1, 1, 1]} : vector<2x16x44xf32> to vector<2x16x16xf32>
      %379 = vector.broadcast %374 : f32 to vector<2x16x16xf32>
      %380 = arith.mulf %379, %378 : vector<2x16x16xf32>
      %381 = arith.addf %377, %380 : vector<2x16x16xf32>
      %382 = arith.addf %372, %381 : vector<2x16x16xf32>
      %c27 = arith.constant 27 : index
      %383 = memref.load %arg3[%c27] : memref<98xf32, #tpu.memory_space<smem>>
      %c76 = arith.constant 76 : index
      %384 = memref.load %arg3[%c76] : memref<98xf32, #tpu.memory_space<smem>>
      %385 = vector.extract_strided_slice %322 {offsets = [0, 0, 6], sizes = [2, 16, 16], strides = [1, 1, 1]} : vector<2x16x44xf32> to vector<2x16x16xf32>
      %386 = vector.broadcast %383 : f32 to vector<2x16x16xf32>
      %387 = arith.mulf %386, %385 : vector<2x16x16xf32>
      %388 = vector.extract_strided_slice %322 {offsets = [0, 0, 28], sizes = [2, 16, 16], strides = [1, 1, 1]} : vector<2x16x44xf32> to vector<2x16x16xf32>
      %389 = vector.broadcast %384 : f32 to vector<2x16x16xf32>
      %390 = arith.mulf %389, %388 : vector<2x16x16xf32>
      %391 = arith.addf %387, %390 : vector<2x16x16xf32>
      %392 = arith.addf %382, %391 : vector<2x16x16xf32>
      %c0_169 = arith.constant 0 : index
      %c4_170 = arith.constant 4 : index
      %c0_171 = arith.constant 0 : index
      %393 = vector.load %arg7[%c0_169, %c4_170, %c0_171] : memref<2x22x44xf32, #tpu.memory_space<vmem>>, vector<2x16x44xf32>
      %c28 = arith.constant 28 : index
      %394 = memref.load %arg3[%c28] : memref<98xf32, #tpu.memory_space<smem>>
      %c77 = arith.constant 77 : index
      %395 = memref.load %arg3[%c77] : memref<98xf32, #tpu.memory_space<smem>>
      %396 = vector.extract_strided_slice %393 {offsets = [0, 0, 0], sizes = [2, 16, 16], strides = [1, 1, 1]} : vector<2x16x44xf32> to vector<2x16x16xf32>
      %397 = vector.broadcast %394 : f32 to vector<2x16x16xf32>
      %398 = arith.mulf %397, %396 : vector<2x16x16xf32>
      %399 = vector.extract_strided_slice %393 {offsets = [0, 0, 22], sizes = [2, 16, 16], strides = [1, 1, 1]} : vector<2x16x44xf32> to vector<2x16x16xf32>
      %400 = vector.broadcast %395 : f32 to vector<2x16x16xf32>
      %401 = arith.mulf %400, %399 : vector<2x16x16xf32>
      %402 = arith.addf %398, %401 : vector<2x16x16xf32>
      %403 = arith.addf %392, %402 : vector<2x16x16xf32>
      %c29 = arith.constant 29 : index
      %404 = memref.load %arg3[%c29] : memref<98xf32, #tpu.memory_space<smem>>
      %c78 = arith.constant 78 : index
      %405 = memref.load %arg3[%c78] : memref<98xf32, #tpu.memory_space<smem>>
      %406 = vector.extract_strided_slice %393 {offsets = [0, 0, 1], sizes = [2, 16, 16], strides = [1, 1, 1]} : vector<2x16x44xf32> to vector<2x16x16xf32>
      %407 = vector.broadcast %404 : f32 to vector<2x16x16xf32>
      %408 = arith.mulf %407, %406 : vector<2x16x16xf32>
      %409 = vector.extract_strided_slice %393 {offsets = [0, 0, 23], sizes = [2, 16, 16], strides = [1, 1, 1]} : vector<2x16x44xf32> to vector<2x16x16xf32>
      %410 = vector.broadcast %405 : f32 to vector<2x16x16xf32>
      %411 = arith.mulf %410, %409 : vector<2x16x16xf32>
      %412 = arith.addf %408, %411 : vector<2x16x16xf32>
      %413 = arith.addf %403, %412 : vector<2x16x16xf32>
      %c30 = arith.constant 30 : index
      %414 = memref.load %arg3[%c30] : memref<98xf32, #tpu.memory_space<smem>>
      %c79 = arith.constant 79 : index
      %415 = memref.load %arg3[%c79] : memref<98xf32, #tpu.memory_space<smem>>
      %416 = vector.extract_strided_slice %393 {offsets = [0, 0, 2], sizes = [2, 16, 16], strides = [1, 1, 1]} : vector<2x16x44xf32> to vector<2x16x16xf32>
      %417 = vector.broadcast %414 : f32 to vector<2x16x16xf32>
      %418 = arith.mulf %417, %416 : vector<2x16x16xf32>
      %419 = vector.extract_strided_slice %393 {offsets = [0, 0, 24], sizes = [2, 16, 16], strides = [1, 1, 1]} : vector<2x16x44xf32> to vector<2x16x16xf32>
      %420 = vector.broadcast %415 : f32 to vector<2x16x16xf32>
      %421 = arith.mulf %420, %419 : vector<2x16x16xf32>
      %422 = arith.addf %418, %421 : vector<2x16x16xf32>
      %423 = arith.addf %413, %422 : vector<2x16x16xf32>
      %c31 = arith.constant 31 : index
      %424 = memref.load %arg3[%c31] : memref<98xf32, #tpu.memory_space<smem>>
      %c80_172 = arith.constant 80 : index
      %425 = memref.load %arg3[%c80_172] : memref<98xf32, #tpu.memory_space<smem>>
      %426 = vector.extract_strided_slice %393 {offsets = [0, 0, 3], sizes = [2, 16, 16], strides = [1, 1, 1]} : vector<2x16x44xf32> to vector<2x16x16xf32>
      %427 = vector.broadcast %424 : f32 to vector<2x16x16xf32>
      %428 = arith.mulf %427, %426 : vector<2x16x16xf32>
      %429 = vector.extract_strided_slice %393 {offsets = [0, 0, 25], sizes = [2, 16, 16], strides = [1, 1, 1]} : vector<2x16x44xf32> to vector<2x16x16xf32>
      %430 = vector.broadcast %425 : f32 to vector<2x16x16xf32>
      %431 = arith.mulf %430, %429 : vector<2x16x16xf32>
      %432 = arith.addf %428, %431 : vector<2x16x16xf32>
      %433 = arith.addf %423, %432 : vector<2x16x16xf32>
      %c32_173 = arith.constant 32 : index
      %434 = memref.load %arg3[%c32_173] : memref<98xf32, #tpu.memory_space<smem>>
      %c81 = arith.constant 81 : index
      %435 = memref.load %arg3[%c81] : memref<98xf32, #tpu.memory_space<smem>>
      %436 = vector.extract_strided_slice %393 {offsets = [0, 0, 4], sizes = [2, 16, 16], strides = [1, 1, 1]} : vector<2x16x44xf32> to vector<2x16x16xf32>
      %437 = vector.broadcast %434 : f32 to vector<2x16x16xf32>
      %438 = arith.mulf %437, %436 : vector<2x16x16xf32>
      %439 = vector.extract_strided_slice %393 {offsets = [0, 0, 26], sizes = [2, 16, 16], strides = [1, 1, 1]} : vector<2x16x44xf32> to vector<2x16x16xf32>
      %440 = vector.broadcast %435 : f32 to vector<2x16x16xf32>
      %441 = arith.mulf %440, %439 : vector<2x16x16xf32>
      %442 = arith.addf %438, %441 : vector<2x16x16xf32>
      %443 = arith.addf %433, %442 : vector<2x16x16xf32>
      %c33 = arith.constant 33 : index
      %444 = memref.load %arg3[%c33] : memref<98xf32, #tpu.memory_space<smem>>
      %c82 = arith.constant 82 : index
      %445 = memref.load %arg3[%c82] : memref<98xf32, #tpu.memory_space<smem>>
      %446 = vector.extract_strided_slice %393 {offsets = [0, 0, 5], sizes = [2, 16, 16], strides = [1, 1, 1]} : vector<2x16x44xf32> to vector<2x16x16xf32>
      %447 = vector.broadcast %444 : f32 to vector<2x16x16xf32>
      %448 = arith.mulf %447, %446 : vector<2x16x16xf32>
      %449 = vector.extract_strided_slice %393 {offsets = [0, 0, 27], sizes = [2, 16, 16], strides = [1, 1, 1]} : vector<2x16x44xf32> to vector<2x16x16xf32>
      %450 = vector.broadcast %445 : f32 to vector<2x16x16xf32>
      %451 = arith.mulf %450, %449 : vector<2x16x16xf32>
      %452 = arith.addf %448, %451 : vector<2x16x16xf32>
      %453 = arith.addf %443, %452 : vector<2x16x16xf32>
      %c34 = arith.constant 34 : index
      %454 = memref.load %arg3[%c34] : memref<98xf32, #tpu.memory_space<smem>>
      %c83 = arith.constant 83 : index
      %455 = memref.load %arg3[%c83] : memref<98xf32, #tpu.memory_space<smem>>
      %456 = vector.extract_strided_slice %393 {offsets = [0, 0, 6], sizes = [2, 16, 16], strides = [1, 1, 1]} : vector<2x16x44xf32> to vector<2x16x16xf32>
      %457 = vector.broadcast %454 : f32 to vector<2x16x16xf32>
      %458 = arith.mulf %457, %456 : vector<2x16x16xf32>
      %459 = vector.extract_strided_slice %393 {offsets = [0, 0, 28], sizes = [2, 16, 16], strides = [1, 1, 1]} : vector<2x16x44xf32> to vector<2x16x16xf32>
      %460 = vector.broadcast %455 : f32 to vector<2x16x16xf32>
      %461 = arith.mulf %460, %459 : vector<2x16x16xf32>
      %462 = arith.addf %458, %461 : vector<2x16x16xf32>
      %463 = arith.addf %453, %462 : vector<2x16x16xf32>
      %c0_174 = arith.constant 0 : index
      %c5_175 = arith.constant 5 : index
      %c0_176 = arith.constant 0 : index
      %464 = vector.load %arg7[%c0_174, %c5_175, %c0_176] : memref<2x22x44xf32, #tpu.memory_space<vmem>>, vector<2x16x44xf32>
      %c35 = arith.constant 35 : index
      %465 = memref.load %arg3[%c35] : memref<98xf32, #tpu.memory_space<smem>>
      %c84 = arith.constant 84 : index
      %466 = memref.load %arg3[%c84] : memref<98xf32, #tpu.memory_space<smem>>
      %467 = vector.extract_strided_slice %464 {offsets = [0, 0, 0], sizes = [2, 16, 16], strides = [1, 1, 1]} : vector<2x16x44xf32> to vector<2x16x16xf32>
      %468 = vector.broadcast %465 : f32 to vector<2x16x16xf32>
      %469 = arith.mulf %468, %467 : vector<2x16x16xf32>
      %470 = vector.extract_strided_slice %464 {offsets = [0, 0, 22], sizes = [2, 16, 16], strides = [1, 1, 1]} : vector<2x16x44xf32> to vector<2x16x16xf32>
      %471 = vector.broadcast %466 : f32 to vector<2x16x16xf32>
      %472 = arith.mulf %471, %470 : vector<2x16x16xf32>
      %473 = arith.addf %469, %472 : vector<2x16x16xf32>
      %474 = arith.addf %463, %473 : vector<2x16x16xf32>
      %c36 = arith.constant 36 : index
      %475 = memref.load %arg3[%c36] : memref<98xf32, #tpu.memory_space<smem>>
      %c85 = arith.constant 85 : index
      %476 = memref.load %arg3[%c85] : memref<98xf32, #tpu.memory_space<smem>>
      %477 = vector.extract_strided_slice %464 {offsets = [0, 0, 1], sizes = [2, 16, 16], strides = [1, 1, 1]} : vector<2x16x44xf32> to vector<2x16x16xf32>
      %478 = vector.broadcast %475 : f32 to vector<2x16x16xf32>
      %479 = arith.mulf %478, %477 : vector<2x16x16xf32>
      %480 = vector.extract_strided_slice %464 {offsets = [0, 0, 23], sizes = [2, 16, 16], strides = [1, 1, 1]} : vector<2x16x44xf32> to vector<2x16x16xf32>
      %481 = vector.broadcast %476 : f32 to vector<2x16x16xf32>
      %482 = arith.mulf %481, %480 : vector<2x16x16xf32>
      %483 = arith.addf %479, %482 : vector<2x16x16xf32>
      %484 = arith.addf %474, %483 : vector<2x16x16xf32>
      %c37 = arith.constant 37 : index
      %485 = memref.load %arg3[%c37] : memref<98xf32, #tpu.memory_space<smem>>
      %c86 = arith.constant 86 : index
      %486 = memref.load %arg3[%c86] : memref<98xf32, #tpu.memory_space<smem>>
      %487 = vector.extract_strided_slice %464 {offsets = [0, 0, 2], sizes = [2, 16, 16], strides = [1, 1, 1]} : vector<2x16x44xf32> to vector<2x16x16xf32>
      %488 = vector.broadcast %485 : f32 to vector<2x16x16xf32>
      %489 = arith.mulf %488, %487 : vector<2x16x16xf32>
      %490 = vector.extract_strided_slice %464 {offsets = [0, 0, 24], sizes = [2, 16, 16], strides = [1, 1, 1]} : vector<2x16x44xf32> to vector<2x16x16xf32>
      %491 = vector.broadcast %486 : f32 to vector<2x16x16xf32>
      %492 = arith.mulf %491, %490 : vector<2x16x16xf32>
      %493 = arith.addf %489, %492 : vector<2x16x16xf32>
      %494 = arith.addf %484, %493 : vector<2x16x16xf32>
      %c38 = arith.constant 38 : index
      %495 = memref.load %arg3[%c38] : memref<98xf32, #tpu.memory_space<smem>>
      %c87 = arith.constant 87 : index
      %496 = memref.load %arg3[%c87] : memref<98xf32, #tpu.memory_space<smem>>
      %497 = vector.extract_strided_slice %464 {offsets = [0, 0, 3], sizes = [2, 16, 16], strides = [1, 1, 1]} : vector<2x16x44xf32> to vector<2x16x16xf32>
      %498 = vector.broadcast %495 : f32 to vector<2x16x16xf32>
      %499 = arith.mulf %498, %497 : vector<2x16x16xf32>
      %500 = vector.extract_strided_slice %464 {offsets = [0, 0, 25], sizes = [2, 16, 16], strides = [1, 1, 1]} : vector<2x16x44xf32> to vector<2x16x16xf32>
      %501 = vector.broadcast %496 : f32 to vector<2x16x16xf32>
      %502 = arith.mulf %501, %500 : vector<2x16x16xf32>
      %503 = arith.addf %499, %502 : vector<2x16x16xf32>
      %504 = arith.addf %494, %503 : vector<2x16x16xf32>
      %c39 = arith.constant 39 : index
      %505 = memref.load %arg3[%c39] : memref<98xf32, #tpu.memory_space<smem>>
      %c88 = arith.constant 88 : index
      %506 = memref.load %arg3[%c88] : memref<98xf32, #tpu.memory_space<smem>>
      %507 = vector.extract_strided_slice %464 {offsets = [0, 0, 4], sizes = [2, 16, 16], strides = [1, 1, 1]} : vector<2x16x44xf32> to vector<2x16x16xf32>
      %508 = vector.broadcast %505 : f32 to vector<2x16x16xf32>
      %509 = arith.mulf %508, %507 : vector<2x16x16xf32>
      %510 = vector.extract_strided_slice %464 {offsets = [0, 0, 26], sizes = [2, 16, 16], strides = [1, 1, 1]} : vector<2x16x44xf32> to vector<2x16x16xf32>
      %511 = vector.broadcast %506 : f32 to vector<2x16x16xf32>
      %512 = arith.mulf %511, %510 : vector<2x16x16xf32>
      %513 = arith.addf %509, %512 : vector<2x16x16xf32>
      %514 = arith.addf %504, %513 : vector<2x16x16xf32>
      %c40 = arith.constant 40 : index
      %515 = memref.load %arg3[%c40] : memref<98xf32, #tpu.memory_space<smem>>
      %c89 = arith.constant 89 : index
      %516 = memref.load %arg3[%c89] : memref<98xf32, #tpu.memory_space<smem>>
      %517 = vector.extract_strided_slice %464 {offsets = [0, 0, 5], sizes = [2, 16, 16], strides = [1, 1, 1]} : vector<2x16x44xf32> to vector<2x16x16xf32>
      %518 = vector.broadcast %515 : f32 to vector<2x16x16xf32>
      %519 = arith.mulf %518, %517 : vector<2x16x16xf32>
      %520 = vector.extract_strided_slice %464 {offsets = [0, 0, 27], sizes = [2, 16, 16], strides = [1, 1, 1]} : vector<2x16x44xf32> to vector<2x16x16xf32>
      %521 = vector.broadcast %516 : f32 to vector<2x16x16xf32>
      %522 = arith.mulf %521, %520 : vector<2x16x16xf32>
      %523 = arith.addf %519, %522 : vector<2x16x16xf32>
      %524 = arith.addf %514, %523 : vector<2x16x16xf32>
      %c41 = arith.constant 41 : index
      %525 = memref.load %arg3[%c41] : memref<98xf32, #tpu.memory_space<smem>>
      %c90 = arith.constant 90 : index
      %526 = memref.load %arg3[%c90] : memref<98xf32, #tpu.memory_space<smem>>
      %527 = vector.extract_strided_slice %464 {offsets = [0, 0, 6], sizes = [2, 16, 16], strides = [1, 1, 1]} : vector<2x16x44xf32> to vector<2x16x16xf32>
      %528 = vector.broadcast %525 : f32 to vector<2x16x16xf32>
      %529 = arith.mulf %528, %527 : vector<2x16x16xf32>
      %530 = vector.extract_strided_slice %464 {offsets = [0, 0, 28], sizes = [2, 16, 16], strides = [1, 1, 1]} : vector<2x16x44xf32> to vector<2x16x16xf32>
      %531 = vector.broadcast %526 : f32 to vector<2x16x16xf32>
      %532 = arith.mulf %531, %530 : vector<2x16x16xf32>
      %533 = arith.addf %529, %532 : vector<2x16x16xf32>
      %534 = arith.addf %524, %533 : vector<2x16x16xf32>
      %c0_177 = arith.constant 0 : index
      %c6_178 = arith.constant 6 : index
      %c0_179 = arith.constant 0 : index
      %535 = vector.load %arg7[%c0_177, %c6_178, %c0_179] : memref<2x22x44xf32, #tpu.memory_space<vmem>>, vector<2x16x44xf32>
      %c42 = arith.constant 42 : index
      %536 = memref.load %arg3[%c42] : memref<98xf32, #tpu.memory_space<smem>>
      %c91 = arith.constant 91 : index
      %537 = memref.load %arg3[%c91] : memref<98xf32, #tpu.memory_space<smem>>
      %538 = vector.extract_strided_slice %535 {offsets = [0, 0, 0], sizes = [2, 16, 16], strides = [1, 1, 1]} : vector<2x16x44xf32> to vector<2x16x16xf32>
      %539 = vector.broadcast %536 : f32 to vector<2x16x16xf32>
      %540 = arith.mulf %539, %538 : vector<2x16x16xf32>
      %541 = vector.extract_strided_slice %535 {offsets = [0, 0, 22], sizes = [2, 16, 16], strides = [1, 1, 1]} : vector<2x16x44xf32> to vector<2x16x16xf32>
      %542 = vector.broadcast %537 : f32 to vector<2x16x16xf32>
      %543 = arith.mulf %542, %541 : vector<2x16x16xf32>
      %544 = arith.addf %540, %543 : vector<2x16x16xf32>
      %545 = arith.addf %534, %544 : vector<2x16x16xf32>
      %c43 = arith.constant 43 : index
      %546 = memref.load %arg3[%c43] : memref<98xf32, #tpu.memory_space<smem>>
      %c92 = arith.constant 92 : index
      %547 = memref.load %arg3[%c92] : memref<98xf32, #tpu.memory_space<smem>>
      %548 = vector.extract_strided_slice %535 {offsets = [0, 0, 1], sizes = [2, 16, 16], strides = [1, 1, 1]} : vector<2x16x44xf32> to vector<2x16x16xf32>
      %549 = vector.broadcast %546 : f32 to vector<2x16x16xf32>
      %550 = arith.mulf %549, %548 : vector<2x16x16xf32>
      %551 = vector.extract_strided_slice %535 {offsets = [0, 0, 23], sizes = [2, 16, 16], strides = [1, 1, 1]} : vector<2x16x44xf32> to vector<2x16x16xf32>
      %552 = vector.broadcast %547 : f32 to vector<2x16x16xf32>
      %553 = arith.mulf %552, %551 : vector<2x16x16xf32>
      %554 = arith.addf %550, %553 : vector<2x16x16xf32>
      %555 = arith.addf %545, %554 : vector<2x16x16xf32>
      %c44 = arith.constant 44 : index
      %556 = memref.load %arg3[%c44] : memref<98xf32, #tpu.memory_space<smem>>
      %c93 = arith.constant 93 : index
      %557 = memref.load %arg3[%c93] : memref<98xf32, #tpu.memory_space<smem>>
      %558 = vector.extract_strided_slice %535 {offsets = [0, 0, 2], sizes = [2, 16, 16], strides = [1, 1, 1]} : vector<2x16x44xf32> to vector<2x16x16xf32>
      %559 = vector.broadcast %556 : f32 to vector<2x16x16xf32>
      %560 = arith.mulf %559, %558 : vector<2x16x16xf32>
      %561 = vector.extract_strided_slice %535 {offsets = [0, 0, 24], sizes = [2, 16, 16], strides = [1, 1, 1]} : vector<2x16x44xf32> to vector<2x16x16xf32>
      %562 = vector.broadcast %557 : f32 to vector<2x16x16xf32>
      %563 = arith.mulf %562, %561 : vector<2x16x16xf32>
      %564 = arith.addf %560, %563 : vector<2x16x16xf32>
      %565 = arith.addf %555, %564 : vector<2x16x16xf32>
      %c45 = arith.constant 45 : index
      %566 = memref.load %arg3[%c45] : memref<98xf32, #tpu.memory_space<smem>>
      %c94 = arith.constant 94 : index
      %567 = memref.load %arg3[%c94] : memref<98xf32, #tpu.memory_space<smem>>
      %568 = vector.extract_strided_slice %535 {offsets = [0, 0, 3], sizes = [2, 16, 16], strides = [1, 1, 1]} : vector<2x16x44xf32> to vector<2x16x16xf32>
      %569 = vector.broadcast %566 : f32 to vector<2x16x16xf32>
      %570 = arith.mulf %569, %568 : vector<2x16x16xf32>
      %571 = vector.extract_strided_slice %535 {offsets = [0, 0, 25], sizes = [2, 16, 16], strides = [1, 1, 1]} : vector<2x16x44xf32> to vector<2x16x16xf32>
      %572 = vector.broadcast %567 : f32 to vector<2x16x16xf32>
      %573 = arith.mulf %572, %571 : vector<2x16x16xf32>
      %574 = arith.addf %570, %573 : vector<2x16x16xf32>
      %575 = arith.addf %565, %574 : vector<2x16x16xf32>
      %c46 = arith.constant 46 : index
      %576 = memref.load %arg3[%c46] : memref<98xf32, #tpu.memory_space<smem>>
      %c95 = arith.constant 95 : index
      %577 = memref.load %arg3[%c95] : memref<98xf32, #tpu.memory_space<smem>>
      %578 = vector.extract_strided_slice %535 {offsets = [0, 0, 4], sizes = [2, 16, 16], strides = [1, 1, 1]} : vector<2x16x44xf32> to vector<2x16x16xf32>
      %579 = vector.broadcast %576 : f32 to vector<2x16x16xf32>
      %580 = arith.mulf %579, %578 : vector<2x16x16xf32>
      %581 = vector.extract_strided_slice %535 {offsets = [0, 0, 26], sizes = [2, 16, 16], strides = [1, 1, 1]} : vector<2x16x44xf32> to vector<2x16x16xf32>
      %582 = vector.broadcast %577 : f32 to vector<2x16x16xf32>
      %583 = arith.mulf %582, %581 : vector<2x16x16xf32>
      %584 = arith.addf %580, %583 : vector<2x16x16xf32>
      %585 = arith.addf %575, %584 : vector<2x16x16xf32>
      %c47 = arith.constant 47 : index
      %586 = memref.load %arg3[%c47] : memref<98xf32, #tpu.memory_space<smem>>
      %c96_180 = arith.constant 96 : index
      %587 = memref.load %arg3[%c96_180] : memref<98xf32, #tpu.memory_space<smem>>
      %588 = vector.extract_strided_slice %535 {offsets = [0, 0, 5], sizes = [2, 16, 16], strides = [1, 1, 1]} : vector<2x16x44xf32> to vector<2x16x16xf32>
      %589 = vector.broadcast %586 : f32 to vector<2x16x16xf32>
      %590 = arith.mulf %589, %588 : vector<2x16x16xf32>
      %591 = vector.extract_strided_slice %535 {offsets = [0, 0, 27], sizes = [2, 16, 16], strides = [1, 1, 1]} : vector<2x16x44xf32> to vector<2x16x16xf32>
      %592 = vector.broadcast %587 : f32 to vector<2x16x16xf32>
      %593 = arith.mulf %592, %591 : vector<2x16x16xf32>
      %594 = arith.addf %590, %593 : vector<2x16x16xf32>
      %595 = arith.addf %585, %594 : vector<2x16x16xf32>
      %c48_181 = arith.constant 48 : index
      %596 = memref.load %arg3[%c48_181] : memref<98xf32, #tpu.memory_space<smem>>
      %c97 = arith.constant 97 : index
      %597 = memref.load %arg3[%c97] : memref<98xf32, #tpu.memory_space<smem>>
      %598 = vector.extract_strided_slice %535 {offsets = [0, 0, 6], sizes = [2, 16, 16], strides = [1, 1, 1]} : vector<2x16x44xf32> to vector<2x16x16xf32>
      %599 = vector.broadcast %596 : f32 to vector<2x16x16xf32>
      %600 = arith.mulf %599, %598 : vector<2x16x16xf32>
      %601 = vector.extract_strided_slice %535 {offsets = [0, 0, 28], sizes = [2, 16, 16], strides = [1, 1, 1]} : vector<2x16x44xf32> to vector<2x16x16xf32>
      %602 = vector.broadcast %597 : f32 to vector<2x16x16xf32>
      %603 = arith.mulf %602, %601 : vector<2x16x16xf32>
      %604 = arith.addf %600, %603 : vector<2x16x16xf32>
      %605 = arith.addf %595, %604 : vector<2x16x16xf32>
      %cst_182 = arith.constant 5.000000e-01 : f32
      %606 = vector.broadcast %cst_182 : f32 to vector<2x16x16xf32>
      %607 = arith.mulf %606, %605 : vector<2x16x16xf32>
      %608 = math.tanh %607 : vector<2x16x16xf32>
      %cst_183 = arith.constant 1.000000e+00 : f32
      %609 = vector.broadcast %cst_183 : f32 to vector<2x16x16xf32>
      %610 = arith.addf %608, %609 : vector<2x16x16xf32>
      %cst_184 = arith.constant 5.000000e-01 : f32
      %611 = vector.broadcast %cst_184 : f32 to vector<2x16x16xf32>
      %612 = arith.mulf %611, %610 : vector<2x16x16xf32>
      %613 = vector.extract_strided_slice %612 {offsets = [0, 0, 0], sizes = [2, 1, 16], strides = [1, 1, 1]} : vector<2x16x16xf32> to vector<2x1x16xf32>
      %c0_185 = arith.constant 0 : index
      %c0_186 = arith.constant 0 : index
      %c0_187 = arith.constant 0 : index
      %614 = vector.load %arg4[%c0_185, %c0_186, %c0_187] : memref<2x1x256xf32, #tpu.memory_space<vmem>>, vector<2x1x16xf32>
      tpu.vector_store %arg4[%c0_185, %c0_186, %c0_187], %613 {strides = array<i32>} : memref<2x1x256xf32, #tpu.memory_space<vmem>>, vector<2x1x16xf32>,
      %615 = vector.extract_strided_slice %612 {offsets = [0, 1, 0], sizes = [2, 1, 16], strides = [1, 1, 1]} : vector<2x16x16xf32> to vector<2x1x16xf32>
      %c0_188 = arith.constant 0 : index
      %c0_189 = arith.constant 0 : index
      %c16_190 = arith.constant 16 : index
      %616 = vector.load %arg4[%c0_188, %c0_189, %c16_190] : memref<2x1x256xf32, #tpu.memory_space<vmem>>, vector<2x1x16xf32>
      tpu.vector_store %arg4[%c0_188, %c0_189, %c16_190], %615 {strides = array<i32>} : memref<2x1x256xf32, #tpu.memory_space<vmem>>, vector<2x1x16xf32>,
      %617 = vector.extract_strided_slice %612 {offsets = [0, 2, 0], sizes = [2, 1, 16], strides = [1, 1, 1]} : vector<2x16x16xf32> to vector<2x1x16xf32>
      %c0_191 = arith.constant 0 : index
      %c0_192 = arith.constant 0 : index
      %c32_193 = arith.constant 32 : index
      %618 = vector.load %arg4[%c0_191, %c0_192, %c32_193] : memref<2x1x256xf32, #tpu.memory_space<vmem>>, vector<2x1x16xf32>
      tpu.vector_store %arg4[%c0_191, %c0_192, %c32_193], %617 {strides = array<i32>} : memref<2x1x256xf32, #tpu.memory_space<vmem>>, vector<2x1x16xf32>,
      %619 = vector.extract_strided_slice %612 {offsets = [0, 3, 0], sizes = [2, 1, 16], strides = [1, 1, 1]} : vector<2x16x16xf32> to vector<2x1x16xf32>
      %c0_194 = arith.constant 0 : index
      %c0_195 = arith.constant 0 : index
      %c48_196 = arith.constant 48 : index
      %620 = vector.load %arg4[%c0_194, %c0_195, %c48_196] : memref<2x1x256xf32, #tpu.memory_space<vmem>>, vector<2x1x16xf32>
      tpu.vector_store %arg4[%c0_194, %c0_195, %c48_196], %619 {strides = array<i32>} : memref<2x1x256xf32, #tpu.memory_space<vmem>>, vector<2x1x16xf32>,
      %621 = vector.extract_strided_slice %612 {offsets = [0, 4, 0], sizes = [2, 1, 16], strides = [1, 1, 1]} : vector<2x16x16xf32> to vector<2x1x16xf32>
      %c0_197 = arith.constant 0 : index
      %c0_198 = arith.constant 0 : index
      %c64_199 = arith.constant 64 : index
      %622 = vector.load %arg4[%c0_197, %c0_198, %c64_199] : memref<2x1x256xf32, #tpu.memory_space<vmem>>, vector<2x1x16xf32>
      tpu.vector_store %arg4[%c0_197, %c0_198, %c64_199], %621 {strides = array<i32>} : memref<2x1x256xf32, #tpu.memory_space<vmem>>, vector<2x1x16xf32>,
      %623 = vector.extract_strided_slice %612 {offsets = [0, 5, 0], sizes = [2, 1, 16], strides = [1, 1, 1]} : vector<2x16x16xf32> to vector<2x1x16xf32>
      %c0_200 = arith.constant 0 : index
      %c0_201 = arith.constant 0 : index
      %c80_202 = arith.constant 80 : index
      %624 = vector.load %arg4[%c0_200, %c0_201, %c80_202] : memref<2x1x256xf32, #tpu.memory_space<vmem>>, vector<2x1x16xf32>
      tpu.vector_store %arg4[%c0_200, %c0_201, %c80_202], %623 {strides = array<i32>} : memref<2x1x256xf32, #tpu.memory_space<vmem>>, vector<2x1x16xf32>,
      %625 = vector.extract_strided_slice %612 {offsets = [0, 6, 0], sizes = [2, 1, 16], strides = [1, 1, 1]} : vector<2x16x16xf32> to vector<2x1x16xf32>
      %c0_203 = arith.constant 0 : index
      %c0_204 = arith.constant 0 : index
      %c96_205 = arith.constant 96 : index
      %626 = vector.load %arg4[%c0_203, %c0_204, %c96_205] : memref<2x1x256xf32, #tpu.memory_space<vmem>>, vector<2x1x16xf32>
      tpu.vector_store %arg4[%c0_203, %c0_204, %c96_205], %625 {strides = array<i32>} : memref<2x1x256xf32, #tpu.memory_space<vmem>>, vector<2x1x16xf32>,
      %627 = vector.extract_strided_slice %612 {offsets = [0, 7, 0], sizes = [2, 1, 16], strides = [1, 1, 1]} : vector<2x16x16xf32> to vector<2x1x16xf32>
      %c0_206 = arith.constant 0 : index
      %c0_207 = arith.constant 0 : index
      %c112_208 = arith.constant 112 : index
      %628 = vector.load %arg4[%c0_206, %c0_207, %c112_208] : memref<2x1x256xf32, #tpu.memory_space<vmem>>, vector<2x1x16xf32>
      tpu.vector_store %arg4[%c0_206, %c0_207, %c112_208], %627 {strides = array<i32>} : memref<2x1x256xf32, #tpu.memory_space<vmem>>, vector<2x1x16xf32>,
      %629 = vector.extract_strided_slice %612 {offsets = [0, 8, 0], sizes = [2, 1, 16], strides = [1, 1, 1]} : vector<2x16x16xf32> to vector<2x1x16xf32>
      %c0_209 = arith.constant 0 : index
      %c0_210 = arith.constant 0 : index
      %c128_211 = arith.constant 128 : index
      %630 = vector.load %arg4[%c0_209, %c0_210, %c128_211] : memref<2x1x256xf32, #tpu.memory_space<vmem>>, vector<2x1x16xf32>
      tpu.vector_store %arg4[%c0_209, %c0_210, %c128_211], %629 {strides = array<i32>} : memref<2x1x256xf32, #tpu.memory_space<vmem>>, vector<2x1x16xf32>,
      %631 = vector.extract_strided_slice %612 {offsets = [0, 9, 0], sizes = [2, 1, 16], strides = [1, 1, 1]} : vector<2x16x16xf32> to vector<2x1x16xf32>
      %c0_212 = arith.constant 0 : index
      %c0_213 = arith.constant 0 : index
      %c144_214 = arith.constant 144 : index
      %632 = vector.load %arg4[%c0_212, %c0_213, %c144_214] : memref<2x1x256xf32, #tpu.memory_space<vmem>>, vector<2x1x16xf32>
      tpu.vector_store %arg4[%c0_212, %c0_213, %c144_214], %631 {strides = array<i32>} : memref<2x1x256xf32, #tpu.memory_space<vmem>>, vector<2x1x16xf32>,
      %633 = vector.extract_strided_slice %612 {offsets = [0, 10, 0], sizes = [2, 1, 16], strides = [1, 1, 1]} : vector<2x16x16xf32> to vector<2x1x16xf32>
      %c0_215 = arith.constant 0 : index
      %c0_216 = arith.constant 0 : index
      %c160_217 = arith.constant 160 : index
      %634 = vector.load %arg4[%c0_215, %c0_216, %c160_217] : memref<2x1x256xf32, #tpu.memory_space<vmem>>, vector<2x1x16xf32>
      tpu.vector_store %arg4[%c0_215, %c0_216, %c160_217], %633 {strides = array<i32>} : memref<2x1x256xf32, #tpu.memory_space<vmem>>, vector<2x1x16xf32>,
      %635 = vector.extract_strided_slice %612 {offsets = [0, 11, 0], sizes = [2, 1, 16], strides = [1, 1, 1]} : vector<2x16x16xf32> to vector<2x1x16xf32>
      %c0_218 = arith.constant 0 : index
      %c0_219 = arith.constant 0 : index
      %c176_220 = arith.constant 176 : index
      %636 = vector.load %arg4[%c0_218, %c0_219, %c176_220] : memref<2x1x256xf32, #tpu.memory_space<vmem>>, vector<2x1x16xf32>
      tpu.vector_store %arg4[%c0_218, %c0_219, %c176_220], %635 {strides = array<i32>} : memref<2x1x256xf32, #tpu.memory_space<vmem>>, vector<2x1x16xf32>,
      %637 = vector.extract_strided_slice %612 {offsets = [0, 12, 0], sizes = [2, 1, 16], strides = [1, 1, 1]} : vector<2x16x16xf32> to vector<2x1x16xf32>
      %c0_221 = arith.constant 0 : index
      %c0_222 = arith.constant 0 : index
      %c192_223 = arith.constant 192 : index
      %638 = vector.load %arg4[%c0_221, %c0_222, %c192_223] : memref<2x1x256xf32, #tpu.memory_space<vmem>>, vector<2x1x16xf32>
      tpu.vector_store %arg4[%c0_221, %c0_222, %c192_223], %637 {strides = array<i32>} : memref<2x1x256xf32, #tpu.memory_space<vmem>>, vector<2x1x16xf32>,
      %639 = vector.extract_strided_slice %612 {offsets = [0, 13, 0], sizes = [2, 1, 16], strides = [1, 1, 1]} : vector<2x16x16xf32> to vector<2x1x16xf32>
      %c0_224 = arith.constant 0 : index
      %c0_225 = arith.constant 0 : index
      %c208_226 = arith.constant 208 : index
      %640 = vector.load %arg4[%c0_224, %c0_225, %c208_226] : memref<2x1x256xf32, #tpu.memory_space<vmem>>, vector<2x1x16xf32>
      tpu.vector_store %arg4[%c0_224, %c0_225, %c208_226], %639 {strides = array<i32>} : memref<2x1x256xf32, #tpu.memory_space<vmem>>, vector<2x1x16xf32>,
      %641 = vector.extract_strided_slice %612 {offsets = [0, 14, 0], sizes = [2, 1, 16], strides = [1, 1, 1]} : vector<2x16x16xf32> to vector<2x1x16xf32>
      %c0_227 = arith.constant 0 : index
      %c0_228 = arith.constant 0 : index
      %c224_229 = arith.constant 224 : index
      %642 = vector.load %arg4[%c0_227, %c0_228, %c224_229] : memref<2x1x256xf32, #tpu.memory_space<vmem>>, vector<2x1x16xf32>
      tpu.vector_store %arg4[%c0_227, %c0_228, %c224_229], %641 {strides = array<i32>} : memref<2x1x256xf32, #tpu.memory_space<vmem>>, vector<2x1x16xf32>,
      %643 = vector.extract_strided_slice %612 {offsets = [0, 15, 0], sizes = [2, 1, 16], strides = [1, 1, 1]} : vector<2x16x16xf32> to vector<2x1x16xf32>
      %c0_230 = arith.constant 0 : index
      %c0_231 = arith.constant 0 : index
      %c240_232 = arith.constant 240 : index
      %644 = vector.load %arg4[%c0_230, %c0_231, %c240_232] : memref<2x1x256xf32, #tpu.memory_space<vmem>>, vector<2x1x16xf32>
      tpu.vector_store %arg4[%c0_230, %c0_231, %c240_232], %643 {strides = array<i32>} : memref<2x1x256xf32, #tpu.memory_space<vmem>>, vector<2x1x16xf32>,
    } else {
    }
    return
  }
  func.func @transform_0(%arg0: i32, %arg1: i32) -> (i32, i32, i32) {
    %c0_i32 = arith.constant 0 : i32
    %c0_i32_0 = arith.constant 0 : i32
    return %arg0, %arg1, %c0_i32 : i32, i32, i32
  }
  func.func @transform_1(%arg0: i32, %arg1: i32) -> i32 {
    %c0_i32 = arith.constant 0 : i32
    %c0_i32_0 = arith.constant 0 : i32
    return %c0_i32 : i32
  }
  func.func @transform_2(%arg0: i32, %arg1: i32) -> (i32, i32, i32) {
    %c0_i32 = arith.constant 0 : i32
    %c0_i32_0 = arith.constant 0 : i32
    %c0_i32_1 = arith.constant 0 : i32
    return %arg0, %c0_i32, %c0_i32_0 : i32, i32, i32
  }
}

</mosaic_0001>

<llo_original>
// kernel: tpu_custom_call.1
$region0: #{tpu_custom_call.1}
  #allocation0 [shape = 'u32[]', space=smem, size = 0x4, offset = 0x4, fixed_abs, tag = 'smem constant byte address 0x4 - core index']
  #allocation1 [shape = 'u32[144,128]{1,0:T(1,128)}', space=vmem, size = 0x12000, scoped, tag = 'internal scratch']
  #allocation2 [shape = 'f32[2,256]{1,0:T(2,128)}', space=vmem, size = 0x800, scoped, tag = 'scratch operand']
  #allocation3 [shape = 'f32[2,256]{1,0:T(2,128)}', space=vmem, size = 0x800, scoped, tag = 'scratch operand']
  #allocation4 [shape = 'f32[2,22,44]{2,1,0:T(8,128)}', space=vmem, size = 0x6000, scoped, tag = 'scratch operand']
  %s0 = inlined_call_operand.hbm [shape: f32[2,4,256], index: 0, kind: input, shape index: {}]
  %s1 = inlined_call_operand.vmem [shape: f32[98], index: 1, kind: input, shape index: {}]
  %s2 = inlined_call_operand.hbm [shape: f32[2,1,256], index: 2, kind: output, shape index: {}]
  %s3 = sld [smem:[#allocation0]]
  $region38: #{tpu_custom_call.1} parent=0
    _
  %s5 = ssub.s32 1, %s3
  %s6 = scalar_select 0, %s5, %s3
  $region1: #{tpu_custom_call.1} parent=0
    #allocation5 [shape = 'u8[8192]{0}', space=vmem, size = 0x2000, scoped, tag = 'input window, operand 0, single buffered']
    #allocation6 [shape = 's32[1]{0}', space=sflag, size = 0x4, scoped, tag = 'scoped memory for tpu_custom_call.1']
    #allocation7 [shape = 's32[1]{0}', space=sflag, size = 0x4, scoped, tag = 'scoped memory for tpu_custom_call.1']
    #allocation8 [shape = 's32[1]{0}', space=sflag, size = 0x4, scoped, tag = 'scoped memory for tpu_custom_call.1']
    #allocation9 [shape = 'u8[512]{0}', space=smem, size = 0x200, scoped, tag = 'input window, operand 1, single buffered']
    #allocation10 [shape = 'u8[2048]{0}', space=vmem, size = 0x800, scoped, tag = 'output window, operand 0, single buffered']
    %7 = vsyncpa [#allocation6], 0
    %8 = vsyncpa [#allocation8], 0
    %9 = vsyncpa [#allocation7], 0
    // Predicated region
    $region2: #{tpu_custom_call.1} parent=1 // pred_check
      _
    $region3: #{tpu_custom_call.1} parent=1 // pred_check_branch
      %11 = sbr.rel (0) target = $region5
    $region4: #{tpu_custom_call.1} parent=1 // pred_region
      %s13 = ssub.s32 256, 256
      %14 = vsyncadd [#allocation6], %s13
      %s15 = sshll.u32 [#allocation5], 4
      %s16 = int_to_ptr.vmem [resolvable:$true] %s15
      %21 = dma.hbm_to_vmem [thread:$0]  %s0, 256, %s16, [#allocation6], 128, 128, 8
    $region5: #{tpu_custom_call.1} parent=1 // pred_fallthru
      _
    // Predicated region
    $region6: #{tpu_custom_call.1} parent=1 // pred_check
      _
    $region7: #{tpu_custom_call.1} parent=1 // pred_check_branch
      %23 = sbr.rel (0) target = $region9
    $region8: #{tpu_custom_call.1} parent=1 // pred_region
      %s25 = ssub.s32 16, 16
      %26 = vsyncadd [#allocation8], %s25
      %s28 = sshll.u32 %s1, 4
      %s29 = int_to_ptr.vmem [resolvable:$true] %s28
      %31 = dma.vmem_to_smem %s29, 16, [#allocation9], [#allocation8]
    $region9: #{tpu_custom_call.1} parent=1 // pred_fallthru
      _
    // Predicated region
    $region10: #{tpu_custom_call.1} parent=1 // pred_check
      _
    $region11: #{tpu_custom_call.1} parent=1 // pred_check_branch
      %33 = sbr.rel (0) target = $region13
    $region12: #{tpu_custom_call.1} parent=1 // pred_region
      %34 = dma.done [#allocation6], 256
    $region13: #{tpu_custom_call.1} parent=1 // pred_fallthru
      _
    // Predicated region
    $region14: #{tpu_custom_call.1} parent=1 // pred_check
      _
    $region15: #{tpu_custom_call.1} parent=1 // pred_check_branch
      %36 = sbr.rel (0) target = $region17
    $region16: #{tpu_custom_call.1} parent=1 // pred_region
      %37 = dma.done [#allocation8], 16
    $region17: #{tpu_custom_call.1} parent=1 // pred_fallthru
      _
    %38 = sfence
    %v39 = vld [vmem:[#allocation5] sm:$0xff]
    %v40 = vld [vmem:[#allocation5 + $0x8] sm:$0xff]
    %v43 = vcombine.high %v39, %v39
    %v44 = vcombine.high %v40, %v40
    %vm47 = vcmask 1043456
    %v48 = vsel %vm47, %v39, 0.0
    %v49 = vrot.slane %v48, 4
    %v50 = vadd.f32 %v48, %v49
    %v51 = vrot.slane %v50, 2
    %v52 = vadd.f32 %v50, %v51
    %v53 = vrot.slane %v52, 1
    %v54 = vadd.f32 %v52, %v53
    %v55 = vsel %vm47, %v43, 0.0
    %v56 = vrot.slane %v55, 4
    %v57 = vadd.f32 %v55, %v56
    %v58 = vrot.slane %v57, 2
    %v59 = vadd.f32 %v57, %v58
    %v60 = vrot.slane %v59, 1
    %v61 = vadd.f32 %v59, %v60
    %v62 = vsel %vm47, %v40, 0.0
    %v63 = vrot.slane %v62, 4
    %v64 = vadd.f32 %v62, %v63
    %v65 = vrot.slane %v64, 2
    %v66 = vadd.f32 %v64, %v65
    %v67 = vrot.slane %v66, 1
    %v68 = vadd.f32 %v66, %v67
    %v69 = vsel %vm47, %v44, 0.0
    %v70 = vrot.slane %v69, 4
    %v71 = vadd.f32 %v69, %v70
    %v72 = vrot.slane %v71, 2
    %v73 = vadd.f32 %v71, %v72
    %v74 = vrot.slane %v73, 1
    %v75 = vadd.f32 %v73, %v74
    %v76 = vsel %vm47, %v39, -inf
    %v77 = vrot.slane %v76, 4
    %v78 = vmax.f32 %v76, %v77
    %v79 = vrot.slane %v78, 2
    %v80 = vmax.f32 %v78, %v79
    %v81 = vrot.slane %v80, 1
    %v82 = vmax.f32 %v80, %v81
    %v83 = vsel %vm47, %v43, -inf
    %v84 = vrot.slane %v83, 4
    %v85 = vmax.f32 %v83, %v84
    %v86 = vrot.slane %v85, 2
    %v87 = vmax.f32 %v85, %v86
    %v88 = vrot.slane %v87, 1
    %v89 = vmax.f32 %v87, %v88
    %v90 = vsel %vm47, %v40, -inf
    %v91 = vrot.slane %v90, 4
    %v92 = vmax.f32 %v90, %v91
    %v93 = vrot.slane %v92, 2
    %v94 = vmax.f32 %v92, %v93
    %v95 = vrot.slane %v94, 1
    %v96 = vmax.f32 %v94, %v95
    %v97 = vsel %vm47, %v44, -inf
    %v98 = vrot.slane %v97, 4
    %v99 = vmax.f32 %v97, %v98
    %v100 = vrot.slane %v99, 2
    %v101 = vmax.f32 %v99, %v100
    %v102 = vrot.slane %v101, 1
    %v103 = vmax.f32 %v101, %v102
    %p104 = scmp.eq.s32.totalorder 0, 0
    // Predicated region
    $region18: #{tpu_custom_call.1} parent=1 // pred_check
      %p105 = pneg %p104
    $region19: #{tpu_custom_call.1} parent=1 // pred_check_branch
      %107 = sbr.rel (%p105) target = $region21
    $region20: #{tpu_custom_call.1} parent=1 // pred_region
      %v112 = vcombine.low %v54, %v61
      %v114 = vunpack.c.l.s4 1983009808
      %v115 = vunpack.c.0.s8 %v114
      %v116 = vlaneseq
      %v117 = vshrl.u32 %v116, 7
      %v118 = vsub.s32 %v115, %v117
      %v119 = vrot.slane %v112, %v118
      %v120 = vcombine.low %v68, %v75
      %v122 = vunpack.c.l.s4 1983009808
      %v123 = vunpack.c.0.s8 %v122
      %v124 = vlaneseq
      %v125 = vshrl.u32 %v124, 7
      %v126 = vsub.s32 %v123, %v125
      %v127 = vrot.slane %v120, %v126
      %vm128 = vcmask 1044484
      %v129 = vsel %vm128, %v119, %v119
      %vm130 = vcmask 1046534
      %v131 = vsel %vm130, %v119, %v129
      %v132 = vrot.slane %v127, 7
      %vm133 = vcmask 1041409
      %v134 = vsel %vm133, %v132, %v131
      %vm135 = vcmask 1043459
      %v136 = vsel %vm135, %v132, %v134
      %vm137 = vcmask 1045509
      %v138 = vsel %vm137, %v132, %v136
      %vm139 = vcmask 1047559
      %v140 = vsel %vm139, %v132, %v138
      %142 = vst [vmem:[#allocation2] sm:$0xf] %v140
      %v147 = vcombine.low %v82, %v89
      %v149 = vunpack.c.l.s4 1983009808
      %v150 = vunpack.c.0.s8 %v149
      %v151 = vlaneseq
      %v152 = vshrl.u32 %v151, 7
      %v153 = vsub.s32 %v150, %v152
      %v154 = vrot.slane %v147, %v153
      %v155 = vcombine.low %v96, %v103
      %v157 = vunpack.c.l.s4 1983009808
      %v158 = vunpack.c.0.s8 %v157
      %v159 = vlaneseq
      %v160 = vshrl.u32 %v159, 7
      %v161 = vsub.s32 %v158, %v160
      %v162 = vrot.slane %v155, %v161
      %v163 = vsel %vm128, %v154, %v154
      %v164 = vsel %vm130, %v154, %v163
      %v165 = vrot.slane %v162, 7
      %v166 = vsel %vm133, %v165, %v164
      %v167 = vsel %vm135, %v165, %v166
      %v168 = vsel %vm137, %v165, %v167
      %v169 = vsel %vm139, %v165, %v168
      %171 = vst [vmem:[#allocation3] sm:$0xf] %v169
      %vm172 = vcmask 354304
      %173 = vst.msk [vmem:[#allocation4] sm:$0x7] %vm172, 0.0
      %174 = vst.msk [vmem:[#allocation4 + $0x18] sm:$0x7] %vm172, 0.0
      %175 = vst.msk [vmem:[#allocation4 + $0x13] sm:$0x7] %vm172, 0.0
      %176 = vst.msk [vmem:[#allocation4 + $0x2b] sm:$0x7] %vm172, 0.0
      %vm177 = vcmask 23552
      %178 = vst.msk [vmem:[#allocation4 + $0x3] sm:$0xff] %vm177, 0.0
      %179 = vst.msk [vmem:[#allocation4 + $0xb] sm:$0xff] %vm177, 0.0
      %180 = vst.msk [vmem:[#allocation4 + $0x1b] sm:$0xff] %vm177, 0.0
      %181 = vst.msk [vmem:[#allocation4 + $0x23] sm:$0xff] %vm177, 0.0
      %vm182 = vcmask 203928
      %183 = vst.msk [vmem:[#allocation4 + $0x3] sm:$0xff] %vm182, 0.0
      %184 = vst.msk [vmem:[#allocation4 + $0xb] sm:$0xff] %vm182, 0.0
      %185 = vst.msk [vmem:[#allocation4 + $0x1b] sm:$0xff] %vm182, 0.0
      %186 = vst.msk [vmem:[#allocation4 + $0x23] sm:$0xff] %vm182, 0.0
      %vm187 = vcmask 359752
      %188 = vst.msk [vmem:[#allocation4 + $0x3] sm:$0xff] %vm187, 0.0
      %189 = vst.msk [vmem:[#allocation4 + $0xb] sm:$0xff] %vm187, 0.0
      %190 = vst.msk [vmem:[#allocation4 + $0x1b] sm:$0xff] %vm187, 0.0
      %191 = vst.msk [vmem:[#allocation4 + $0x23] sm:$0xff] %vm187, 0.0
    $region21: #{tpu_custom_call.1} parent=1 // pred_fallthru
      _
    %p192 = scmp.gt.s32.totalorder 0, 0
    // Predicated region
    $region22: #{tpu_custom_call.1} parent=1 // pred_check
      %p193 = pneg %p192
    $region23: #{tpu_custom_call.1} parent=1 // pred_check_branch
      %195 = sbr.rel (%p193) target = $region25
    $region24: #{tpu_custom_call.1} parent=1 // pred_region
      %v196 = vld [vmem:[#allocation2] sm:$0xf]
      %v201 = vcombine.low %v54, %v61
      %v203 = vunpack.c.l.s4 1983009808
      %v204 = vunpack.c.0.s8 %v203
      %v205 = vlaneseq
      %v206 = vshrl.u32 %v205, 7
      %v207 = vsub.s32 %v204, %v206
      %v208 = vrot.slane %v201, %v207
      %v209 = vcombine.low %v68, %v75
      %v211 = vunpack.c.l.s4 1983009808
      %v212 = vunpack.c.0.s8 %v211
      %v213 = vlaneseq
      %v214 = vshrl.u32 %v213, 7
      %v215 = vsub.s32 %v212, %v214
      %v216 = vrot.slane %v209, %v215
      %vm217 = vcmask 1044484
      %v218 = vsel %vm217, %v208, %v208
      %vm219 = vcmask 1046534
      %v220 = vsel %vm219, %v208, %v218
      %v221 = vrot.slane %v216, 7
      %vm222 = vcmask 1041409
      %v223 = vsel %vm222, %v221, %v220
      %vm224 = vcmask 1043459
      %v225 = vsel %vm224, %v221, %v223
      %vm226 = vcmask 1045509
      %v227 = vsel %vm226, %v221, %v225
      %vm228 = vcmask 1047559
      %v229 = vsel %vm228, %v221, %v227
      %v231 = vadd.f32 %v196, %v229
      %232 = vst [vmem:[#allocation2] sm:$0xf] %v231
      %v233 = vld [vmem:[#allocation3] sm:$0xf]
      %v238 = vcombine.low %v82, %v89
      %v240 = vunpack.c.l.s4 1983009808
      %v241 = vunpack.c.0.s8 %v240
      %v242 = vlaneseq
      %v243 = vshrl.u32 %v242, 7
      %v244 = vsub.s32 %v241, %v243
      %v245 = vrot.slane %v238, %v244
      %v246 = vcombine.low %v96, %v103
      %v248 = vunpack.c.l.s4 1983009808
      %v249 = vunpack.c.0.s8 %v248
      %v250 = vlaneseq
      %v251 = vshrl.u32 %v250, 7
      %v252 = vsub.s32 %v249, %v251
      %v253 = vrot.slane %v246, %v252
      %v254 = vsel %vm217, %v245, %v245
      %v255 = vsel %vm219, %v245, %v254
      %v256 = vrot.slane %v253, 7
      %v257 = vsel %vm222, %v256, %v255
      %v258 = vsel %vm224, %v256, %v257
      %v259 = vsel %vm226, %v256, %v258
      %v260 = vsel %vm228, %v256, %v259
      %v262 = vmax.f32 %v233, %v260
      %263 = vst [vmem:[#allocation3] sm:$0xf] %v262
    $region25: #{tpu_custom_call.1} parent=1 // pred_fallthru
      _
    // Predicated region
    $region26: #{tpu_custom_call.1} parent=1 // pred_check
      %p264 = pneg %p104
    $region27: #{tpu_custom_call.1} parent=1 // pred_check_branch
      %266 = sbr.rel (%p264) target = $region29
    $region28: #{tpu_custom_call.1} parent=1 // pred_region
      %v267 = vld [vmem:[#allocation2] sm:$0x3]
      %v270 = vunpack.c.l.s4 1966171168
      %v271 = vunpack.c.0.s8 %v270
      %v272 = vlaneseq
      %v273 = vshrl.u32 %v272, 7
      %v274 = vsub.s32 %v271, %v273
      %v275 = vrot.slane %v267, %v274
      %v276 = vcombine.high %v275, %v275
      %v277 = vlaneseq
      %v278 = vshrl.u32 %v277, 7
      %v279 = vsub.s32 0, %v278
      %v280 = vrot.slane %v275, %v279
      %v281 = vlaneseq
      %v282 = vshrl.u32 %v281, 7
      %v283 = vsub.s32 0, %v282
      %v284 = vrot.slane %v276, %v283
      %285 = vrot.lane.b32.xlu0 %v280, 3
      %v286 = vpop.permute.xlu0 %285
      %287 = vrot.lane.b32.xlu0 %v284, 3
      %v288 = vpop.permute.xlu0 %287
      %vm291 = vcmask 147480
      %292 = vst.msk [vmem:[#allocation4 + $0x3] sm:$0x1] %vm291, %v286
      %293 = vst.msk [vmem:[#allocation4 + $0x1b] sm:$0x1] %vm291, %v288
      %v294 = vld [vmem:[#allocation3] sm:$0x3]
      %v297 = vunpack.c.l.s4 1966171168
      %v298 = vunpack.c.0.s8 %v297
      %v299 = vlaneseq
      %v300 = vshrl.u32 %v299, 7
      %v301 = vsub.s32 %v298, %v300
      %v302 = vrot.slane %v294, %v301
      %v303 = vcombine.high %v302, %v302
      %v304 = vlaneseq
      %v305 = vshrl.u32 %v304, 7
      %v306 = vsub.s32 0, %v305
      %v307 = vrot.slane %v302, %v306
      %v308 = vlaneseq
      %v309 = vshrl.u32 %v308, 7
      %v310 = vsub.s32 0, %v309
      %v311 = vrot.slane %v303, %v310
      %312 = vrot.lane.b32.xlu0 %v307, 25
      %v313 = vpop.permute.xlu0 %312
      %314 = vrot.lane.b32.xlu0 %v311, 25
      %v315 = vpop.permute.xlu0 %314
      %vm318 = vcmask 327880
      %319 = vst.msk [vmem:[#allocation4 + $0x3] sm:$0x1] %vm318, %v313
      %320 = vst.msk [vmem:[#allocation4 + $0x1b] sm:$0x1] %vm318, %v315
      %v321 = vld [vmem:[#allocation2] sm:$0x3]
      %v324 = vunpack.c.l.s4 1966171168
      %v325 = vunpack.c.0.s8 %v324
      %v326 = vlaneseq
      %v327 = vshrl.u32 %v326, 7
      %v328 = vsub.s32 %v325, %v327
      %v329 = vrot.slane %v321, %v328
      %v330 = vcombine.high %v329, %v329
      %v331 = vlaneseq
      %v332 = vshrl.u32 %v331, 7
      %v333 = vsub.s32 0, %v332
      %v334 = vrot.slane %v329, %v333
      %v335 = vlaneseq
      %v336 = vshrl.u32 %v335, 7
      %v337 = vsub.s32 0, %v336
      %v338 = vrot.slane %v330, %v337
      %339 = vrot.lane.b32.xlu0 %v334, 115
      %v340 = vpop.permute.xlu0 %339
      %341 = vrot.lane.b32.xlu0 %v338, 115
      %v342 = vpop.permute.xlu0 %341
      %345 = vst.msk [vmem:[#allocation4 + $0x4] sm:$0x1] %vm291, %v340
      %346 = vst.msk [vmem:[#allocation4 + $0x1c] sm:$0x1] %vm291, %v342
      %v347 = vld [vmem:[#allocation3] sm:$0x3]
      %v350 = vunpack.c.l.s4 1966171168
      %v351 = vunpack.c.0.s8 %v350
      %v352 = vlaneseq
      %v353 = vshrl.u32 %v352, 7
      %v354 = vsub.s32 %v351, %v353
      %v355 = vrot.slane %v347, %v354
      %v356 = vcombine.high %v355, %v355
      %v357 = vlaneseq
      %v358 = vshrl.u32 %v357, 7
      %v359 = vsub.s32 0, %v358
      %v360 = vrot.slane %v355, %v359
      %v361 = vlaneseq
      %v362 = vshrl.u32 %v361, 7
      %v363 = vsub.s32 0, %v362
      %v364 = vrot.slane %v356, %v363
      %365 = vrot.lane.b32.xlu0 %v360, 9
      %v366 = vpop.permute.xlu0 %365
      %367 = vrot.lane.b32.xlu0 %v364, 9
      %v368 = vpop.permute.xlu0 %367
      %371 = vst.msk [vmem:[#allocation4 + $0x4] sm:$0x1] %vm318, %v366
      %372 = vst.msk [vmem:[#allocation4 + $0x1c] sm:$0x1] %vm318, %v368
      %v373 = vld [vmem:[#allocation2] sm:$0x3]
      %v376 = vunpack.c.l.s4 1966171168
      %v377 = vunpack.c.0.s8 %v376
      %v378 = vlaneseq
      %v379 = vshrl.u32 %v378, 7
      %v380 = vsub.s32 %v377, %v379
      %v381 = vrot.slane %v373, %v380
      %v382 = vcombine.high %v381, %v381
      %v383 = vlaneseq
      %v384 = vshrl.u32 %v383, 7
      %v385 = vsub.s32 0, %v384
      %v386 = vrot.slane %v381, %v385
      %v387 = vlaneseq
      %v388 = vshrl.u32 %v387, 7
      %v389 = vsub.s32 0, %v388
      %v390 = vrot.slane %v382, %v389
      %391 = vrot.lane.b32.xlu0 %v386, 99
      %v392 = vpop.permute.xlu0 %391
      %393 = vrot.lane.b32.xlu0 %v390, 99
      %v394 = vpop.permute.xlu0 %393
      %397 = vst.msk [vmem:[#allocation4 + $0x5] sm:$0x1] %vm291, %v392
      %398 = vst.msk [vmem:[#allocation4 + $0x1d] sm:$0x1] %vm291, %v394
      %v399 = vld [vmem:[#allocation3] sm:$0x3]
      %v402 = vunpack.c.l.s4 1966171168
      %v403 = vunpack.c.0.s8 %v402
      %v404 = vlaneseq
      %v405 = vshrl.u32 %v404, 7
      %v406 = vsub.s32 %v403, %v405
      %v407 = vrot.slane %v399, %v406
      %v408 = vcombine.high %v407, %v407
      %v409 = vlaneseq
      %v410 = vshrl.u32 %v409, 7
      %v411 = vsub.s32 0, %v410
      %v412 = vrot.slane %v407, %v411
      %v413 = vlaneseq
      %v414 = vshrl.u32 %v413, 7
      %v415 = vsub.s32 0, %v414
      %v416 = vrot.slane %v408, %v415
      %417 = vrot.lane.b32.xlu0 %v412, 121
      %v418 = vpop.permute.xlu0 %417
      %419 = vrot.lane.b32.xlu0 %v416, 121
      %v420 = vpop.permute.xlu0 %419
      %423 = vst.msk [vmem:[#allocation4 + $0x5] sm:$0x1] %vm318, %v418
      %424 = vst.msk [vmem:[#allocation4 + $0x1d] sm:$0x1] %vm318, %v420
      %v425 = vld [vmem:[#allocation2] sm:$0x3]
      %v428 = vunpack.c.l.s4 1966171168
      %v429 = vunpack.c.0.s8 %v428
      %v430 = vlaneseq
      %v431 = vshrl.u32 %v430, 7
      %v432 = vsub.s32 %v429, %v431
      %v433 = vrot.slane %v425, %v432
      %v434 = vcombine.high %v433, %v433
      %v435 = vlaneseq
      %v436 = vshrl.u32 %v435, 7
      %v437 = vsub.s32 0, %v436
      %v438 = vrot.slane %v433, %v437
      %v439 = vlaneseq
      %v440 = vshrl.u32 %v439, 7
      %v441 = vsub.s32 0, %v440
      %v442 = vrot.slane %v434, %v441
      %443 = vrot.lane.b32.xlu0 %v438, 83
      %v444 = vpop.permute.xlu0 %443
      %445 = vrot.lane.b32.xlu0 %v442, 83
      %v446 = vpop.permute.xlu0 %445
      %449 = vst.msk [vmem:[#allocation4 + $0x6] sm:$0x1] %vm291, %v444
      %450 = vst.msk [vmem:[#allocation4 + $0x1e] sm:$0x1] %vm291, %v446
      %v451 = vld [vmem:[#allocation3] sm:$0x3]
      %v454 = vunpack.c.l.s4 1966171168
      %v455 = vunpack.c.0.s8 %v454
      %v456 = vlaneseq
      %v457 = vshrl.u32 %v456, 7
      %v458 = vsub.s32 %v455, %v457
      %v459 = vrot.slane %v451, %v458
      %v460 = vcombine.high %v459, %v459
      %v461 = vlaneseq
      %v462 = vshrl.u32 %v461, 7
      %v463 = vsub.s32 0, %v462
      %v464 = vrot.slane %v459, %v463
      %v465 = vlaneseq
      %v466 = vshrl.u32 %v465, 7
      %v467 = vsub.s32 0, %v466
      %v468 = vrot.slane %v460, %v467
      %469 = vrot.lane.b32.xlu0 %v464, 105
      %v470 = vpop.permute.xlu0 %469
      %471 = vrot.lane.b32.xlu0 %v468, 105
      %v472 = vpop.permute.xlu0 %471
      %475 = vst.msk [vmem:[#allocation4 + $0x6] sm:$0x1] %vm318, %v470
      %476 = vst.msk [vmem:[#allocation4 + $0x1e] sm:$0x1] %vm318, %v472
      %v477 = vld [vmem:[#allocation2] sm:$0x3]
      %v480 = vunpack.c.l.s4 1966171168
      %v481 = vunpack.c.0.s8 %v480
      %v482 = vlaneseq
      %v483 = vshrl.u32 %v482, 7
      %v484 = vsub.s32 %v481, %v483
      %v485 = vrot.slane %v477, %v484
      %v486 = vcombine.high %v485, %v485
      %v487 = vlaneseq
      %v488 = vshrl.u32 %v487, 7
      %v489 = vsub.s32 0, %v488
      %v490 = vrot.slane %v485, %v489
      %v491 = vlaneseq
      %v492 = vshrl.u32 %v491, 7
      %v493 = vsub.s32 0, %v492
      %v494 = vrot.slane %v486, %v493
      %495 = vrot.lane.b32.xlu0 %v490, 67
      %v496 = vpop.permute.xlu0 %495
      %497 = vrot.lane.b32.xlu0 %v494, 67
      %v498 = vpop.permute.xlu0 %497
      %501 = vst.msk [vmem:[#allocation4 + $0x7] sm:$0x1] %vm291, %v496
      %502 = vst.msk [vmem:[#allocation4 + $0x1f] sm:$0x1] %vm291, %v498
      %v503 = vld [vmem:[#allocation3] sm:$0x3]
      %v506 = vunpack.c.l.s4 1966171168
      %v507 = vunpack.c.0.s8 %v506
      %v508 = vlaneseq
      %v509 = vshrl.u32 %v508, 7
      %v510 = vsub.s32 %v507, %v509
      %v511 = vrot.slane %v503, %v510
      %v512 = vcombine.high %v511, %v511
      %v513 = vlaneseq
      %v514 = vshrl.u32 %v513, 7
      %v515 = vsub.s32 0, %v514
      %v516 = vrot.slane %v511, %v515
      %v517 = vlaneseq
      %v518 = vshrl.u32 %v517, 7
      %v519 = vsub.s32 0, %v518
      %v520 = vrot.slane %v512, %v519
      %521 = vrot.lane.b32.xlu0 %v516, 89
      %v522 = vpop.permute.xlu0 %521
      %523 = vrot.lane.b32.xlu0 %v520, 89
      %v524 = vpop.permute.xlu0 %523
      %527 = vst.msk [vmem:[#allocation4 + $0x7] sm:$0x1] %vm318, %v522
      %528 = vst.msk [vmem:[#allocation4 + $0x1f] sm:$0x1] %vm318, %v524
      %v529 = vld [vmem:[#allocation2] sm:$0x3]
      %v532 = vunpack.c.l.s4 1966171168
      %v533 = vunpack.c.0.s8 %v532
      %v534 = vlaneseq
      %v535 = vshrl.u32 %v534, 7
      %v536 = vsub.s32 %v533, %v535
      %v537 = vrot.slane %v529, %v536
      %v538 = vcombine.high %v537, %v537
      %v539 = vlaneseq
      %v540 = vshrl.u32 %v539, 7
      %v541 = vsub.s32 0, %v540
      %v542 = vrot.slane %v537, %v541
      %v543 = vlaneseq
      %v544 = vshrl.u32 %v543, 7
      %v545 = vsub.s32 0, %v544
      %v546 = vrot.slane %v538, %v545
      %547 = vrot.lane.b32.xlu0 %v542, 51
      %v548 = vpop.permute.xlu0 %547
      %549 = vrot.lane.b32.xlu0 %v546, 51
      %v550 = vpop.permute.xlu0 %549
      %553 = vst.msk [vmem:[#allocation4 + $0x8] sm:$0x1] %vm291, %v548
      %554 = vst.msk [vmem:[#allocation4 + $0x20] sm:$0x1] %vm291, %v550
      %v555 = vld [vmem:[#allocation3] sm:$0x3]
      %v558 = vunpack.c.l.s4 1966171168
      %v559 = vunpack.c.0.s8 %v558
      %v560 = vlaneseq
      %v561 = vshrl.u32 %v560, 7
      %v562 = vsub.s32 %v559, %v561
      %v563 = vrot.slane %v555, %v562
      %v564 = vcombine.high %v563, %v563
      %v565 = vlaneseq
      %v566 = vshrl.u32 %v565, 7
      %v567 = vsub.s32 0, %v566
      %v568 = vrot.slane %v563, %v567
      %v569 = vlaneseq
      %v570 = vshrl.u32 %v569, 7
      %v571 = vsub.s32 0, %v570
      %v572 = vrot.slane %v564, %v571
      %573 = vrot.lane.b32.xlu0 %v568, 73
      %v574 = vpop.permute.xlu0 %573
      %575 = vrot.lane.b32.xlu0 %v572, 73
      %v576 = vpop.permute.xlu0 %575
      %579 = vst.msk [vmem:[#allocation4 + $0x8] sm:$0x1] %vm318, %v574
      %580 = vst.msk [vmem:[#allocation4 + $0x20] sm:$0x1] %vm318, %v576
      %v581 = vld [vmem:[#allocation2] sm:$0x3]
      %v584 = vunpack.c.l.s4 1966171168
      %v585 = vunpack.c.0.s8 %v584
      %v586 = vlaneseq
      %v587 = vshrl.u32 %v586, 7
      %v588 = vsub.s32 %v585, %v587
      %v589 = vrot.slane %v581, %v588
      %v590 = vcombine.high %v589, %v589
      %v591 = vlaneseq
      %v592 = vshrl.u32 %v591, 7
      %v593 = vsub.s32 0, %v592
      %v594 = vrot.slane %v589, %v593
      %v595 = vlaneseq
      %v596 = vshrl.u32 %v595, 7
      %v597 = vsub.s32 0, %v596
      %v598 = vrot.slane %v590, %v597
      %599 = vrot.lane.b32.xlu0 %v594, 35
      %v600 = vpop.permute.xlu0 %599
      %601 = vrot.lane.b32.xlu0 %v598, 35
      %v602 = vpop.permute.xlu0 %601
      %605 = vst.msk [vmem:[#allocation4 + $0x9] sm:$0x1] %vm291, %v600
      %606 = vst.msk [vmem:[#allocation4 + $0x21] sm:$0x1] %vm291, %v602
      %v607 = vld [vmem:[#allocation3] sm:$0x3]
      %v610 = vunpack.c.l.s4 1966171168
      %v611 = vunpack.c.0.s8 %v610
      %v612 = vlaneseq
      %v613 = vshrl.u32 %v612, 7
      %v614 = vsub.s32 %v611, %v613
      %v615 = vrot.slane %v607, %v614
      %v616 = vcombine.high %v615, %v615
      %v617 = vlaneseq
      %v618 = vshrl.u32 %v617, 7
      %v619 = vsub.s32 0, %v618
      %v620 = vrot.slane %v615, %v619
      %v621 = vlaneseq
      %v622 = vshrl.u32 %v621, 7
      %v623 = vsub.s32 0, %v622
      %v624 = vrot.slane %v616, %v623
      %625 = vrot.lane.b32.xlu0 %v620, 57
      %v626 = vpop.permute.xlu0 %625
      %627 = vrot.lane.b32.xlu0 %v624, 57
      %v628 = vpop.permute.xlu0 %627
      %631 = vst.msk [vmem:[#allocation4 + $0x9] sm:$0x1] %vm318, %v626
      %632 = vst.msk [vmem:[#allocation4 + $0x21] sm:$0x1] %vm318, %v628
      %v633 = vld [vmem:[#allocation2] sm:$0x3]
      %v636 = vunpack.c.l.s4 1966171168
      %v637 = vunpack.c.0.s8 %v636
      %v638 = vlaneseq
      %v639 = vshrl.u32 %v638, 7
      %v640 = vsub.s32 %v637, %v639
      %v641 = vrot.slane %v633, %v640
      %v642 = vcombine.high %v641, %v641
      %v643 = vlaneseq
      %v644 = vshrl.u32 %v643, 7
      %v645 = vsub.s32 0, %v644
      %v646 = vrot.slane %v641, %v645
      %v647 = vlaneseq
      %v648 = vshrl.u32 %v647, 7
      %v649 = vsub.s32 0, %v648
      %v650 = vrot.slane %v642, %v649
      %651 = vrot.lane.b32.xlu0 %v646, 19
      %v652 = vpop.permute.xlu0 %651
      %653 = vrot.lane.b32.xlu0 %v650, 19
      %v654 = vpop.permute.xlu0 %653
      %657 = vst.msk [vmem:[#allocation4 + $0xa] sm:$0x1] %vm291, %v652
      %658 = vst.msk [vmem:[#allocation4 + $0x22] sm:$0x1] %vm291, %v654
      %v659 = vld [vmem:[#allocation3] sm:$0x3]
      %v662 = vunpack.c.l.s4 1966171168
      %v663 = vunpack.c.0.s8 %v662
      %v664 = vlaneseq
      %v665 = vshrl.u32 %v664, 7
      %v666 = vsub.s32 %v663, %v665
      %v667 = vrot.slane %v659, %v666
      %v668 = vcombine.high %v667, %v667
      %v669 = vlaneseq
      %v670 = vshrl.u32 %v669, 7
      %v671 = vsub.s32 0, %v670
      %v672 = vrot.slane %v667, %v671
      %v673 = vlaneseq
      %v674 = vshrl.u32 %v673, 7
      %v675 = vsub.s32 0, %v674
      %v676 = vrot.slane %v668, %v675
      %677 = vrot.lane.b32.xlu0 %v672, 41
      %v678 = vpop.permute.xlu0 %677
      %679 = vrot.lane.b32.xlu0 %v676, 41
      %v680 = vpop.permute.xlu0 %679
      %683 = vst.msk [vmem:[#allocation4 + $0xa] sm:$0x1] %vm318, %v678
      %684 = vst.msk [vmem:[#allocation4 + $0x22] sm:$0x1] %vm318, %v680
      %v685 = vld [vmem:[#allocation2 + $0x2] sm:$0x3]
      %v688 = vunpack.c.l.s4 1966171168
      %v689 = vunpack.c.0.s8 %v688
      %v690 = vlaneseq
      %v691 = vshrl.u32 %v690, 7
      %v692 = vsub.s32 %v689, %v691
      %v693 = vrot.slane %v685, %v692
      %v694 = vcombine.high %v693, %v693
      %v695 = vlaneseq
      %v696 = vshrl.u32 %v695, 7
      %v697 = vsub.s32 0, %v696
      %v698 = vrot.slane %v693, %v697
      %v699 = vlaneseq
      %v700 = vshrl.u32 %v699, 7
      %v701 = vsub.s32 0, %v700
      %v702 = vrot.slane %v694, %v701
      %703 = vrot.lane.b32.xlu0 %v698, 3
      %v704 = vpop.permute.xlu0 %703
      %705 = vrot.lane.b32.xlu0 %v702, 3
      %v706 = vpop.permute.xlu0 %705
      %709 = vst.msk [vmem:[#allocation4 + $0xb] sm:$0x1] %vm291, %v704
      %710 = vst.msk [vmem:[#allocation4 + $0x23] sm:$0x1] %vm291, %v706
      %v711 = vld [vmem:[#allocation3 + $0x2] sm:$0x3]
      %v714 = vunpack.c.l.s4 1966171168
      %v715 = vunpack.c.0.s8 %v714
      %v716 = vlaneseq
      %v717 = vshrl.u32 %v716, 7
      %v718 = vsub.s32 %v715, %v717
      %v719 = vrot.slane %v711, %v718
      %v720 = vcombine.high %v719, %v719
      %v721 = vlaneseq
      %v722 = vshrl.u32 %v721, 7
      %v723 = vsub.s32 0, %v722
      %v724 = vrot.slane %v719, %v723
      %v725 = vlaneseq
      %v726 = vshrl.u32 %v725, 7
      %v727 = vsub.s32 0, %v726
      %v728 = vrot.slane %v720, %v727
      %729 = vrot.lane.b32.xlu0 %v724, 25
      %v730 = vpop.permute.xlu0 %729
      %731 = vrot.lane.b32.xlu0 %v728, 25
      %v732 = vpop.permute.xlu0 %731
      %735 = vst.msk [vmem:[#allocation4 + $0xb] sm:$0x1] %vm318, %v730
      %736 = vst.msk [vmem:[#allocation4 + $0x23] sm:$0x1] %vm318, %v732
      %v737 = vld [vmem:[#allocation2 + $0x2] sm:$0x3]
      %v740 = vunpack.c.l.s4 1966171168
      %v741 = vunpack.c.0.s8 %v740
      %v742 = vlaneseq
      %v743 = vshrl.u32 %v742, 7
      %v744 = vsub.s32 %v741, %v743
      %v745 = vrot.slane %v737, %v744
      %v746 = vcombine.high %v745, %v745
      %v747 = vlaneseq
      %v748 = vshrl.u32 %v747, 7
      %v749 = vsub.s32 0, %v748
      %v750 = vrot.slane %v745, %v749
      %v751 = vlaneseq
      %v752 = vshrl.u32 %v751, 7
      %v753 = vsub.s32 0, %v752
      %v754 = vrot.slane %v746, %v753
      %755 = vrot.lane.b32.xlu0 %v750, 115
      %v756 = vpop.permute.xlu0 %755
      %757 = vrot.lane.b32.xlu0 %v754, 115
      %v758 = vpop.permute.xlu0 %757
      %761 = vst.msk [vmem:[#allocation4 + $0xc] sm:$0x1] %vm291, %v756
      %762 = vst.msk [vmem:[#allocation4 + $0x24] sm:$0x1] %vm291, %v758
      %v763 = vld [vmem:[#allocation3 + $0x2] sm:$0x3]
      %v766 = vunpack.c.l.s4 1966171168
      %v767 = vunpack.c.0.s8 %v766
      %v768 = vlaneseq
      %v769 = vshrl.u32 %v768, 7
      %v770 = vsub.s32 %v767, %v769
      %v771 = vrot.slane %v763, %v770
      %v772 = vcombine.high %v771, %v771
      %v773 = vlaneseq
      %v774 = vshrl.u32 %v773, 7
      %v775 = vsub.s32 0, %v774
      %v776 = vrot.slane %v771, %v775
      %v777 = vlaneseq
      %v778 = vshrl.u32 %v777, 7
      %v779 = vsub.s32 0, %v778
      %v780 = vrot.slane %v772, %v779
      %781 = vrot.lane.b32.xlu0 %v776, 9
      %v782 = vpop.permute.xlu0 %781
      %783 = vrot.lane.b32.xlu0 %v780, 9
      %v784 = vpop.permute.xlu0 %783
      %787 = vst.msk [vmem:[#allocation4 + $0xc] sm:$0x1] %vm318, %v782
      %788 = vst.msk [vmem:[#allocation4 + $0x24] sm:$0x1] %vm318, %v784
      %v789 = vld [vmem:[#allocation2 + $0x2] sm:$0x3]
      %v792 = vunpack.c.l.s4 1966171168
      %v793 = vunpack.c.0.s8 %v792
      %v794 = vlaneseq
      %v795 = vshrl.u32 %v794, 7
      %v796 = vsub.s32 %v793, %v795
      %v797 = vrot.slane %v789, %v796
      %v798 = vcombine.high %v797, %v797
      %v799 = vlaneseq
      %v800 = vshrl.u32 %v799, 7
      %v801 = vsub.s32 0, %v800
      %v802 = vrot.slane %v797, %v801
      %v803 = vlaneseq
      %v804 = vshrl.u32 %v803, 7
      %v805 = vsub.s32 0, %v804
      %v806 = vrot.slane %v798, %v805
      %807 = vrot.lane.b32.xlu0 %v802, 99
      %v808 = vpop.permute.xlu0 %807
      %809 = vrot.lane.b32.xlu0 %v806, 99
      %v810 = vpop.permute.xlu0 %809
      %813 = vst.msk [vmem:[#allocation4 + $0xd] sm:$0x1] %vm291, %v808
      %814 = vst.msk [vmem:[#allocation4 + $0x25] sm:$0x1] %vm291, %v810
      %v815 = vld [vmem:[#allocation3 + $0x2] sm:$0x3]
      %v818 = vunpack.c.l.s4 1966171168
      %v819 = vunpack.c.0.s8 %v818
      %v820 = vlaneseq
      %v821 = vshrl.u32 %v820, 7
      %v822 = vsub.s32 %v819, %v821
      %v823 = vrot.slane %v815, %v822
      %v824 = vcombine.high %v823, %v823
      %v825 = vlaneseq
      %v826 = vshrl.u32 %v825, 7
      %v827 = vsub.s32 0, %v826
      %v828 = vrot.slane %v823, %v827
      %v829 = vlaneseq
      %v830 = vshrl.u32 %v829, 7
      %v831 = vsub.s32 0, %v830
      %v832 = vrot.slane %v824, %v831
      %833 = vrot.lane.b32.xlu0 %v828, 121
      %v834 = vpop.permute.xlu0 %833
      %835 = vrot.lane.b32.xlu0 %v832, 121
      %v836 = vpop.permute.xlu0 %835
      %839 = vst.msk [vmem:[#allocation4 + $0xd] sm:$0x1] %vm318, %v834
      %840 = vst.msk [vmem:[#allocation4 + $0x25] sm:$0x1] %vm318, %v836
      %v841 = vld [vmem:[#allocation2 + $0x2] sm:$0x3]
      %v844 = vunpack.c.l.s4 1966171168
      %v845 = vunpack.c.0.s8 %v844
      %v846 = vlaneseq
      %v847 = vshrl.u32 %v846, 7
      %v848 = vsub.s32 %v845, %v847
      %v849 = vrot.slane %v841, %v848
      %v850 = vcombine.high %v849, %v849
      %v851 = vlaneseq
      %v852 = vshrl.u32 %v851, 7
      %v853 = vsub.s32 0, %v852
      %v854 = vrot.slane %v849, %v853
      %v855 = vlaneseq
      %v856 = vshrl.u32 %v855, 7
      %v857 = vsub.s32 0, %v856
      %v858 = vrot.slane %v850, %v857
      %859 = vrot.lane.b32.xlu0 %v854, 83
      %v860 = vpop.permute.xlu0 %859
      %861 = vrot.lane.b32.xlu0 %v858, 83
      %v862 = vpop.permute.xlu0 %861
      %865 = vst.msk [vmem:[#allocation4 + $0xe] sm:$0x1] %vm291, %v860
      %866 = vst.msk [vmem:[#allocation4 + $0x26] sm:$0x1] %vm291, %v862
      %v867 = vld [vmem:[#allocation3 + $0x2] sm:$0x3]
      %v870 = vunpack.c.l.s4 1966171168
      %v871 = vunpack.c.0.s8 %v870
      %v872 = vlaneseq
      %v873 = vshrl.u32 %v872, 7
      %v874 = vsub.s32 %v871, %v873
      %v875 = vrot.slane %v867, %v874
      %v876 = vcombine.high %v875, %v875
      %v877 = vlaneseq
      %v878 = vshrl.u32 %v877, 7
      %v879 = vsub.s32 0, %v878
      %v880 = vrot.slane %v875, %v879
      %v881 = vlaneseq
      %v882 = vshrl.u32 %v881, 7
      %v883 = vsub.s32 0, %v882
      %v884 = vrot.slane %v876, %v883
      %885 = vrot.lane.b32.xlu0 %v880, 105
      %v886 = vpop.permute.xlu0 %885
      %887 = vrot.lane.b32.xlu0 %v884, 105
      %v888 = vpop.permute.xlu0 %887
      %891 = vst.msk [vmem:[#allocation4 + $0xe] sm:$0x1] %vm318, %v886
      %892 = vst.msk [vmem:[#allocation4 + $0x26] sm:$0x1] %vm318, %v888
      %v893 = vld [vmem:[#allocation2 + $0x2] sm:$0x3]
      %v896 = vunpack.c.l.s4 1966171168
      %v897 = vunpack.c.0.s8 %v896
      %v898 = vlaneseq
      %v899 = vshrl.u32 %v898, 7
      %v900 = vsub.s32 %v897, %v899
      %v901 = vrot.slane %v893, %v900
      %v902 = vcombine.high %v901, %v901
      %v903 = vlaneseq
      %v904 = vshrl.u32 %v903, 7
      %v905 = vsub.s32 0, %v904
      %v906 = vrot.slane %v901, %v905
      %v907 = vlaneseq
      %v908 = vshrl.u32 %v907, 7
      %v909 = vsub.s32 0, %v908
      %v910 = vrot.slane %v902, %v909
      %911 = vrot.lane.b32.xlu0 %v906, 67
      %v912 = vpop.permute.xlu0 %911
      %913 = vrot.lane.b32.xlu0 %v910, 67
      %v914 = vpop.permute.xlu0 %913
      %917 = vst.msk [vmem:[#allocation4 + $0xf] sm:$0x1] %vm291, %v912
      %918 = vst.msk [vmem:[#allocation4 + $0x27] sm:$0x1] %vm291, %v914
      %v919 = vld [vmem:[#allocation3 + $0x2] sm:$0x3]
      %v922 = vunpack.c.l.s4 1966171168
      %v923 = vunpack.c.0.s8 %v922
      %v924 = vlaneseq
      %v925 = vshrl.u32 %v924, 7
      %v926 = vsub.s32 %v923, %v925
      %v927 = vrot.slane %v919, %v926
      %v928 = vcombine.high %v927, %v927
      %v929 = vlaneseq
      %v930 = vshrl.u32 %v929, 7
      %v931 = vsub.s32 0, %v930
      %v932 = vrot.slane %v927, %v931
      %v933 = vlaneseq
      %v934 = vshrl.u32 %v933, 7
      %v935 = vsub.s32 0, %v934
      %v936 = vrot.slane %v928, %v935
      %937 = vrot.lane.b32.xlu0 %v932, 89
      %v938 = vpop.permute.xlu0 %937
      %939 = vrot.lane.b32.xlu0 %v936, 89
      %v940 = vpop.permute.xlu0 %939
      %943 = vst.msk [vmem:[#allocation4 + $0xf] sm:$0x1] %vm318, %v938
      %944 = vst.msk [vmem:[#allocation4 + $0x27] sm:$0x1] %vm318, %v940
      %v945 = vld [vmem:[#allocation2 + $0x2] sm:$0x3]
      %v948 = vunpack.c.l.s4 1966171168
      %v949 = vunpack.c.0.s8 %v948
      %v950 = vlaneseq
      %v951 = vshrl.u32 %v950, 7
      %v952 = vsub.s32 %v949, %v951
      %v953 = vrot.slane %v945, %v952
      %v954 = vcombine.high %v953, %v953
      %v955 = vlaneseq
      %v956 = vshrl.u32 %v955, 7
      %v957 = vsub.s32 0, %v956
      %v958 = vrot.slane %v953, %v957
      %v959 = vlaneseq
      %v960 = vshrl.u32 %v959, 7
      %v961 = vsub.s32 0, %v960
      %v962 = vrot.slane %v954, %v961
      %963 = vrot.lane.b32.xlu0 %v958, 51
      %v964 = vpop.permute.xlu0 %963
      %965 = vrot.lane.b32.xlu0 %v962, 51
      %v966 = vpop.permute.xlu0 %965
      %969 = vst.msk [vmem:[#allocation4 + $0x10] sm:$0x1] %vm291, %v964
      %970 = vst.msk [vmem:[#allocation4 + $0x28] sm:$0x1] %vm291, %v966
      %v971 = vld [vmem:[#allocation3 + $0x2] sm:$0x3]
      %v974 = vunpack.c.l.s4 1966171168
      %v975 = vunpack.c.0.s8 %v974
      %v976 = vlaneseq
      %v977 = vshrl.u32 %v976, 7
      %v978 = vsub.s32 %v975, %v977
      %v979 = vrot.slane %v971, %v978
      %v980 = vcombine.high %v979, %v979
      %v981 = vlaneseq
      %v982 = vshrl.u32 %v981, 7
      %v983 = vsub.s32 0, %v982
      %v984 = vrot.slane %v979, %v983
      %v985 = vlaneseq
      %v986 = vshrl.u32 %v985, 7
      %v987 = vsub.s32 0, %v986
      %v988 = vrot.slane %v980, %v987
      %989 = vrot.lane.b32.xlu0 %v984, 73
      %v990 = vpop.permute.xlu0 %989
      %991 = vrot.lane.b32.xlu0 %v988, 73
      %v992 = vpop.permute.xlu0 %991
      %995 = vst.msk [vmem:[#allocation4 + $0x10] sm:$0x1] %vm318, %v990
      %996 = vst.msk [vmem:[#allocation4 + $0x28] sm:$0x1] %vm318, %v992
      %v997 = vld [vmem:[#allocation2 + $0x2] sm:$0x3]
      %v1000 = vunpack.c.l.s4 1966171168
      %v1001 = vunpack.c.0.s8 %v1000
      %v1002 = vlaneseq
      %v1003 = vshrl.u32 %v1002, 7
      %v1004 = vsub.s32 %v1001, %v1003
      %v1005 = vrot.slane %v997, %v1004
      %v1006 = vcombine.high %v1005, %v1005
      %v1007 = vlaneseq
      %v1008 = vshrl.u32 %v1007, 7
      %v1009 = vsub.s32 0, %v1008
      %v1010 = vrot.slane %v1005, %v1009
      %v1011 = vlaneseq
      %v1012 = vshrl.u32 %v1011, 7
      %v1013 = vsub.s32 0, %v1012
      %v1014 = vrot.slane %v1006, %v1013
      %1015 = vrot.lane.b32.xlu0 %v1010, 35
      %v1016 = vpop.permute.xlu0 %1015
      %1017 = vrot.lane.b32.xlu0 %v1014, 35
      %v1018 = vpop.permute.xlu0 %1017
      %1021 = vst.msk [vmem:[#allocation4 + $0x11] sm:$0x1] %vm291, %v1016
      %1022 = vst.msk [vmem:[#allocation4 + $0x29] sm:$0x1] %vm291, %v1018
      %v1023 = vld [vmem:[#allocation3 + $0x2] sm:$0x3]
      %v1026 = vunpack.c.l.s4 1966171168
      %v1027 = vunpack.c.0.s8 %v1026
      %v1028 = vlaneseq
      %v1029 = vshrl.u32 %v1028, 7
      %v1030 = vsub.s32 %v1027, %v1029
      %v1031 = vrot.slane %v1023, %v1030
      %v1032 = vcombine.high %v1031, %v1031
      %v1033 = vlaneseq
      %v1034 = vshrl.u32 %v1033, 7
      %v1035 = vsub.s32 0, %v1034
      %v1036 = vrot.slane %v1031, %v1035
      %v1037 = vlaneseq
      %v1038 = vshrl.u32 %v1037, 7
      %v1039 = vsub.s32 0, %v1038
      %v1040 = vrot.slane %v1032, %v1039
      %1041 = vrot.lane.b32.xlu0 %v1036, 57
      %v1042 = vpop.permute.xlu0 %1041
      %1043 = vrot.lane.b32.xlu0 %v1040, 57
      %v1044 = vpop.permute.xlu0 %1043
      %1047 = vst.msk [vmem:[#allocation4 + $0x11] sm:$0x1] %vm318, %v1042
      %1048 = vst.msk [vmem:[#allocation4 + $0x29] sm:$0x1] %vm318, %v1044
      %v1049 = vld [vmem:[#allocation2 + $0x2] sm:$0x3]
      %v1052 = vunpack.c.l.s4 1966171168
      %v1053 = vunpack.c.0.s8 %v1052
      %v1054 = vlaneseq
      %v1055 = vshrl.u32 %v1054, 7
      %v1056 = vsub.s32 %v1053, %v1055
      %v1057 = vrot.slane %v1049, %v1056
      %v1058 = vcombine.high %v1057, %v1057
      %v1059 = vlaneseq
      %v1060 = vshrl.u32 %v1059, 7
      %v1061 = vsub.s32 0, %v1060
      %v1062 = vrot.slane %v1057, %v1061
      %v1063 = vlaneseq
      %v1064 = vshrl.u32 %v1063, 7
      %v1065 = vsub.s32 0, %v1064
      %v1066 = vrot.slane %v1058, %v1065
      %1067 = vrot.lane.b32.xlu0 %v1062, 19
      %v1068 = vpop.permute.xlu0 %1067
      %1069 = vrot.lane.b32.xlu0 %v1066, 19
      %v1070 = vpop.permute.xlu0 %1069
      %1073 = vst.msk [vmem:[#allocation4 + $0x12] sm:$0x1] %vm291, %v1068
      %1074 = vst.msk [vmem:[#allocation4 + $0x2a] sm:$0x1] %vm291, %v1070
      %v1075 = vld [vmem:[#allocation3 + $0x2] sm:$0x3]
      %v1078 = vunpack.c.l.s4 1966171168
      %v1079 = vunpack.c.0.s8 %v1078
      %v1080 = vlaneseq
      %v1081 = vshrl.u32 %v1080, 7
      %v1082 = vsub.s32 %v1079, %v1081
      %v1083 = vrot.slane %v1075, %v1082
      %v1084 = vcombine.high %v1083, %v1083
      %v1085 = vlaneseq
      %v1086 = vshrl.u32 %v1085, 7
      %v1087 = vsub.s32 0, %v1086
      %v1088 = vrot.slane %v1083, %v1087
      %v1089 = vlaneseq
      %v1090 = vshrl.u32 %v1089, 7
      %v1091 = vsub.s32 0, %v1090
      %v1092 = vrot.slane %v1084, %v1091
      %1093 = vrot.lane.b32.xlu0 %v1088, 41
      %v1094 = vpop.permute.xlu0 %1093
      %1095 = vrot.lane.b32.xlu0 %v1092, 41
      %v1096 = vpop.permute.xlu0 %1095
      %1099 = vst.msk [vmem:[#allocation4 + $0x12] sm:$0x1] %vm318, %v1094
      %1100 = vst.msk [vmem:[#allocation4 + $0x2a] sm:$0x1] %vm318, %v1096
      %v1101 = vld [vmem:[#allocation4] sm:$0xff]
      %v1102 = vld [vmem:[#allocation4 + $0x8] sm:$0xff]
      %v1103 = vld [vmem:[#allocation4 + $0x18] sm:$0xff]
      %v1104 = vld [vmem:[#allocation4 + $0x20] sm:$0xff]
      %s1105 = sld [smem:[#allocation9]]
      %s1106 = sld [smem:[#allocation9 + $0x31]]
      %v1107 = vstv %s1105
      %v1108 = vmul.f32 %v1107, %v1101
      %v1109 = vmul.f32 %v1107, %v1102
      %v1110 = vmul.f32 %v1107, %v1103
      %v1111 = vmul.f32 %v1107, %v1104
      %v1112 = vstv %s1106
      %v1113 = vmul.f32 %v1112, %v1101
      %v1114 = vmul.f32 %v1112, %v1102
      %v1115 = vmul.f32 %v1112, %v1103
      %v1116 = vmul.f32 %v1112, %v1104
      %1121 = vrot.lane.b32.xlu0 %v1113, 106
      %v1122 = vpop.permute.xlu0 %1121
      %1123 = vrot.lane.b32.xlu0 %v1114, 106
      %v1124 = vpop.permute.xlu0 %1123
      %1125 = vrot.lane.b32.xlu0 %v1115, 106
      %v1126 = vpop.permute.xlu0 %1125
      %1127 = vrot.lane.b32.xlu0 %v1116, 106
      %v1128 = vpop.permute.xlu0 %1127
      %v1133 = vadd.f32 %v1108, %v1122
      %v1134 = vadd.f32 %v1109, %v1124
      %v1135 = vadd.f32 %v1110, %v1126
      %v1136 = vadd.f32 %v1111, %v1128
      %v1137 = vadd.f32 %v1133, 0.0
      %v1138 = vadd.f32 %v1134, 0.0
      %v1139 = vadd.f32 %v1135, 0.0
      %v1140 = vadd.f32 %v1136, 0.0
      %s1141 = sld [smem:[#allocation9 + $0x1]]
      %s1142 = sld [smem:[#allocation9 + $0x32]]
      %v1143 = vstv %s1141
      %v1144 = vmul.f32 %v1143, %v1101
      %v1145 = vmul.f32 %v1143, %v1102
      %v1146 = vmul.f32 %v1143, %v1103
      %v1147 = vmul.f32 %v1143, %v1104
      %v1148 = vstv %s1142
      %v1149 = vmul.f32 %v1148, %v1101
      %v1150 = vmul.f32 %v1148, %v1102
      %v1151 = vmul.f32 %v1148, %v1103
      %v1152 = vmul.f32 %v1148, %v1104
      %1157 = vrot.lane.b32.xlu0 %v1149, 106
      %v1158 = vpop.permute.xlu0 %1157
      %1159 = vrot.lane.b32.xlu0 %v1150, 106
      %v1160 = vpop.permute.xlu0 %1159
      %1161 = vrot.lane.b32.xlu0 %v1151, 106
      %v1162 = vpop.permute.xlu0 %1161
      %1163 = vrot.lane.b32.xlu0 %v1152, 106
      %v1164 = vpop.permute.xlu0 %1163
      %v1169 = vadd.f32 %v1144, %v1158
      %v1170 = vadd.f32 %v1145, %v1160
      %v1171 = vadd.f32 %v1146, %v1162
      %v1172 = vadd.f32 %v1147, %v1164
      %1177 = vrot.lane.b32.xlu0 %v1169, 127
      %v1178 = vpop.permute.xlu0 %1177
      %1179 = vrot.lane.b32.xlu0 %v1170, 127
      %v1180 = vpop.permute.xlu0 %1179
      %1181 = vrot.lane.b32.xlu0 %v1171, 127
      %v1182 = vpop.permute.xlu0 %1181
      %1183 = vrot.lane.b32.xlu0 %v1172, 127
      %v1184 = vpop.permute.xlu0 %1183
      %v1189 = vadd.f32 %v1137, %v1178
      %v1190 = vadd.f32 %v1138, %v1180
      %v1191 = vadd.f32 %v1139, %v1182
      %v1192 = vadd.f32 %v1140, %v1184
      %s1193 = sld [smem:[#allocation9 + $0x2]]
      %s1194 = sld [smem:[#allocation9 + $0x33]]
      %v1195 = vstv %s1193
      %v1196 = vmul.f32 %v1195, %v1101
      %v1197 = vmul.f32 %v1195, %v1102
      %v1198 = vmul.f32 %v1195, %v1103
      %v1199 = vmul.f32 %v1195, %v1104
      %v1200 = vstv %s1194
      %v1201 = vmul.f32 %v1200, %v1101
      %v1202 = vmul.f32 %v1200, %v1102
      %v1203 = vmul.f32 %v1200, %v1103
      %v1204 = vmul.f32 %v1200, %v1104
      %1209 = vrot.lane.b32.xlu0 %v1201, 106
      %v1210 = vpop.permute.xlu0 %1209
      %1211 = vrot.lane.b32.xlu0 %v1202, 106
      %v1212 = vpop.permute.xlu0 %1211
      %1213 = vrot.lane.b32.xlu0 %v1203, 106
      %v1214 = vpop.permute.xlu0 %1213
      %1215 = vrot.lane.b32.xlu0 %v1204, 106
      %v1216 = vpop.permute.xlu0 %1215
      %v1221 = vadd.f32 %v1196, %v1210
      %v1222 = vadd.f32 %v1197, %v1212
      %v1223 = vadd.f32 %v1198, %v1214
      %v1224 = vadd.f32 %v1199, %v1216
      %1229 = vrot.lane.b32.xlu0 %v1221, 126
      %v1230 = vpop.permute.xlu0 %1229
      %1231 = vrot.lane.b32.xlu0 %v1222, 126
      %v1232 = vpop.permute.xlu0 %1231
      %1233 = vrot.lane.b32.xlu0 %v1223, 126
      %v1234 = vpop.permute.xlu0 %1233
      %1235 = vrot.lane.b32.xlu0 %v1224, 126
      %v1236 = vpop.permute.xlu0 %1235
      %v1241 = vadd.f32 %v1189, %v1230
      %v1242 = vadd.f32 %v1190, %v1232
      %v1243 = vadd.f32 %v1191, %v1234
      %v1244 = vadd.f32 %v1192, %v1236
      %s1245 = sld [smem:[#allocation9 + $0x3]]
      %s1246 = sld [smem:[#allocation9 + $0x34]]
      %v1247 = vstv %s1245
      %v1248 = vmul.f32 %v1247, %v1101
      %v1249 = vmul.f32 %v1247, %v1102
      %v1250 = vmul.f32 %v1247, %v1103
      %v1251 = vmul.f32 %v1247, %v1104
      %v1252 = vstv %s1246
      %v1253 = vmul.f32 %v1252, %v1101
      %v1254 = vmul.f32 %v1252, %v1102
      %v1255 = vmul.f32 %v1252, %v1103
      %v1256 = vmul.f32 %v1252, %v1104
      %1261 = vrot.lane.b32.xlu0 %v1253, 106
      %v1262 = vpop.permute.xlu0 %1261
      %1263 = vrot.lane.b32.xlu0 %v1254, 106
      %v1264 = vpop.permute.xlu0 %1263
      %1265 = vrot.lane.b32.xlu0 %v1255, 106
      %v1266 = vpop.permute.xlu0 %1265
      %1267 = vrot.lane.b32.xlu0 %v1256, 106
      %v1268 = vpop.permute.xlu0 %1267
      %v1273 = vadd.f32 %v1248, %v1262
      %v1274 = vadd.f32 %v1249, %v1264
      %v1275 = vadd.f32 %v1250, %v1266
      %v1276 = vadd.f32 %v1251, %v1268
      %1281 = vrot.lane.b32.xlu0 %v1273, 125
      %v1282 = vpop.permute.xlu0 %1281
      %1283 = vrot.lane.b32.xlu0 %v1274, 125
      %v1284 = vpop.permute.xlu0 %1283
      %1285 = vrot.lane.b32.xlu0 %v1275, 125
      %v1286 = vpop.permute.xlu0 %1285
      %1287 = vrot.lane.b32.xlu0 %v1276, 125
      %v1288 = vpop.permute.xlu0 %1287
      %v1293 = vadd.f32 %v1241, %v1282
      %v1294 = vadd.f32 %v1242, %v1284
      %v1295 = vadd.f32 %v1243, %v1286
      %v1296 = vadd.f32 %v1244, %v1288
      %s1297 = sld [smem:[#allocation9 + $0x4]]
      %s1298 = sld [smem:[#allocation9 + $0x35]]
      %v1299 = vstv %s1297
      %v1300 = vmul.f32 %v1299, %v1101
      %v1301 = vmul.f32 %v1299, %v1102
      %v1302 = vmul.f32 %v1299, %v1103
      %v1303 = vmul.f32 %v1299, %v1104
      %v1304 = vstv %s1298
      %v1305 = vmul.f32 %v1304, %v1101
      %v1306 = vmul.f32 %v1304, %v1102
      %v1307 = vmul.f32 %v1304, %v1103
      %v1308 = vmul.f32 %v1304, %v1104
      %1313 = vrot.lane.b32.xlu0 %v1305, 106
      %v1314 = vpop.permute.xlu0 %1313
      %1315 = vrot.lane.b32.xlu0 %v1306, 106
      %v1316 = vpop.permute.xlu0 %1315
      %1317 = vrot.lane.b32.xlu0 %v1307, 106
      %v1318 = vpop.permute.xlu0 %1317
      %1319 = vrot.lane.b32.xlu0 %v1308, 106
      %v1320 = vpop.permute.xlu0 %1319
      %v1325 = vadd.f32 %v1300, %v1314
      %v1326 = vadd.f32 %v1301, %v1316
      %v1327 = vadd.f32 %v1302, %v1318
      %v1328 = vadd.f32 %v1303, %v1320
      %1333 = vrot.lane.b32.xlu0 %v1325, 124
      %v1334 = vpop.permute.xlu0 %1333
      %1335 = vrot.lane.b32.xlu0 %v1326, 124
      %v1336 = vpop.permute.xlu0 %1335
      %1337 = vrot.lane.b32.xlu0 %v1327, 124
      %v1338 = vpop.permute.xlu0 %1337
      %1339 = vrot.lane.b32.xlu0 %v1328, 124
      %v1340 = vpop.permute.xlu0 %1339
      %v1345 = vadd.f32 %v1293, %v1334
      %v1346 = vadd.f32 %v1294, %v1336
      %v1347 = vadd.f32 %v1295, %v1338
      %v1348 = vadd.f32 %v1296, %v1340
      %s1349 = sld [smem:[#allocation9 + $0x5]]
      %s1350 = sld [smem:[#allocation9 + $0x36]]
      %v1351 = vstv %s1349
      %v1352 = vmul.f32 %v1351, %v1101
      %v1353 = vmul.f32 %v1351, %v1102
      %v1354 = vmul.f32 %v1351, %v1103
      %v1355 = vmul.f32 %v1351, %v1104
      %v1356 = vstv %s1350
      %v1357 = vmul.f32 %v1356, %v1101
      %v1358 = vmul.f32 %v1356, %v1102
      %v1359 = vmul.f32 %v1356, %v1103
      %v1360 = vmul.f32 %v1356, %v1104
      %1365 = vrot.lane.b32.xlu0 %v1357, 106
      %v1366 = vpop.permute.xlu0 %1365
      %1367 = vrot.lane.b32.xlu0 %v1358, 106
      %v1368 = vpop.permute.xlu0 %1367
      %1369 = vrot.lane.b32.xlu0 %v1359, 106
      %v1370 = vpop.permute.xlu0 %1369
      %1371 = vrot.lane.b32.xlu0 %v1360, 106
      %v1372 = vpop.permute.xlu0 %1371
      %v1377 = vadd.f32 %v1352, %v1366
      %v1378 = vadd.f32 %v1353, %v1368
      %v1379 = vadd.f32 %v1354, %v1370
      %v1380 = vadd.f32 %v1355, %v1372
      %1385 = vrot.lane.b32.xlu0 %v1377, 123
      %v1386 = vpop.permute.xlu0 %1385
      %1387 = vrot.lane.b32.xlu0 %v1378, 123
      %v1388 = vpop.permute.xlu0 %1387
      %1389 = vrot.lane.b32.xlu0 %v1379, 123
      %v1390 = vpop.permute.xlu0 %1389
      %1391 = vrot.lane.b32.xlu0 %v1380, 123
      %v1392 = vpop.permute.xlu0 %1391
      %v1397 = vadd.f32 %v1345, %v1386
      %v1398 = vadd.f32 %v1346, %v1388
      %v1399 = vadd.f32 %v1347, %v1390
      %v1400 = vadd.f32 %v1348, %v1392
      %s1401 = sld [smem:[#allocation9 + $0x6]]
      %s1402 = sld [smem:[#allocation9 + $0x37]]
      %v1403 = vstv %s1401
      %v1404 = vmul.f32 %v1403, %v1101
      %v1405 = vmul.f32 %v1403, %v1102
      %v1406 = vmul.f32 %v1403, %v1103
      %v1407 = vmul.f32 %v1403, %v1104
      %v1408 = vstv %s1402
      %v1409 = vmul.f32 %v1408, %v1101
      %v1410 = vmul.f32 %v1408, %v1102
      %v1411 = vmul.f32 %v1408, %v1103
      %v1412 = vmul.f32 %v1408, %v1104
      %1417 = vrot.lane.b32.xlu0 %v1409, 106
      %v1418 = vpop.permute.xlu0 %1417
      %1419 = vrot.lane.b32.xlu0 %v1410, 106
      %v1420 = vpop.permute.xlu0 %1419
      %1421 = vrot.lane.b32.xlu0 %v1411, 106
      %v1422 = vpop.permute.xlu0 %1421
      %1423 = vrot.lane.b32.xlu0 %v1412, 106
      %v1424 = vpop.permute.xlu0 %1423
      %v1429 = vadd.f32 %v1404, %v1418
      %v1430 = vadd.f32 %v1405, %v1420
      %v1431 = vadd.f32 %v1406, %v1422
      %v1432 = vadd.f32 %v1407, %v1424
      %1437 = vrot.lane.b32.xlu0 %v1429, 122
      %v1438 = vpop.permute.xlu0 %1437
      %1439 = vrot.lane.b32.xlu0 %v1430, 122
      %v1440 = vpop.permute.xlu0 %1439
      %1441 = vrot.lane.b32.xlu0 %v1431, 122
      %v1442 = vpop.permute.xlu0 %1441
      %1443 = vrot.lane.b32.xlu0 %v1432, 122
      %v1444 = vpop.permute.xlu0 %1443
      %v1449 = vadd.f32 %v1397, %v1438
      %v1450 = vadd.f32 %v1398, %v1440
      %v1451 = vadd.f32 %v1399, %v1442
      %v1452 = vadd.f32 %v1400, %v1444
      %v1453 = vld [vmem:[#allocation4 + $0x1] sm:$0xff]
      %v1454 = vld [vmem:[#allocation4 + $0x9] sm:$0xff]
      %v1455 = vld [vmem:[#allocation4 + $0x19] sm:$0xff]
      %v1456 = vld [vmem:[#allocation4 + $0x21] sm:$0xff]
      %s1457 = sld [smem:[#allocation9 + $0x7]]
      %s1458 = sld [smem:[#allocation9 + $0x38]]
      %v1459 = vstv %s1457
      %v1460 = vmul.f32 %v1459, %v1453
      %v1461 = vmul.f32 %v1459, %v1454
      %v1462 = vmul.f32 %v1459, %v1455
      %v1463 = vmul.f32 %v1459, %v1456
      %v1464 = vstv %s1458
      %v1465 = vmul.f32 %v1464, %v1453
      %v1466 = vmul.f32 %v1464, %v1454
      %v1467 = vmul.f32 %v1464, %v1455
      %v1468 = vmul.f32 %v1464, %v1456
      %1473 = vrot.lane.b32.xlu0 %v1465, 106
      %v1474 = vpop.permute.xlu0 %1473
      %1475 = vrot.lane.b32.xlu0 %v1466, 106
      %v1476 = vpop.permute.xlu0 %1475
      %1477 = vrot.lane.b32.xlu0 %v1467, 106
      %v1478 = vpop.permute.xlu0 %1477
      %1479 = vrot.lane.b32.xlu0 %v1468, 106
      %v1480 = vpop.permute.xlu0 %1479
      %v1485 = vadd.f32 %v1460, %v1474
      %v1486 = vadd.f32 %v1461, %v1476
      %v1487 = vadd.f32 %v1462, %v1478
      %v1488 = vadd.f32 %v1463, %v1480
      %v1489 = vadd.f32 %v1449, %v1485
      %v1490 = vadd.f32 %v1450, %v1486
      %v1491 = vadd.f32 %v1451, %v1487
      %v1492 = vadd.f32 %v1452, %v1488
      %s1493 = sld [smem:[#allocation9 + $0x8]]
      %s1494 = sld [smem:[#allocation9 + $0x39]]
      %v1495 = vstv %s1493
      %v1496 = vmul.f32 %v1495, %v1453
      %v1497 = vmul.f32 %v1495, %v1454
      %v1498 = vmul.f32 %v1495, %v1455
      %v1499 = vmul.f32 %v1495, %v1456
      %v1500 = vstv %s1494
      %v1501 = vmul.f32 %v1500, %v1453
      %v1502 = vmul.f32 %v1500, %v1454
      %v1503 = vmul.f32 %v1500, %v1455
      %v1504 = vmul.f32 %v1500, %v1456
      %1509 = vrot.lane.b32.xlu0 %v1501, 106
      %v1510 = vpop.permute.xlu0 %1509
      %1511 = vrot.lane.b32.xlu0 %v1502, 106
      %v1512 = vpop.permute.xlu0 %1511
      %1513 = vrot.lane.b32.xlu0 %v1503, 106
      %v1514 = vpop.permute.xlu0 %1513
      %1515 = vrot.lane.b32.xlu0 %v1504, 106
      %v1516 = vpop.permute.xlu0 %1515
      %v1521 = vadd.f32 %v1496, %v1510
      %v1522 = vadd.f32 %v1497, %v1512
      %v1523 = vadd.f32 %v1498, %v1514
      %v1524 = vadd.f32 %v1499, %v1516
      %1529 = vrot.lane.b32.xlu0 %v1521, 127
      %v1530 = vpop.permute.xlu0 %1529
      %1531 = vrot.lane.b32.xlu0 %v1522, 127
      %v1532 = vpop.permute.xlu0 %1531
      %1533 = vrot.lane.b32.xlu0 %v1523, 127
      %v1534 = vpop.permute.xlu0 %1533
      %1535 = vrot.lane.b32.xlu0 %v1524, 127
      %v1536 = vpop.permute.xlu0 %1535
      %v1541 = vadd.f32 %v1489, %v1530
      %v1542 = vadd.f32 %v1490, %v1532
      %v1543 = vadd.f32 %v1491, %v1534
      %v1544 = vadd.f32 %v1492, %v1536
      %s1545 = sld [smem:[#allocation9 + $0x9]]
      %s1546 = sld [smem:[#allocation9 + $0x3a]]
      %v1547 = vstv %s1545
      %v1548 = vmul.f32 %v1547, %v1453
      %v1549 = vmul.f32 %v1547, %v1454
      %v1550 = vmul.f32 %v1547, %v1455
      %v1551 = vmul.f32 %v1547, %v1456
      %v1552 = vstv %s1546
      %v1553 = vmul.f32 %v1552, %v1453
      %v1554 = vmul.f32 %v1552, %v1454
      %v1555 = vmul.f32 %v1552, %v1455
      %v1556 = vmul.f32 %v1552, %v1456
      %1561 = vrot.lane.b32.xlu0 %v1553, 106
      %v1562 = vpop.permute.xlu0 %1561
      %1563 = vrot.lane.b32.xlu0 %v1554, 106
      %v1564 = vpop.permute.xlu0 %1563
      %1565 = vrot.lane.b32.xlu0 %v1555, 106
      %v1566 = vpop.permute.xlu0 %1565
      %1567 = vrot.lane.b32.xlu0 %v1556, 106
      %v1568 = vpop.permute.xlu0 %1567
      %v1573 = vadd.f32 %v1548, %v1562
      %v1574 = vadd.f32 %v1549, %v1564
      %v1575 = vadd.f32 %v1550, %v1566
      %v1576 = vadd.f32 %v1551, %v1568
      %1581 = vrot.lane.b32.xlu0 %v1573, 126
      %v1582 = vpop.permute.xlu0 %1581
      %1583 = vrot.lane.b32.xlu0 %v1574, 126
      %v1584 = vpop.permute.xlu0 %1583
      %1585 = vrot.lane.b32.xlu0 %v1575, 126
      %v1586 = vpop.permute.xlu0 %1585
      %1587 = vrot.lane.b32.xlu0 %v1576, 126
      %v1588 = vpop.permute.xlu0 %1587
      %v1593 = vadd.f32 %v1541, %v1582
      %v1594 = vadd.f32 %v1542, %v1584
      %v1595 = vadd.f32 %v1543, %v1586
      %v1596 = vadd.f32 %v1544, %v1588
      %s1597 = sld [smem:[#allocation9 + $0xa]]
      %s1598 = sld [smem:[#allocation9 + $0x3b]]
      %v1599 = vstv %s1597
      %v1600 = vmul.f32 %v1599, %v1453
      %v1601 = vmul.f32 %v1599, %v1454
      %v1602 = vmul.f32 %v1599, %v1455
      %v1603 = vmul.f32 %v1599, %v1456
      %v1604 = vstv %s1598
      %v1605 = vmul.f32 %v1604, %v1453
      %v1606 = vmul.f32 %v1604, %v1454
      %v1607 = vmul.f32 %v1604, %v1455
      %v1608 = vmul.f32 %v1604, %v1456
      %1613 = vrot.lane.b32.xlu0 %v1605, 106
      %v1614 = vpop.permute.xlu0 %1613
      %1615 = vrot.lane.b32.xlu0 %v1606, 106
      %v1616 = vpop.permute.xlu0 %1615
      %1617 = vrot.lane.b32.xlu0 %v1607, 106
      %v1618 = vpop.permute.xlu0 %1617
      %1619 = vrot.lane.b32.xlu0 %v1608, 106
      %v1620 = vpop.permute.xlu0 %1619
      %v1625 = vadd.f32 %v1600, %v1614
      %v1626 = vadd.f32 %v1601, %v1616
      %v1627 = vadd.f32 %v1602, %v1618
      %v1628 = vadd.f32 %v1603, %v1620
      %1633 = vrot.lane.b32.xlu0 %v1625, 125
      %v1634 = vpop.permute.xlu0 %1633
      %1635 = vrot.lane.b32.xlu0 %v1626, 125
      %v1636 = vpop.permute.xlu0 %1635
      %1637 = vrot.lane.b32.xlu0 %v1627, 125
      %v1638 = vpop.permute.xlu0 %1637
      %1639 = vrot.lane.b32.xlu0 %v1628, 125
      %v1640 = vpop.permute.xlu0 %1639
      %v1645 = vadd.f32 %v1593, %v1634
      %v1646 = vadd.f32 %v1594, %v1636
      %v1647 = vadd.f32 %v1595, %v1638
      %v1648 = vadd.f32 %v1596, %v1640
      %s1649 = sld [smem:[#allocation9 + $0xb]]
      %s1650 = sld [smem:[#allocation9 + $0x3c]]
      %v1651 = vstv %s1649
      %v1652 = vmul.f32 %v1651, %v1453
      %v1653 = vmul.f32 %v1651, %v1454
      %v1654 = vmul.f32 %v1651, %v1455
      %v1655 = vmul.f32 %v1651, %v1456
      %v1656 = vstv %s1650
      %v1657 = vmul.f32 %v1656, %v1453
      %v1658 = vmul.f32 %v1656, %v1454
      %v1659 = vmul.f32 %v1656, %v1455
      %v1660 = vmul.f32 %v1656, %v1456
      %1665 = vrot.lane.b32.xlu0 %v1657, 106
      %v1666 = vpop.permute.xlu0 %1665
      %1667 = vrot.lane.b32.xlu0 %v1658, 106
      %v1668 = vpop.permute.xlu0 %1667
      %1669 = vrot.lane.b32.xlu0 %v1659, 106
      %v1670 = vpop.permute.xlu0 %1669
      %1671 = vrot.lane.b32.xlu0 %v1660, 106
      %v1672 = vpop.permute.xlu0 %1671
      %v1677 = vadd.f32 %v1652, %v1666
      %v1678 = vadd.f32 %v1653, %v1668
      %v1679 = vadd.f32 %v1654, %v1670
      %v1680 = vadd.f32 %v1655, %v1672
      %1685 = vrot.lane.b32.xlu0 %v1677, 124
      %v1686 = vpop.permute.xlu0 %1685
      %1687 = vrot.lane.b32.xlu0 %v1678, 124
      %v1688 = vpop.permute.xlu0 %1687
      %1689 = vrot.lane.b32.xlu0 %v1679, 124
      %v1690 = vpop.permute.xlu0 %1689
      %1691 = vrot.lane.b32.xlu0 %v1680, 124
      %v1692 = vpop.permute.xlu0 %1691
      %v1697 = vadd.f32 %v1645, %v1686
      %v1698 = vadd.f32 %v1646, %v1688
      %v1699 = vadd.f32 %v1647, %v1690
      %v1700 = vadd.f32 %v1648, %v1692
      %s1701 = sld [smem:[#allocation9 + $0xc]]
      %s1702 = sld [smem:[#allocation9 + $0x3d]]
      %v1703 = vstv %s1701
      %v1704 = vmul.f32 %v1703, %v1453
      %v1705 = vmul.f32 %v1703, %v1454
      %v1706 = vmul.f32 %v1703, %v1455
      %v1707 = vmul.f32 %v1703, %v1456
      %v1708 = vstv %s1702
      %v1709 = vmul.f32 %v1708, %v1453
      %v1710 = vmul.f32 %v1708, %v1454
      %v1711 = vmul.f32 %v1708, %v1455
      %v1712 = vmul.f32 %v1708, %v1456
      %1717 = vrot.lane.b32.xlu0 %v1709, 106
      %v1718 = vpop.permute.xlu0 %1717
      %1719 = vrot.lane.b32.xlu0 %v1710, 106
      %v1720 = vpop.permute.xlu0 %1719
      %1721 = vrot.lane.b32.xlu0 %v1711, 106
      %v1722 = vpop.permute.xlu0 %1721
      %1723 = vrot.lane.b32.xlu0 %v1712, 106
      %v1724 = vpop.permute.xlu0 %1723
      %v1729 = vadd.f32 %v1704, %v1718
      %v1730 = vadd.f32 %v1705, %v1720
      %v1731 = vadd.f32 %v1706, %v1722
      %v1732 = vadd.f32 %v1707, %v1724
      %1737 = vrot.lane.b32.xlu0 %v1729, 123
      %v1738 = vpop.permute.xlu0 %1737
      %1739 = vrot.lane.b32.xlu0 %v1730, 123
      %v1740 = vpop.permute.xlu0 %1739
      %1741 = vrot.lane.b32.xlu0 %v1731, 123
      %v1742 = vpop.permute.xlu0 %1741
      %1743 = vrot.lane.b32.xlu0 %v1732, 123
      %v1744 = vpop.permute.xlu0 %1743
      %v1749 = vadd.f32 %v1697, %v1738
      %v1750 = vadd.f32 %v1698, %v1740
      %v1751 = vadd.f32 %v1699, %v1742
      %v1752 = vadd.f32 %v1700, %v1744
      %s1753 = sld [smem:[#allocation9 + $0xd]]
      %s1754 = sld [smem:[#allocation9 + $0x3e]]
      %v1755 = vstv %s1753
      %v1756 = vmul.f32 %v1755, %v1453
      %v1757 = vmul.f32 %v1755, %v1454
      %v1758 = vmul.f32 %v1755, %v1455
      %v1759 = vmul.f32 %v1755, %v1456
      %v1760 = vstv %s1754
      %v1761 = vmul.f32 %v1760, %v1453
      %v1762 = vmul.f32 %v1760, %v1454
      %v1763 = vmul.f32 %v1760, %v1455
      %v1764 = vmul.f32 %v1760, %v1456
      %1769 = vrot.lane.b32.xlu0 %v1761, 106
      %v1770 = vpop.permute.xlu0 %1769
      %1771 = vrot.lane.b32.xlu0 %v1762, 106
      %v1772 = vpop.permute.xlu0 %1771
      %1773 = vrot.lane.b32.xlu0 %v1763, 106
      %v1774 = vpop.permute.xlu0 %1773
      %1775 = vrot.lane.b32.xlu0 %v1764, 106
      %v1776 = vpop.permute.xlu0 %1775
      %v1781 = vadd.f32 %v1756, %v1770
      %v1782 = vadd.f32 %v1757, %v1772
      %v1783 = vadd.f32 %v1758, %v1774
      %v1784 = vadd.f32 %v1759, %v1776
      %1789 = vrot.lane.b32.xlu0 %v1781, 122
      %v1790 = vpop.permute.xlu0 %1789
      %1791 = vrot.lane.b32.xlu0 %v1782, 122
      %v1792 = vpop.permute.xlu0 %1791
      %1793 = vrot.lane.b32.xlu0 %v1783, 122
      %v1794 = vpop.permute.xlu0 %1793
      %1795 = vrot.lane.b32.xlu0 %v1784, 122
      %v1796 = vpop.permute.xlu0 %1795
      %v1801 = vadd.f32 %v1749, %v1790
      %v1802 = vadd.f32 %v1750, %v1792
      %v1803 = vadd.f32 %v1751, %v1794
      %v1804 = vadd.f32 %v1752, %v1796
      %v1805 = vld [vmem:[#allocation4 + $0x2] sm:$0xff]
      %v1806 = vld [vmem:[#allocation4 + $0xa] sm:$0xff]
      %v1807 = vld [vmem:[#allocation4 + $0x1a] sm:$0xff]
      %v1808 = vld [vmem:[#allocation4 + $0x22] sm:$0xff]
      %s1809 = sld [smem:[#allocation9 + $0xe]]
      %s1810 = sld [smem:[#allocation9 + $0x3f]]
      %v1811 = vstv %s1809
      %v1812 = vmul.f32 %v1811, %v1805
      %v1813 = vmul.f32 %v1811, %v1806
      %v1814 = vmul.f32 %v1811, %v1807
      %v1815 = vmul.f32 %v1811, %v1808
      %v1816 = vstv %s1810
      %v1817 = vmul.f32 %v1816, %v1805
      %v1818 = vmul.f32 %v1816, %v1806
      %v1819 = vmul.f32 %v1816, %v1807
      %v1820 = vmul.f32 %v1816, %v1808
      %1825 = vrot.lane.b32.xlu0 %v1817, 106
      %v1826 = vpop.permute.xlu0 %1825
      %1827 = vrot.lane.b32.xlu0 %v1818, 106
      %v1828 = vpop.permute.xlu0 %1827
      %1829 = vrot.lane.b32.xlu0 %v1819, 106
      %v1830 = vpop.permute.xlu0 %1829
      %1831 = vrot.lane.b32.xlu0 %v1820, 106
      %v1832 = vpop.permute.xlu0 %1831
      %v1837 = vadd.f32 %v1812, %v1826
      %v1838 = vadd.f32 %v1813, %v1828
      %v1839 = vadd.f32 %v1814, %v1830
      %v1840 = vadd.f32 %v1815, %v1832
      %v1841 = vadd.f32 %v1801, %v1837
      %v1842 = vadd.f32 %v1802, %v1838
      %v1843 = vadd.f32 %v1803, %v1839
      %v1844 = vadd.f32 %v1804, %v1840
      %s1845 = sld [smem:[#allocation9 + $0xf]]
      %s1846 = sld [smem:[#allocation9 + $0x40]]
      %v1847 = vstv %s1845
      %v1848 = vmul.f32 %v1847, %v1805
      %v1849 = vmul.f32 %v1847, %v1806
      %v1850 = vmul.f32 %v1847, %v1807
      %v1851 = vmul.f32 %v1847, %v1808
      %v1852 = vstv %s1846
      %v1853 = vmul.f32 %v1852, %v1805
      %v1854 = vmul.f32 %v1852, %v1806
      %v1855 = vmul.f32 %v1852, %v1807
      %v1856 = vmul.f32 %v1852, %v1808
      %1861 = vrot.lane.b32.xlu0 %v1853, 106
      %v1862 = vpop.permute.xlu0 %1861
      %1863 = vrot.lane.b32.xlu0 %v1854, 106
      %v1864 = vpop.permute.xlu0 %1863
      %1865 = vrot.lane.b32.xlu0 %v1855, 106
      %v1866 = vpop.permute.xlu0 %1865
      %1867 = vrot.lane.b32.xlu0 %v1856, 106
      %v1868 = vpop.permute.xlu0 %1867
      %v1873 = vadd.f32 %v1848, %v1862
      %v1874 = vadd.f32 %v1849, %v1864
      %v1875 = vadd.f32 %v1850, %v1866
      %v1876 = vadd.f32 %v1851, %v1868
      %1881 = vrot.lane.b32.xlu0 %v1873, 127
      %v1882 = vpop.permute.xlu0 %1881
      %1883 = vrot.lane.b32.xlu0 %v1874, 127
      %v1884 = vpop.permute.xlu0 %1883
      %1885 = vrot.lane.b32.xlu0 %v1875, 127
      %v1886 = vpop.permute.xlu0 %1885
      %1887 = vrot.lane.b32.xlu0 %v1876, 127
      %v1888 = vpop.permute.xlu0 %1887
      %v1893 = vadd.f32 %v1841, %v1882
      %v1894 = vadd.f32 %v1842, %v1884
      %v1895 = vadd.f32 %v1843, %v1886
      %v1896 = vadd.f32 %v1844, %v1888
      %s1897 = sld [smem:[#allocation9 + $0x10]]
      %s1898 = sld [smem:[#allocation9 + $0x41]]
      %v1899 = vstv %s1897
      %v1900 = vmul.f32 %v1899, %v1805
      %v1901 = vmul.f32 %v1899, %v1806
      %v1902 = vmul.f32 %v1899, %v1807
      %v1903 = vmul.f32 %v1899, %v1808
      %v1904 = vstv %s1898
      %v1905 = vmul.f32 %v1904, %v1805
      %v1906 = vmul.f32 %v1904, %v1806
      %v1907 = vmul.f32 %v1904, %v1807
      %v1908 = vmul.f32 %v1904, %v1808
      %1913 = vrot.lane.b32.xlu0 %v1905, 106
      %v1914 = vpop.permute.xlu0 %1913
      %1915 = vrot.lane.b32.xlu0 %v1906, 106
      %v1916 = vpop.permute.xlu0 %1915
      %1917 = vrot.lane.b32.xlu0 %v1907, 106
      %v1918 = vpop.permute.xlu0 %1917
      %1919 = vrot.lane.b32.xlu0 %v1908, 106
      %v1920 = vpop.permute.xlu0 %1919
      %v1925 = vadd.f32 %v1900, %v1914
      %v1926 = vadd.f32 %v1901, %v1916
      %v1927 = vadd.f32 %v1902, %v1918
      %v1928 = vadd.f32 %v1903, %v1920
      %1933 = vrot.lane.b32.xlu0 %v1925, 126
      %v1934 = vpop.permute.xlu0 %1933
      %1935 = vrot.lane.b32.xlu0 %v1926, 126
      %v1936 = vpop.permute.xlu0 %1935
      %1937 = vrot.lane.b32.xlu0 %v1927, 126
      %v1938 = vpop.permute.xlu0 %1937
      %1939 = vrot.lane.b32.xlu0 %v1928, 126
      %v1940 = vpop.permute.xlu0 %1939
      %v1945 = vadd.f32 %v1893, %v1934
      %v1946 = vadd.f32 %v1894, %v1936
      %v1947 = vadd.f32 %v1895, %v1938
      %v1948 = vadd.f32 %v1896, %v1940
      %s1949 = sld [smem:[#allocation9 + $0x11]]
      %s1950 = sld [smem:[#allocation9 + $0x42]]
      %v1951 = vstv %s1949
      %v1952 = vmul.f32 %v1951, %v1805
      %v1953 = vmul.f32 %v1951, %v1806
      %v1954 = vmul.f32 %v1951, %v1807
      %v1955 = vmul.f32 %v1951, %v1808
      %v1956 = vstv %s1950
      %v1957 = vmul.f32 %v1956, %v1805
      %v1958 = vmul.f32 %v1956, %v1806
      %v1959 = vmul.f32 %v1956, %v1807
      %v1960 = vmul.f32 %v1956, %v1808
      %1965 = vrot.lane.b32.xlu0 %v1957, 106
      %v1966 = vpop.permute.xlu0 %1965
      %1967 = vrot.lane.b32.xlu0 %v1958, 106
      %v1968 = vpop.permute.xlu0 %1967
      %1969 = vrot.lane.b32.xlu0 %v1959, 106
      %v1970 = vpop.permute.xlu0 %1969
      %1971 = vrot.lane.b32.xlu0 %v1960, 106
      %v1972 = vpop.permute.xlu0 %1971
      %v1977 = vadd.f32 %v1952, %v1966
      %v1978 = vadd.f32 %v1953, %v1968
      %v1979 = vadd.f32 %v1954, %v1970
      %v1980 = vadd.f32 %v1955, %v1972
      %1985 = vrot.lane.b32.xlu0 %v1977, 125
      %v1986 = vpop.permute.xlu0 %1985
      %1987 = vrot.lane.b32.xlu0 %v1978, 125
      %v1988 = vpop.permute.xlu0 %1987
      %1989 = vrot.lane.b32.xlu0 %v1979, 125
      %v1990 = vpop.permute.xlu0 %1989
      %1991 = vrot.lane.b32.xlu0 %v1980, 125
      %v1992 = vpop.permute.xlu0 %1991
      %v1997 = vadd.f32 %v1945, %v1986
      %v1998 = vadd.f32 %v1946, %v1988
      %v1999 = vadd.f32 %v1947, %v1990
      %v2000 = vadd.f32 %v1948, %v1992
      %s2001 = sld [smem:[#allocation9 + $0x12]]
      %s2002 = sld [smem:[#allocation9 + $0x43]]
      %v2003 = vstv %s2001
      %v2004 = vmul.f32 %v2003, %v1805
      %v2005 = vmul.f32 %v2003, %v1806
      %v2006 = vmul.f32 %v2003, %v1807
      %v2007 = vmul.f32 %v2003, %v1808
      %v2008 = vstv %s2002
      %v2009 = vmul.f32 %v2008, %v1805
      %v2010 = vmul.f32 %v2008, %v1806
      %v2011 = vmul.f32 %v2008, %v1807
      %v2012 = vmul.f32 %v2008, %v1808
      %2017 = vrot.lane.b32.xlu0 %v2009, 106
      %v2018 = vpop.permute.xlu0 %2017
      %2019 = vrot.lane.b32.xlu0 %v2010, 106
      %v2020 = vpop.permute.xlu0 %2019
      %2021 = vrot.lane.b32.xlu0 %v2011, 106
      %v2022 = vpop.permute.xlu0 %2021
      %2023 = vrot.lane.b32.xlu0 %v2012, 106
      %v2024 = vpop.permute.xlu0 %2023
      %v2029 = vadd.f32 %v2004, %v2018
      %v2030 = vadd.f32 %v2005, %v2020
      %v2031 = vadd.f32 %v2006, %v2022
      %v2032 = vadd.f32 %v2007, %v2024
      %2037 = vrot.lane.b32.xlu0 %v2029, 124
      %v2038 = vpop.permute.xlu0 %2037
      %2039 = vrot.lane.b32.xlu0 %v2030, 124
      %v2040 = vpop.permute.xlu0 %2039
      %2041 = vrot.lane.b32.xlu0 %v2031, 124
      %v2042 = vpop.permute.xlu0 %2041
      %2043 = vrot.lane.b32.xlu0 %v2032, 124
      %v2044 = vpop.permute.xlu0 %2043
      %v2049 = vadd.f32 %v1997, %v2038
      %v2050 = vadd.f32 %v1998, %v2040
      %v2051 = vadd.f32 %v1999, %v2042
      %v2052 = vadd.f32 %v2000, %v2044
      %s2053 = sld [smem:[#allocation9 + $0x13]]
      %s2054 = sld [smem:[#allocation9 + $0x44]]
      %v2055 = vstv %s2053
      %v2056 = vmul.f32 %v2055, %v1805
      %v2057 = vmul.f32 %v2055, %v1806
      %v2058 = vmul.f32 %v2055, %v1807
      %v2059 = vmul.f32 %v2055, %v1808
      %v2060 = vstv %s2054
      %v2061 = vmul.f32 %v2060, %v1805
      %v2062 = vmul.f32 %v2060, %v1806
      %v2063 = vmul.f32 %v2060, %v1807
      %v2064 = vmul.f32 %v2060, %v1808
      %2069 = vrot.lane.b32.xlu0 %v2061, 106
      %v2070 = vpop.permute.xlu0 %2069
      %2071 = vrot.lane.b32.xlu0 %v2062, 106
      %v2072 = vpop.permute.xlu0 %2071
      %2073 = vrot.lane.b32.xlu0 %v2063, 106
      %v2074 = vpop.permute.xlu0 %2073
      %2075 = vrot.lane.b32.xlu0 %v2064, 106
      %v2076 = vpop.permute.xlu0 %2075
      %v2081 = vadd.f32 %v2056, %v2070
      %v2082 = vadd.f32 %v2057, %v2072
      %v2083 = vadd.f32 %v2058, %v2074
      %v2084 = vadd.f32 %v2059, %v2076
      %2089 = vrot.lane.b32.xlu0 %v2081, 123
      %v2090 = vpop.permute.xlu0 %2089
      %2091 = vrot.lane.b32.xlu0 %v2082, 123
      %v2092 = vpop.permute.xlu0 %2091
      %2093 = vrot.lane.b32.xlu0 %v2083, 123
      %v2094 = vpop.permute.xlu0 %2093
      %2095 = vrot.lane.b32.xlu0 %v2084, 123
      %v2096 = vpop.permute.xlu0 %2095
      %v2101 = vadd.f32 %v2049, %v2090
      %v2102 = vadd.f32 %v2050, %v2092
      %v2103 = vadd.f32 %v2051, %v2094
      %v2104 = vadd.f32 %v2052, %v2096
      %s2105 = sld [smem:[#allocation9 + $0x14]]
      %s2106 = sld [smem:[#allocation9 + $0x45]]
      %v2107 = vstv %s2105
      %v2108 = vmul.f32 %v2107, %v1805
      %v2109 = vmul.f32 %v2107, %v1806
      %v2110 = vmul.f32 %v2107, %v1807
      %v2111 = vmul.f32 %v2107, %v1808
      %v2112 = vstv %s2106
      %v2113 = vmul.f32 %v2112, %v1805
      %v2114 = vmul.f32 %v2112, %v1806
      %v2115 = vmul.f32 %v2112, %v1807
      %v2116 = vmul.f32 %v2112, %v1808
      %2121 = vrot.lane.b32.xlu0 %v2113, 106
      %v2122 = vpop.permute.xlu0 %2121
      %2123 = vrot.lane.b32.xlu0 %v2114, 106
      %v2124 = vpop.permute.xlu0 %2123
      %2125 = vrot.lane.b32.xlu0 %v2115, 106
      %v2126 = vpop.permute.xlu0 %2125
      %2127 = vrot.lane.b32.xlu0 %v2116, 106
      %v2128 = vpop.permute.xlu0 %2127
      %v2133 = vadd.f32 %v2108, %v2122
      %v2134 = vadd.f32 %v2109, %v2124
      %v2135 = vadd.f32 %v2110, %v2126
      %v2136 = vadd.f32 %v2111, %v2128
      %2141 = vrot.lane.b32.xlu0 %v2133, 122
      %v2142 = vpop.permute.xlu0 %2141
      %2143 = vrot.lane.b32.xlu0 %v2134, 122
      %v2144 = vpop.permute.xlu0 %2143
      %2145 = vrot.lane.b32.xlu0 %v2135, 122
      %v2146 = vpop.permute.xlu0 %2145
      %2147 = vrot.lane.b32.xlu0 %v2136, 122
      %v2148 = vpop.permute.xlu0 %2147
      %v2153 = vadd.f32 %v2101, %v2142
      %v2154 = vadd.f32 %v2102, %v2144
      %v2155 = vadd.f32 %v2103, %v2146
      %v2156 = vadd.f32 %v2104, %v2148
      %v2157 = vld [vmem:[#allocation4 + $0x3] sm:$0xff]
      %v2158 = vld [vmem:[#allocation4 + $0xb] sm:$0xff]
      %v2159 = vld [vmem:[#allocation4 + $0x1b] sm:$0xff]
      %v2160 = vld [vmem:[#allocation4 + $0x23] sm:$0xff]
      %s2161 = sld [smem:[#allocation9 + $0x15]]
      %s2162 = sld [smem:[#allocation9 + $0x46]]
      %v2163 = vstv %s2161
      %v2164 = vmul.f32 %v2163, %v2157
      %v2165 = vmul.f32 %v2163, %v2158
      %v2166 = vmul.f32 %v2163, %v2159
      %v2167 = vmul.f32 %v2163, %v2160
      %v2168 = vstv %s2162
      %v2169 = vmul.f32 %v2168, %v2157
      %v2170 = vmul.f32 %v2168, %v2158
      %v2171 = vmul.f32 %v2168, %v2159
      %v2172 = vmul.f32 %v2168, %v2160
      %2177 = vrot.lane.b32.xlu0 %v2169, 106
      %v2178 = vpop.permute.xlu0 %2177
      %2179 = vrot.lane.b32.xlu0 %v2170, 106
      %v2180 = vpop.permute.xlu0 %2179
      %2181 = vrot.lane.b32.xlu0 %v2171, 106
      %v2182 = vpop.permute.xlu0 %2181
      %2183 = vrot.lane.b32.xlu0 %v2172, 106
      %v2184 = vpop.permute.xlu0 %2183
      %v2189 = vadd.f32 %v2164, %v2178
      %v2190 = vadd.f32 %v2165, %v2180
      %v2191 = vadd.f32 %v2166, %v2182
      %v2192 = vadd.f32 %v2167, %v2184
      %v2193 = vadd.f32 %v2153, %v2189
      %v2194 = vadd.f32 %v2154, %v2190
      %v2195 = vadd.f32 %v2155, %v2191
      %v2196 = vadd.f32 %v2156, %v2192
      %s2197 = sld [smem:[#allocation9 + $0x16]]
      %s2198 = sld [smem:[#allocation9 + $0x47]]
      %v2199 = vstv %s2197
      %v2200 = vmul.f32 %v2199, %v2157
      %v2201 = vmul.f32 %v2199, %v2158
      %v2202 = vmul.f32 %v2199, %v2159
      %v2203 = vmul.f32 %v2199, %v2160
      %v2204 = vstv %s2198
      %v2205 = vmul.f32 %v2204, %v2157
      %v2206 = vmul.f32 %v2204, %v2158
      %v2207 = vmul.f32 %v2204, %v2159
      %v2208 = vmul.f32 %v2204, %v2160
      %2213 = vrot.lane.b32.xlu0 %v2205, 106
      %v2214 = vpop.permute.xlu0 %2213
      %2215 = vrot.lane.b32.xlu0 %v2206, 106
      %v2216 = vpop.permute.xlu0 %2215
      %2217 = vrot.lane.b32.xlu0 %v2207, 106
      %v2218 = vpop.permute.xlu0 %2217
      %2219 = vrot.lane.b32.xlu0 %v2208, 106
      %v2220 = vpop.permute.xlu0 %2219
      %v2225 = vadd.f32 %v2200, %v2214
      %v2226 = vadd.f32 %v2201, %v2216
      %v2227 = vadd.f32 %v2202, %v2218
      %v2228 = vadd.f32 %v2203, %v2220
      %2233 = vrot.lane.b32.xlu0 %v2225, 127
      %v2234 = vpop.permute.xlu0 %2233
      %2235 = vrot.lane.b32.xlu0 %v2226, 127
      %v2236 = vpop.permute.xlu0 %2235
      %2237 = vrot.lane.b32.xlu0 %v2227, 127
      %v2238 = vpop.permute.xlu0 %2237
      %2239 = vrot.lane.b32.xlu0 %v2228, 127
      %v2240 = vpop.permute.xlu0 %2239
      %v2245 = vadd.f32 %v2193, %v2234
      %v2246 = vadd.f32 %v2194, %v2236
      %v2247 = vadd.f32 %v2195, %v2238
      %v2248 = vadd.f32 %v2196, %v2240
      %s2249 = sld [smem:[#allocation9 + $0x17]]
      %s2250 = sld [smem:[#allocation9 + $0x48]]
      %v2251 = vstv %s2249
      %v2252 = vmul.f32 %v2251, %v2157
      %v2253 = vmul.f32 %v2251, %v2158
      %v2254 = vmul.f32 %v2251, %v2159
      %v2255 = vmul.f32 %v2251, %v2160
      %v2256 = vstv %s2250
      %v2257 = vmul.f32 %v2256, %v2157
      %v2258 = vmul.f32 %v2256, %v2158
      %v2259 = vmul.f32 %v2256, %v2159
      %v2260 = vmul.f32 %v2256, %v2160
      %2265 = vrot.lane.b32.xlu0 %v2257, 106
      %v2266 = vpop.permute.xlu0 %2265
      %2267 = vrot.lane.b32.xlu0 %v2258, 106
      %v2268 = vpop.permute.xlu0 %2267
      %2269 = vrot.lane.b32.xlu0 %v2259, 106
      %v2270 = vpop.permute.xlu0 %2269
      %2271 = vrot.lane.b32.xlu0 %v2260, 106
      %v2272 = vpop.permute.xlu0 %2271
      %v2277 = vadd.f32 %v2252, %v2266
      %v2278 = vadd.f32 %v2253, %v2268
      %v2279 = vadd.f32 %v2254, %v2270
      %v2280 = vadd.f32 %v2255, %v2272
      %2285 = vrot.lane.b32.xlu0 %v2277, 126
      %v2286 = vpop.permute.xlu0 %2285
      %2287 = vrot.lane.b32.xlu0 %v2278, 126
      %v2288 = vpop.permute.xlu0 %2287
      %2289 = vrot.lane.b32.xlu0 %v2279, 126
      %v2290 = vpop.permute.xlu0 %2289
      %2291 = vrot.lane.b32.xlu0 %v2280, 126
      %v2292 = vpop.permute.xlu0 %2291
      %v2297 = vadd.f32 %v2245, %v2286
      %v2298 = vadd.f32 %v2246, %v2288
      %v2299 = vadd.f32 %v2247, %v2290
      %v2300 = vadd.f32 %v2248, %v2292
      %s2301 = sld [smem:[#allocation9 + $0x18]]
      %s2302 = sld [smem:[#allocation9 + $0x49]]
      %v2303 = vstv %s2301
      %v2304 = vmul.f32 %v2303, %v2157
      %v2305 = vmul.f32 %v2303, %v2158
      %v2306 = vmul.f32 %v2303, %v2159
      %v2307 = vmul.f32 %v2303, %v2160
      %v2308 = vstv %s2302
      %v2309 = vmul.f32 %v2308, %v2157
      %v2310 = vmul.f32 %v2308, %v2158
      %v2311 = vmul.f32 %v2308, %v2159
      %v2312 = vmul.f32 %v2308, %v2160
      %2317 = vrot.lane.b32.xlu0 %v2309, 106
      %v2318 = vpop.permute.xlu0 %2317
      %2319 = vrot.lane.b32.xlu0 %v2310, 106
      %v2320 = vpop.permute.xlu0 %2319
      %2321 = vrot.lane.b32.xlu0 %v2311, 106
      %v2322 = vpop.permute.xlu0 %2321
      %2323 = vrot.lane.b32.xlu0 %v2312, 106
      %v2324 = vpop.permute.xlu0 %2323
      %v2329 = vadd.f32 %v2304, %v2318
      %v2330 = vadd.f32 %v2305, %v2320
      %v2331 = vadd.f32 %v2306, %v2322
      %v2332 = vadd.f32 %v2307, %v2324
      %2337 = vrot.lane.b32.xlu0 %v2329, 125
      %v2338 = vpop.permute.xlu0 %2337
      %2339 = vrot.lane.b32.xlu0 %v2330, 125
      %v2340 = vpop.permute.xlu0 %2339
      %2341 = vrot.lane.b32.xlu0 %v2331, 125
      %v2342 = vpop.permute.xlu0 %2341
      %2343 = vrot.lane.b32.xlu0 %v2332, 125
      %v2344 = vpop.permute.xlu0 %2343
      %v2349 = vadd.f32 %v2297, %v2338
      %v2350 = vadd.f32 %v2298, %v2340
      %v2351 = vadd.f32 %v2299, %v2342
      %v2352 = vadd.f32 %v2300, %v2344
      %s2353 = sld [smem:[#allocation9 + $0x19]]
      %s2354 = sld [smem:[#allocation9 + $0x4a]]
      %v2355 = vstv %s2353
      %v2356 = vmul.f32 %v2355, %v2157
      %v2357 = vmul.f32 %v2355, %v2158
      %v2358 = vmul.f32 %v2355, %v2159
      %v2359 = vmul.f32 %v2355, %v2160
      %v2360 = vstv %s2354
      %v2361 = vmul.f32 %v2360, %v2157
      %v2362 = vmul.f32 %v2360, %v2158
      %v2363 = vmul.f32 %v2360, %v2159
      %v2364 = vmul.f32 %v2360, %v2160
      %2369 = vrot.lane.b32.xlu0 %v2361, 106
      %v2370 = vpop.permute.xlu0 %2369
      %2371 = vrot.lane.b32.xlu0 %v2362, 106
      %v2372 = vpop.permute.xlu0 %2371
      %2373 = vrot.lane.b32.xlu0 %v2363, 106
      %v2374 = vpop.permute.xlu0 %2373
      %2375 = vrot.lane.b32.xlu0 %v2364, 106
      %v2376 = vpop.permute.xlu0 %2375
      %v2381 = vadd.f32 %v2356, %v2370
      %v2382 = vadd.f32 %v2357, %v2372
      %v2383 = vadd.f32 %v2358, %v2374
      %v2384 = vadd.f32 %v2359, %v2376
      %2389 = vrot.lane.b32.xlu0 %v2381, 124
      %v2390 = vpop.permute.xlu0 %2389
      %2391 = vrot.lane.b32.xlu0 %v2382, 124
      %v2392 = vpop.permute.xlu0 %2391
      %2393 = vrot.lane.b32.xlu0 %v2383, 124
      %v2394 = vpop.permute.xlu0 %2393
      %2395 = vrot.lane.b32.xlu0 %v2384, 124
      %v2396 = vpop.permute.xlu0 %2395
      %v2401 = vadd.f32 %v2349, %v2390
      %v2402 = vadd.f32 %v2350, %v2392
      %v2403 = vadd.f32 %v2351, %v2394
      %v2404 = vadd.f32 %v2352, %v2396
      %s2405 = sld [smem:[#allocation9 + $0x1a]]
      %s2406 = sld [smem:[#allocation9 + $0x4b]]
      %v2407 = vstv %s2405
      %v2408 = vmul.f32 %v2407, %v2157
      %v2409 = vmul.f32 %v2407, %v2158
      %v2410 = vmul.f32 %v2407, %v2159
      %v2411 = vmul.f32 %v2407, %v2160
      %v2412 = vstv %s2406
      %v2413 = vmul.f32 %v2412, %v2157
      %v2414 = vmul.f32 %v2412, %v2158
      %v2415 = vmul.f32 %v2412, %v2159
      %v2416 = vmul.f32 %v2412, %v2160
      %2421 = vrot.lane.b32.xlu0 %v2413, 106
      %v2422 = vpop.permute.xlu0 %2421
      %2423 = vrot.lane.b32.xlu0 %v2414, 106
      %v2424 = vpop.permute.xlu0 %2423
      %2425 = vrot.lane.b32.xlu0 %v2415, 106
      %v2426 = vpop.permute.xlu0 %2425
      %2427 = vrot.lane.b32.xlu0 %v2416, 106
      %v2428 = vpop.permute.xlu0 %2427
      %v2433 = vadd.f32 %v2408, %v2422
      %v2434 = vadd.f32 %v2409, %v2424
      %v2435 = vadd.f32 %v2410, %v2426
      %v2436 = vadd.f32 %v2411, %v2428
      %2441 = vrot.lane.b32.xlu0 %v2433, 123
      %v2442 = vpop.permute.xlu0 %2441
      %2443 = vrot.lane.b32.xlu0 %v2434, 123
      %v2444 = vpop.permute.xlu0 %2443
      %2445 = vrot.lane.b32.xlu0 %v2435, 123
      %v2446 = vpop.permute.xlu0 %2445
      %2447 = vrot.lane.b32.xlu0 %v2436, 123
      %v2448 = vpop.permute.xlu0 %2447
      %v2453 = vadd.f32 %v2401, %v2442
      %v2454 = vadd.f32 %v2402, %v2444
      %v2455 = vadd.f32 %v2403, %v2446
      %v2456 = vadd.f32 %v2404, %v2448
      %s2457 = sld [smem:[#allocation9 + $0x1b]]
      %s2458 = sld [smem:[#allocation9 + $0x4c]]
      %v2459 = vstv %s2457
      %v2460 = vmul.f32 %v2459, %v2157
      %v2461 = vmul.f32 %v2459, %v2158
      %v2462 = vmul.f32 %v2459, %v2159
      %v2463 = vmul.f32 %v2459, %v2160
      %v2464 = vstv %s2458
      %v2465 = vmul.f32 %v2464, %v2157
      %v2466 = vmul.f32 %v2464, %v2158
      %v2467 = vmul.f32 %v2464, %v2159
      %v2468 = vmul.f32 %v2464, %v2160
      %2473 = vrot.lane.b32.xlu0 %v2465, 106
      %v2474 = vpop.permute.xlu0 %2473
      %2475 = vrot.lane.b32.xlu0 %v2466, 106
      %v2476 = vpop.permute.xlu0 %2475
      %2477 = vrot.lane.b32.xlu0 %v2467, 106
      %v2478 = vpop.permute.xlu0 %2477
      %2479 = vrot.lane.b32.xlu0 %v2468, 106
      %v2480 = vpop.permute.xlu0 %2479
      %v2485 = vadd.f32 %v2460, %v2474
      %v2486 = vadd.f32 %v2461, %v2476
      %v2487 = vadd.f32 %v2462, %v2478
      %v2488 = vadd.f32 %v2463, %v2480
      %2493 = vrot.lane.b32.xlu0 %v2485, 122
      %v2494 = vpop.permute.xlu0 %2493
      %2495 = vrot.lane.b32.xlu0 %v2486, 122
      %v2496 = vpop.permute.xlu0 %2495
      %2497 = vrot.lane.b32.xlu0 %v2487, 122
      %v2498 = vpop.permute.xlu0 %2497
      %2499 = vrot.lane.b32.xlu0 %v2488, 122
      %v2500 = vpop.permute.xlu0 %2499
      %v2505 = vadd.f32 %v2453, %v2494
      %v2506 = vadd.f32 %v2454, %v2496
      %v2507 = vadd.f32 %v2455, %v2498
      %v2508 = vadd.f32 %v2456, %v2500
      %v2509 = vld [vmem:[#allocation4 + $0x4] sm:$0xff]
      %v2510 = vld [vmem:[#allocation4 + $0xc] sm:$0xff]
      %v2511 = vld [vmem:[#allocation4 + $0x1c] sm:$0xff]
      %v2512 = vld [vmem:[#allocation4 + $0x24] sm:$0xff]
      %s2513 = sld [smem:[#allocation9 + $0x1c]]
      %s2514 = sld [smem:[#allocation9 + $0x4d]]
      %v2515 = vstv %s2513
      %v2516 = vmul.f32 %v2515, %v2509
      %v2517 = vmul.f32 %v2515, %v2510
      %v2518 = vmul.f32 %v2515, %v2511
      %v2519 = vmul.f32 %v2515, %v2512
      %v2520 = vstv %s2514
      %v2521 = vmul.f32 %v2520, %v2509
      %v2522 = vmul.f32 %v2520, %v2510
      %v2523 = vmul.f32 %v2520, %v2511
      %v2524 = vmul.f32 %v2520, %v2512
      %2529 = vrot.lane.b32.xlu0 %v2521, 106
      %v2530 = vpop.permute.xlu0 %2529
      %2531 = vrot.lane.b32.xlu0 %v2522, 106
      %v2532 = vpop.permute.xlu0 %2531
      %2533 = vrot.lane.b32.xlu0 %v2523, 106
      %v2534 = vpop.permute.xlu0 %2533
      %2535 = vrot.lane.b32.xlu0 %v2524, 106
      %v2536 = vpop.permute.xlu0 %2535
      %v2541 = vadd.f32 %v2516, %v2530
      %v2542 = vadd.f32 %v2517, %v2532
      %v2543 = vadd.f32 %v2518, %v2534
      %v2544 = vadd.f32 %v2519, %v2536
      %v2545 = vadd.f32 %v2505, %v2541
      %v2546 = vadd.f32 %v2506, %v2542
      %v2547 = vadd.f32 %v2507, %v2543
      %v2548 = vadd.f32 %v2508, %v2544
      %s2549 = sld [smem:[#allocation9 + $0x1d]]
      %s2550 = sld [smem:[#allocation9 + $0x4e]]
      %v2551 = vstv %s2549
      %v2552 = vmul.f32 %v2551, %v2509
      %v2553 = vmul.f32 %v2551, %v2510
      %v2554 = vmul.f32 %v2551, %v2511
      %v2555 = vmul.f32 %v2551, %v2512
      %v2556 = vstv %s2550
      %v2557 = vmul.f32 %v2556, %v2509
      %v2558 = vmul.f32 %v2556, %v2510
      %v2559 = vmul.f32 %v2556, %v2511
      %v2560 = vmul.f32 %v2556, %v2512
      %2565 = vrot.lane.b32.xlu0 %v2557, 106
      %v2566 = vpop.permute.xlu0 %2565
      %2567 = vrot.lane.b32.xlu0 %v2558, 106
      %v2568 = vpop.permute.xlu0 %2567
      %2569 = vrot.lane.b32.xlu0 %v2559, 106
      %v2570 = vpop.permute.xlu0 %2569
      %2571 = vrot.lane.b32.xlu0 %v2560, 106
      %v2572 = vpop.permute.xlu0 %2571
      %v2577 = vadd.f32 %v2552, %v2566
      %v2578 = vadd.f32 %v2553, %v2568
      %v2579 = vadd.f32 %v2554, %v2570
      %v2580 = vadd.f32 %v2555, %v2572
      %2585 = vrot.lane.b32.xlu0 %v2577, 127
      %v2586 = vpop.permute.xlu0 %2585
      %2587 = vrot.lane.b32.xlu0 %v2578, 127
      %v2588 = vpop.permute.xlu0 %2587
      %2589 = vrot.lane.b32.xlu0 %v2579, 127
      %v2590 = vpop.permute.xlu0 %2589
      %2591 = vrot.lane.b32.xlu0 %v2580, 127
      %v2592 = vpop.permute.xlu0 %2591
      %v2597 = vadd.f32 %v2545, %v2586
      %v2598 = vadd.f32 %v2546, %v2588
      %v2599 = vadd.f32 %v2547, %v2590
      %v2600 = vadd.f32 %v2548, %v2592
      %s2601 = sld [smem:[#allocation9 + $0x1e]]
      %s2602 = sld [smem:[#allocation9 + $0x4f]]
      %v2603 = vstv %s2601
      %v2604 = vmul.f32 %v2603, %v2509
      %v2605 = vmul.f32 %v2603, %v2510
      %v2606 = vmul.f32 %v2603, %v2511
      %v2607 = vmul.f32 %v2603, %v2512
      %v2608 = vstv %s2602
      %v2609 = vmul.f32 %v2608, %v2509
      %v2610 = vmul.f32 %v2608, %v2510
      %v2611 = vmul.f32 %v2608, %v2511
      %v2612 = vmul.f32 %v2608, %v2512
      %2617 = vrot.lane.b32.xlu0 %v2609, 106
      %v2618 = vpop.permute.xlu0 %2617
      %2619 = vrot.lane.b32.xlu0 %v2610, 106
      %v2620 = vpop.permute.xlu0 %2619
      %2621 = vrot.lane.b32.xlu0 %v2611, 106
      %v2622 = vpop.permute.xlu0 %2621
      %2623 = vrot.lane.b32.xlu0 %v2612, 106
      %v2624 = vpop.permute.xlu0 %2623
      %v2629 = vadd.f32 %v2604, %v2618
      %v2630 = vadd.f32 %v2605, %v2620
      %v2631 = vadd.f32 %v2606, %v2622
      %v2632 = vadd.f32 %v2607, %v2624
      %2637 = vrot.lane.b32.xlu0 %v2629, 126
      %v2638 = vpop.permute.xlu0 %2637
      %2639 = vrot.lane.b32.xlu0 %v2630, 126
      %v2640 = vpop.permute.xlu0 %2639
      %2641 = vrot.lane.b32.xlu0 %v2631, 126
      %v2642 = vpop.permute.xlu0 %2641
      %2643 = vrot.lane.b32.xlu0 %v2632, 126
      %v2644 = vpop.permute.xlu0 %2643
      %v2649 = vadd.f32 %v2597, %v2638
      %v2650 = vadd.f32 %v2598, %v2640
      %v2651 = vadd.f32 %v2599, %v2642
      %v2652 = vadd.f32 %v2600, %v2644
      %s2653 = sld [smem:[#allocation9 + $0x1f]]
      %s2654 = sld [smem:[#allocation9 + $0x50]]
      %v2655 = vstv %s2653
      %v2656 = vmul.f32 %v2655, %v2509
      %v2657 = vmul.f32 %v2655, %v2510
      %v2658 = vmul.f32 %v2655, %v2511
      %v2659 = vmul.f32 %v2655, %v2512
      %v2660 = vstv %s2654
      %v2661 = vmul.f32 %v2660, %v2509
      %v2662 = vmul.f32 %v2660, %v2510
      %v2663 = vmul.f32 %v2660, %v2511
      %v2664 = vmul.f32 %v2660, %v2512
      %2669 = vrot.lane.b32.xlu0 %v2661, 106
      %v2670 = vpop.permute.xlu0 %2669
      %2671 = vrot.lane.b32.xlu0 %v2662, 106
      %v2672 = vpop.permute.xlu0 %2671
      %2673 = vrot.lane.b32.xlu0 %v2663, 106
      %v2674 = vpop.permute.xlu0 %2673
      %2675 = vrot.lane.b32.xlu0 %v2664, 106
      %v2676 = vpop.permute.xlu0 %2675
      %v2681 = vadd.f32 %v2656, %v2670
      %v2682 = vadd.f32 %v2657, %v2672
      %v2683 = vadd.f32 %v2658, %v2674
      %v2684 = vadd.f32 %v2659, %v2676
      %2689 = vrot.lane.b32.xlu0 %v2681, 125
      %v2690 = vpop.permute.xlu0 %2689
      %2691 = vrot.lane.b32.xlu0 %v2682, 125
      %v2692 = vpop.permute.xlu0 %2691
      %2693 = vrot.lane.b32.xlu0 %v2683, 125
      %v2694 = vpop.permute.xlu0 %2693
      %2695 = vrot.lane.b32.xlu0 %v2684, 125
      %v2696 = vpop.permute.xlu0 %2695
      %v2701 = vadd.f32 %v2649, %v2690
      %v2702 = vadd.f32 %v2650, %v2692
      %v2703 = vadd.f32 %v2651, %v2694
      %v2704 = vadd.f32 %v2652, %v2696
      %s2705 = sld [smem:[#allocation9 + $0x20]]
      %s2706 = sld [smem:[#allocation9 + $0x51]]
      %v2707 = vstv %s2705
      %v2708 = vmul.f32 %v2707, %v2509
      %v2709 = vmul.f32 %v2707, %v2510
      %v2710 = vmul.f32 %v2707, %v2511
      %v2711 = vmul.f32 %v2707, %v2512
      %v2712 = vstv %s2706
      %v2713 = vmul.f32 %v2712, %v2509
      %v2714 = vmul.f32 %v2712, %v2510
      %v2715 = vmul.f32 %v2712, %v2511
      %v2716 = vmul.f32 %v2712, %v2512
      %2721 = vrot.lane.b32.xlu0 %v2713, 106
      %v2722 = vpop.permute.xlu0 %2721
      %2723 = vrot.lane.b32.xlu0 %v2714, 106
      %v2724 = vpop.permute.xlu0 %2723
      %2725 = vrot.lane.b32.xlu0 %v2715, 106
      %v2726 = vpop.permute.xlu0 %2725
      %2727 = vrot.lane.b32.xlu0 %v2716, 106
      %v2728 = vpop.permute.xlu0 %2727
      %v2733 = vadd.f32 %v2708, %v2722
      %v2734 = vadd.f32 %v2709, %v2724
      %v2735 = vadd.f32 %v2710, %v2726
      %v2736 = vadd.f32 %v2711, %v2728
      %2741 = vrot.lane.b32.xlu0 %v2733, 124
      %v2742 = vpop.permute.xlu0 %2741
      %2743 = vrot.lane.b32.xlu0 %v2734, 124
      %v2744 = vpop.permute.xlu0 %2743
      %2745 = vrot.lane.b32.xlu0 %v2735, 124
      %v2746 = vpop.permute.xlu0 %2745
      %2747 = vrot.lane.b32.xlu0 %v2736, 124
      %v2748 = vpop.permute.xlu0 %2747
      %v2753 = vadd.f32 %v2701, %v2742
      %v2754 = vadd.f32 %v2702, %v2744
      %v2755 = vadd.f32 %v2703, %v2746
      %v2756 = vadd.f32 %v2704, %v2748
      %s2757 = sld [smem:[#allocation9 + $0x21]]
      %s2758 = sld [smem:[#allocation9 + $0x52]]
      %v2759 = vstv %s2757
      %v2760 = vmul.f32 %v2759, %v2509
      %v2761 = vmul.f32 %v2759, %v2510
      %v2762 = vmul.f32 %v2759, %v2511
      %v2763 = vmul.f32 %v2759, %v2512
      %v2764 = vstv %s2758
      %v2765 = vmul.f32 %v2764, %v2509
      %v2766 = vmul.f32 %v2764, %v2510
      %v2767 = vmul.f32 %v2764, %v2511
      %v2768 = vmul.f32 %v2764, %v2512
      %2773 = vrot.lane.b32.xlu0 %v2765, 106
      %v2774 = vpop.permute.xlu0 %2773
      %2775 = vrot.lane.b32.xlu0 %v2766, 106
      %v2776 = vpop.permute.xlu0 %2775
      %2777 = vrot.lane.b32.xlu0 %v2767, 106
      %v2778 = vpop.permute.xlu0 %2777
      %2779 = vrot.lane.b32.xlu0 %v2768, 106
      %v2780 = vpop.permute.xlu0 %2779
      %v2785 = vadd.f32 %v2760, %v2774
      %v2786 = vadd.f32 %v2761, %v2776
      %v2787 = vadd.f32 %v2762, %v2778
      %v2788 = vadd.f32 %v2763, %v2780
      %2793 = vrot.lane.b32.xlu0 %v2785, 123
      %v2794 = vpop.permute.xlu0 %2793
      %2795 = vrot.lane.b32.xlu0 %v2786, 123
      %v2796 = vpop.permute.xlu0 %2795
      %2797 = vrot.lane.b32.xlu0 %v2787, 123
      %v2798 = vpop.permute.xlu0 %2797
      %2799 = vrot.lane.b32.xlu0 %v2788, 123
      %v2800 = vpop.permute.xlu0 %2799
      %v2805 = vadd.f32 %v2753, %v2794
      %v2806 = vadd.f32 %v2754, %v2796
      %v2807 = vadd.f32 %v2755, %v2798
      %v2808 = vadd.f32 %v2756, %v2800
      %s2809 = sld [smem:[#allocation9 + $0x22]]
      %s2810 = sld [smem:[#allocation9 + $0x53]]
      %v2811 = vstv %s2809
      %v2812 = vmul.f32 %v2811, %v2509
      %v2813 = vmul.f32 %v2811, %v2510
      %v2814 = vmul.f32 %v2811, %v2511
      %v2815 = vmul.f32 %v2811, %v2512
      %v2816 = vstv %s2810
      %v2817 = vmul.f32 %v2816, %v2509
      %v2818 = vmul.f32 %v2816, %v2510
      %v2819 = vmul.f32 %v2816, %v2511
      %v2820 = vmul.f32 %v2816, %v2512
      %2825 = vrot.lane.b32.xlu0 %v2817, 106
      %v2826 = vpop.permute.xlu0 %2825
      %2827 = vrot.lane.b32.xlu0 %v2818, 106
      %v2828 = vpop.permute.xlu0 %2827
      %2829 = vrot.lane.b32.xlu0 %v2819, 106
      %v2830 = vpop.permute.xlu0 %2829
      %2831 = vrot.lane.b32.xlu0 %v2820, 106
      %v2832 = vpop.permute.xlu0 %2831
      %v2837 = vadd.f32 %v2812, %v2826
      %v2838 = vadd.f32 %v2813, %v2828
      %v2839 = vadd.f32 %v2814, %v2830
      %v2840 = vadd.f32 %v2815, %v2832
      %2845 = vrot.lane.b32.xlu0 %v2837, 122
      %v2846 = vpop.permute.xlu0 %2845
      %2847 = vrot.lane.b32.xlu0 %v2838, 122
      %v2848 = vpop.permute.xlu0 %2847
      %2849 = vrot.lane.b32.xlu0 %v2839, 122
      %v2850 = vpop.permute.xlu0 %2849
      %2851 = vrot.lane.b32.xlu0 %v2840, 122
      %v2852 = vpop.permute.xlu0 %2851
      %v2857 = vadd.f32 %v2805, %v2846
      %v2858 = vadd.f32 %v2806, %v2848
      %v2859 = vadd.f32 %v2807, %v2850
      %v2860 = vadd.f32 %v2808, %v2852
      %v2861 = vld [vmem:[#allocation4 + $0x5] sm:$0xff]
      %v2862 = vld [vmem:[#allocation4 + $0xd] sm:$0xff]
      %v2863 = vld [vmem:[#allocation4 + $0x1d] sm:$0xff]
      %v2864 = vld [vmem:[#allocation4 + $0x25] sm:$0xff]
      %s2865 = sld [smem:[#allocation9 + $0x23]]
      %s2866 = sld [smem:[#allocation9 + $0x54]]
      %v2867 = vstv %s2865
      %v2868 = vmul.f32 %v2867, %v2861
      %v2869 = vmul.f32 %v2867, %v2862
      %v2870 = vmul.f32 %v2867, %v2863
      %v2871 = vmul.f32 %v2867, %v2864
      %v2872 = vstv %s2866
      %v2873 = vmul.f32 %v2872, %v2861
      %v2874 = vmul.f32 %v2872, %v2862
      %v2875 = vmul.f32 %v2872, %v2863
      %v2876 = vmul.f32 %v2872, %v2864
      %2881 = vrot.lane.b32.xlu0 %v2873, 106
      %v2882 = vpop.permute.xlu0 %2881
      %2883 = vrot.lane.b32.xlu0 %v2874, 106
      %v2884 = vpop.permute.xlu0 %2883
      %2885 = vrot.lane.b32.xlu0 %v2875, 106
      %v2886 = vpop.permute.xlu0 %2885
      %2887 = vrot.lane.b32.xlu0 %v2876, 106
      %v2888 = vpop.permute.xlu0 %2887
      %v2893 = vadd.f32 %v2868, %v2882
      %v2894 = vadd.f32 %v2869, %v2884
      %v2895 = vadd.f32 %v2870, %v2886
      %v2896 = vadd.f32 %v2871, %v2888
      %v2897 = vadd.f32 %v2857, %v2893
      %v2898 = vadd.f32 %v2858, %v2894
      %v2899 = vadd.f32 %v2859, %v2895
      %v2900 = vadd.f32 %v2860, %v2896
      %s2901 = sld [smem:[#allocation9 + $0x24]]
      %s2902 = sld [smem:[#allocation9 + $0x55]]
      %v2903 = vstv %s2901
      %v2904 = vmul.f32 %v2903, %v2861
      %v2905 = vmul.f32 %v2903, %v2862
      %v2906 = vmul.f32 %v2903, %v2863
      %v2907 = vmul.f32 %v2903, %v2864
      %v2908 = vstv %s2902
      %v2909 = vmul.f32 %v2908, %v2861
      %v2910 = vmul.f32 %v2908, %v2862
      %v2911 = vmul.f32 %v2908, %v2863
      %v2912 = vmul.f32 %v2908, %v2864
      %2917 = vrot.lane.b32.xlu0 %v2909, 106
      %v2918 = vpop.permute.xlu0 %2917
      %2919 = vrot.lane.b32.xlu0 %v2910, 106
      %v2920 = vpop.permute.xlu0 %2919
      %2921 = vrot.lane.b32.xlu0 %v2911, 106
      %v2922 = vpop.permute.xlu0 %2921
      %2923 = vrot.lane.b32.xlu0 %v2912, 106
      %v2924 = vpop.permute.xlu0 %2923
      %v2929 = vadd.f32 %v2904, %v2918
      %v2930 = vadd.f32 %v2905, %v2920
      %v2931 = vadd.f32 %v2906, %v2922
      %v2932 = vadd.f32 %v2907, %v2924
      %2937 = vrot.lane.b32.xlu0 %v2929, 127
      %v2938 = vpop.permute.xlu0 %2937
      %2939 = vrot.lane.b32.xlu0 %v2930, 127
      %v2940 = vpop.permute.xlu0 %2939
      %2941 = vrot.lane.b32.xlu0 %v2931, 127
      %v2942 = vpop.permute.xlu0 %2941
      %2943 = vrot.lane.b32.xlu0 %v2932, 127
      %v2944 = vpop.permute.xlu0 %2943
      %v2949 = vadd.f32 %v2897, %v2938
      %v2950 = vadd.f32 %v2898, %v2940
      %v2951 = vadd.f32 %v2899, %v2942
      %v2952 = vadd.f32 %v2900, %v2944
      %s2953 = sld [smem:[#allocation9 + $0x25]]
      %s2954 = sld [smem:[#allocation9 + $0x56]]
      %v2955 = vstv %s2953
      %v2956 = vmul.f32 %v2955, %v2861
      %v2957 = vmul.f32 %v2955, %v2862
      %v2958 = vmul.f32 %v2955, %v2863
      %v2959 = vmul.f32 %v2955, %v2864
      %v2960 = vstv %s2954
      %v2961 = vmul.f32 %v2960, %v2861
      %v2962 = vmul.f32 %v2960, %v2862
      %v2963 = vmul.f32 %v2960, %v2863
      %v2964 = vmul.f32 %v2960, %v2864
      %2969 = vrot.lane.b32.xlu0 %v2961, 106
      %v2970 = vpop.permute.xlu0 %2969
      %2971 = vrot.lane.b32.xlu0 %v2962, 106
      %v2972 = vpop.permute.xlu0 %2971
      %2973 = vrot.lane.b32.xlu0 %v2963, 106
      %v2974 = vpop.permute.xlu0 %2973
      %2975 = vrot.lane.b32.xlu0 %v2964, 106
      %v2976 = vpop.permute.xlu0 %2975
      %v2981 = vadd.f32 %v2956, %v2970
      %v2982 = vadd.f32 %v2957, %v2972
      %v2983 = vadd.f32 %v2958, %v2974
      %v2984 = vadd.f32 %v2959, %v2976
      %2989 = vrot.lane.b32.xlu0 %v2981, 126
      %v2990 = vpop.permute.xlu0 %2989
      %2991 = vrot.lane.b32.xlu0 %v2982, 126
      %v2992 = vpop.permute.xlu0 %2991
      %2993 = vrot.lane.b32.xlu0 %v2983, 126
      %v2994 = vpop.permute.xlu0 %2993
      %2995 = vrot.lane.b32.xlu0 %v2984, 126
      %v2996 = vpop.permute.xlu0 %2995
      %v3001 = vadd.f32 %v2949, %v2990
      %v3002 = vadd.f32 %v2950, %v2992
      %v3003 = vadd.f32 %v2951, %v2994
      %v3004 = vadd.f32 %v2952, %v2996
      %s3005 = sld [smem:[#allocation9 + $0x26]]
      %s3006 = sld [smem:[#allocation9 + $0x57]]
      %v3007 = vstv %s3005
      %v3008 = vmul.f32 %v3007, %v2861
      %v3009 = vmul.f32 %v3007, %v2862
      %v3010 = vmul.f32 %v3007, %v2863
      %v3011 = vmul.f32 %v3007, %v2864
      %v3012 = vstv %s3006
      %v3013 = vmul.f32 %v3012, %v2861
      %v3014 = vmul.f32 %v3012, %v2862
      %v3015 = vmul.f32 %v3012, %v2863
      %v3016 = vmul.f32 %v3012, %v2864
      %3021 = vrot.lane.b32.xlu0 %v3013, 106
      %v3022 = vpop.permute.xlu0 %3021
      %3023 = vrot.lane.b32.xlu0 %v3014, 106
      %v3024 = vpop.permute.xlu0 %3023
      %3025 = vrot.lane.b32.xlu0 %v3015, 106
      %v3026 = vpop.permute.xlu0 %3025
      %3027 = vrot.lane.b32.xlu0 %v3016, 106
      %v3028 = vpop.permute.xlu0 %3027
      %v3033 = vadd.f32 %v3008, %v3022
      %v3034 = vadd.f32 %v3009, %v3024
      %v3035 = vadd.f32 %v3010, %v3026
      %v3036 = vadd.f32 %v3011, %v3028
      %3041 = vrot.lane.b32.xlu0 %v3033, 125
      %v3042 = vpop.permute.xlu0 %3041
      %3043 = vrot.lane.b32.xlu0 %v3034, 125
      %v3044 = vpop.permute.xlu0 %3043
      %3045 = vrot.lane.b32.xlu0 %v3035, 125
      %v3046 = vpop.permute.xlu0 %3045
      %3047 = vrot.lane.b32.xlu0 %v3036, 125
      %v3048 = vpop.permute.xlu0 %3047
      %v3053 = vadd.f32 %v3001, %v3042
      %v3054 = vadd.f32 %v3002, %v3044
      %v3055 = vadd.f32 %v3003, %v3046
      %v3056 = vadd.f32 %v3004, %v3048
      %s3057 = sld [smem:[#allocation9 + $0x27]]
      %s3058 = sld [smem:[#allocation9 + $0x58]]
      %v3059 = vstv %s3057
      %v3060 = vmul.f32 %v3059, %v2861
      %v3061 = vmul.f32 %v3059, %v2862
      %v3062 = vmul.f32 %v3059, %v2863
      %v3063 = vmul.f32 %v3059, %v2864
      %v3064 = vstv %s3058
      %v3065 = vmul.f32 %v3064, %v2861
      %v3066 = vmul.f32 %v3064, %v2862
      %v3067 = vmul.f32 %v3064, %v2863
      %v3068 = vmul.f32 %v3064, %v2864
      %3073 = vrot.lane.b32.xlu0 %v3065, 106
      %v3074 = vpop.permute.xlu0 %3073
      %3075 = vrot.lane.b32.xlu0 %v3066, 106
      %v3076 = vpop.permute.xlu0 %3075
      %3077 = vrot.lane.b32.xlu0 %v3067, 106
      %v3078 = vpop.permute.xlu0 %3077
      %3079 = vrot.lane.b32.xlu0 %v3068, 106
      %v3080 = vpop.permute.xlu0 %3079
      %v3085 = vadd.f32 %v3060, %v3074
      %v3086 = vadd.f32 %v3061, %v3076
      %v3087 = vadd.f32 %v3062, %v3078
      %v3088 = vadd.f32 %v3063, %v3080
      %3093 = vrot.lane.b32.xlu0 %v3085, 124
      %v3094 = vpop.permute.xlu0 %3093
      %3095 = vrot.lane.b32.xlu0 %v3086, 124
      %v3096 = vpop.permute.xlu0 %3095
      %3097 = vrot.lane.b32.xlu0 %v3087, 124
      %v3098 = vpop.permute.xlu0 %3097
      %3099 = vrot.lane.b32.xlu0 %v3088, 124
      %v3100 = vpop.permute.xlu0 %3099
      %v3105 = vadd.f32 %v3053, %v3094
      %v3106 = vadd.f32 %v3054, %v3096
      %v3107 = vadd.f32 %v3055, %v3098
      %v3108 = vadd.f32 %v3056, %v3100
      %s3109 = sld [smem:[#allocation9 + $0x28]]
      %s3110 = sld [smem:[#allocation9 + $0x59]]
      %v3111 = vstv %s3109
      %v3112 = vmul.f32 %v3111, %v2861
      %v3113 = vmul.f32 %v3111, %v2862
      %v3114 = vmul.f32 %v3111, %v2863
      %v3115 = vmul.f32 %v3111, %v2864
      %v3116 = vstv %s3110
      %v3117 = vmul.f32 %v3116, %v2861
      %v3118 = vmul.f32 %v3116, %v2862
      %v3119 = vmul.f32 %v3116, %v2863
      %v3120 = vmul.f32 %v3116, %v2864
      %3125 = vrot.lane.b32.xlu0 %v3117, 106
      %v3126 = vpop.permute.xlu0 %3125
      %3127 = vrot.lane.b32.xlu0 %v3118, 106
      %v3128 = vpop.permute.xlu0 %3127
      %3129 = vrot.lane.b32.xlu0 %v3119, 106
      %v3130 = vpop.permute.xlu0 %3129
      %3131 = vrot.lane.b32.xlu0 %v3120, 106
      %v3132 = vpop.permute.xlu0 %3131
      %v3137 = vadd.f32 %v3112, %v3126
      %v3138 = vadd.f32 %v3113, %v3128
      %v3139 = vadd.f32 %v3114, %v3130
      %v3140 = vadd.f32 %v3115, %v3132
      %3145 = vrot.lane.b32.xlu0 %v3137, 123
      %v3146 = vpop.permute.xlu0 %3145
      %3147 = vrot.lane.b32.xlu0 %v3138, 123
      %v3148 = vpop.permute.xlu0 %3147
      %3149 = vrot.lane.b32.xlu0 %v3139, 123
      %v3150 = vpop.permute.xlu0 %3149
      %3151 = vrot.lane.b32.xlu0 %v3140, 123
      %v3152 = vpop.permute.xlu0 %3151
      %v3157 = vadd.f32 %v3105, %v3146
      %v3158 = vadd.f32 %v3106, %v3148
      %v3159 = vadd.f32 %v3107, %v3150
      %v3160 = vadd.f32 %v3108, %v3152
      %s3161 = sld [smem:[#allocation9 + $0x29]]
      %s3162 = sld [smem:[#allocation9 + $0x5a]]
      %v3163 = vstv %s3161
      %v3164 = vmul.f32 %v3163, %v2861
      %v3165 = vmul.f32 %v3163, %v2862
      %v3166 = vmul.f32 %v3163, %v2863
      %v3167 = vmul.f32 %v3163, %v2864
      %v3168 = vstv %s3162
      %v3169 = vmul.f32 %v3168, %v2861
      %v3170 = vmul.f32 %v3168, %v2862
      %v3171 = vmul.f32 %v3168, %v2863
      %v3172 = vmul.f32 %v3168, %v2864
      %3177 = vrot.lane.b32.xlu0 %v3169, 106
      %v3178 = vpop.permute.xlu0 %3177
      %3179 = vrot.lane.b32.xlu0 %v3170, 106
      %v3180 = vpop.permute.xlu0 %3179
      %3181 = vrot.lane.b32.xlu0 %v3171, 106
      %v3182 = vpop.permute.xlu0 %3181
      %3183 = vrot.lane.b32.xlu0 %v3172, 106
      %v3184 = vpop.permute.xlu0 %3183
      %v3189 = vadd.f32 %v3164, %v3178
      %v3190 = vadd.f32 %v3165, %v3180
      %v3191 = vadd.f32 %v3166, %v3182
      %v3192 = vadd.f32 %v3167, %v3184
      %3197 = vrot.lane.b32.xlu0 %v3189, 122
      %v3198 = vpop.permute.xlu0 %3197
      %3199 = vrot.lane.b32.xlu0 %v3190, 122
      %v3200 = vpop.permute.xlu0 %3199
      %3201 = vrot.lane.b32.xlu0 %v3191, 122
      %v3202 = vpop.permute.xlu0 %3201
      %3203 = vrot.lane.b32.xlu0 %v3192, 122
      %v3204 = vpop.permute.xlu0 %3203
      %v3209 = vadd.f32 %v3157, %v3198
      %v3210 = vadd.f32 %v3158, %v3200
      %v3211 = vadd.f32 %v3159, %v3202
      %v3212 = vadd.f32 %v3160, %v3204
      %v3213 = vld [vmem:[#allocation4 + $0x6] sm:$0xff]
      %v3214 = vld [vmem:[#allocation4 + $0xe] sm:$0xff]
      %v3215 = vld [vmem:[#allocation4 + $0x1e] sm:$0xff]
      %v3216 = vld [vmem:[#allocation4 + $0x26] sm:$0xff]
      %s3217 = sld [smem:[#allocation9 + $0x2a]]
      %s3218 = sld [smem:[#allocation9 + $0x5b]]
      %v3219 = vstv %s3217
      %v3220 = vmul.f32 %v3219, %v3213
      %v3221 = vmul.f32 %v3219, %v3214
      %v3222 = vmul.f32 %v3219, %v3215
      %v3223 = vmul.f32 %v3219, %v3216
      %v3224 = vstv %s3218
      %v3225 = vmul.f32 %v3224, %v3213
      %v3226 = vmul.f32 %v3224, %v3214
      %v3227 = vmul.f32 %v3224, %v3215
      %v3228 = vmul.f32 %v3224, %v3216
      %3233 = vrot.lane.b32.xlu0 %v3225, 106
      %v3234 = vpop.permute.xlu0 %3233
      %3235 = vrot.lane.b32.xlu0 %v3226, 106
      %v3236 = vpop.permute.xlu0 %3235
      %3237 = vrot.lane.b32.xlu0 %v3227, 106
      %v3238 = vpop.permute.xlu0 %3237
      %3239 = vrot.lane.b32.xlu0 %v3228, 106
      %v3240 = vpop.permute.xlu0 %3239
      %v3245 = vadd.f32 %v3220, %v3234
      %v3246 = vadd.f32 %v3221, %v3236
      %v3247 = vadd.f32 %v3222, %v3238
      %v3248 = vadd.f32 %v3223, %v3240
      %v3249 = vadd.f32 %v3209, %v3245
      %v3250 = vadd.f32 %v3210, %v3246
      %v3251 = vadd.f32 %v3211, %v3247
      %v3252 = vadd.f32 %v3212, %v3248
      %s3253 = sld [smem:[#allocation9 + $0x2b]]
      %s3254 = sld [smem:[#allocation9 + $0x5c]]
      %v3255 = vstv %s3253
      %v3256 = vmul.f32 %v3255, %v3213
      %v3257 = vmul.f32 %v3255, %v3214
      %v3258 = vmul.f32 %v3255, %v3215
      %v3259 = vmul.f32 %v3255, %v3216
      %v3260 = vstv %s3254
      %v3261 = vmul.f32 %v3260, %v3213
      %v3262 = vmul.f32 %v3260, %v3214
      %v3263 = vmul.f32 %v3260, %v3215
      %v3264 = vmul.f32 %v3260, %v3216
      %3269 = vrot.lane.b32.xlu0 %v3261, 106
      %v3270 = vpop.permute.xlu0 %3269
      %3271 = vrot.lane.b32.xlu0 %v3262, 106
      %v3272 = vpop.permute.xlu0 %3271
      %3273 = vrot.lane.b32.xlu0 %v3263, 106
      %v3274 = vpop.permute.xlu0 %3273
      %3275 = vrot.lane.b32.xlu0 %v3264, 106
      %v3276 = vpop.permute.xlu0 %3275
      %v3281 = vadd.f32 %v3256, %v3270
      %v3282 = vadd.f32 %v3257, %v3272
      %v3283 = vadd.f32 %v3258, %v3274
      %v3284 = vadd.f32 %v3259, %v3276
      %3289 = vrot.lane.b32.xlu0 %v3281, 127
      %v3290 = vpop.permute.xlu0 %3289
      %3291 = vrot.lane.b32.xlu0 %v3282, 127
      %v3292 = vpop.permute.xlu0 %3291
      %3293 = vrot.lane.b32.xlu0 %v3283, 127
      %v3294 = vpop.permute.xlu0 %3293
      %3295 = vrot.lane.b32.xlu0 %v3284, 127
      %v3296 = vpop.permute.xlu0 %3295
      %v3301 = vadd.f32 %v3249, %v3290
      %v3302 = vadd.f32 %v3250, %v3292
      %v3303 = vadd.f32 %v3251, %v3294
      %v3304 = vadd.f32 %v3252, %v3296
      %s3305 = sld [smem:[#allocation9 + $0x2c]]
      %s3306 = sld [smem:[#allocation9 + $0x5d]]
      %v3307 = vstv %s3305
      %v3308 = vmul.f32 %v3307, %v3213
      %v3309 = vmul.f32 %v3307, %v3214
      %v3310 = vmul.f32 %v3307, %v3215
      %v3311 = vmul.f32 %v3307, %v3216
      %v3312 = vstv %s3306
      %v3313 = vmul.f32 %v3312, %v3213
      %v3314 = vmul.f32 %v3312, %v3214
      %v3315 = vmul.f32 %v3312, %v3215
      %v3316 = vmul.f32 %v3312, %v3216
      %3321 = vrot.lane.b32.xlu0 %v3313, 106
      %v3322 = vpop.permute.xlu0 %3321
      %3323 = vrot.lane.b32.xlu0 %v3314, 106
      %v3324 = vpop.permute.xlu0 %3323
      %3325 = vrot.lane.b32.xlu0 %v3315, 106
      %v3326 = vpop.permute.xlu0 %3325
      %3327 = vrot.lane.b32.xlu0 %v3316, 106
      %v3328 = vpop.permute.xlu0 %3327
      %v3333 = vadd.f32 %v3308, %v3322
      %v3334 = vadd.f32 %v3309, %v3324
      %v3335 = vadd.f32 %v3310, %v3326
      %v3336 = vadd.f32 %v3311, %v3328
      %3341 = vrot.lane.b32.xlu0 %v3333, 126
      %v3342 = vpop.permute.xlu0 %3341
      %3343 = vrot.lane.b32.xlu0 %v3334, 126
      %v3344 = vpop.permute.xlu0 %3343
      %3345 = vrot.lane.b32.xlu0 %v3335, 126
      %v3346 = vpop.permute.xlu0 %3345
      %3347 = vrot.lane.b32.xlu0 %v3336, 126
      %v3348 = vpop.permute.xlu0 %3347
      %v3353 = vadd.f32 %v3301, %v3342
      %v3354 = vadd.f32 %v3302, %v3344
      %v3355 = vadd.f32 %v3303, %v3346
      %v3356 = vadd.f32 %v3304, %v3348
      %s3357 = sld [smem:[#allocation9 + $0x2d]]
      %s3358 = sld [smem:[#allocation9 + $0x5e]]
      %v3359 = vstv %s3357
      %v3360 = vmul.f32 %v3359, %v3213
      %v3361 = vmul.f32 %v3359, %v3214
      %v3362 = vmul.f32 %v3359, %v3215
      %v3363 = vmul.f32 %v3359, %v3216
      %v3364 = vstv %s3358
      %v3365 = vmul.f32 %v3364, %v3213
      %v3366 = vmul.f32 %v3364, %v3214
      %v3367 = vmul.f32 %v3364, %v3215
      %v3368 = vmul.f32 %v3364, %v3216
      %3373 = vrot.lane.b32.xlu0 %v3365, 106
      %v3374 = vpop.permute.xlu0 %3373
      %3375 = vrot.lane.b32.xlu0 %v3366, 106
      %v3376 = vpop.permute.xlu0 %3375
      %3377 = vrot.lane.b32.xlu0 %v3367, 106
      %v3378 = vpop.permute.xlu0 %3377
      %3379 = vrot.lane.b32.xlu0 %v3368, 106
      %v3380 = vpop.permute.xlu0 %3379
      %v3385 = vadd.f32 %v3360, %v3374
      %v3386 = vadd.f32 %v3361, %v3376
      %v3387 = vadd.f32 %v3362, %v3378
      %v3388 = vadd.f32 %v3363, %v3380
      %3393 = vrot.lane.b32.xlu0 %v3385, 125
      %v3394 = vpop.permute.xlu0 %3393
      %3395 = vrot.lane.b32.xlu0 %v3386, 125
      %v3396 = vpop.permute.xlu0 %3395
      %3397 = vrot.lane.b32.xlu0 %v3387, 125
      %v3398 = vpop.permute.xlu0 %3397
      %3399 = vrot.lane.b32.xlu0 %v3388, 125
      %v3400 = vpop.permute.xlu0 %3399
      %v3405 = vadd.f32 %v3353, %v3394
      %v3406 = vadd.f32 %v3354, %v3396
      %v3407 = vadd.f32 %v3355, %v3398
      %v3408 = vadd.f32 %v3356, %v3400
      %s3409 = sld [smem:[#allocation9 + $0x2e]]
      %s3410 = sld [smem:[#allocation9 + $0x5f]]
      %v3411 = vstv %s3409
      %v3412 = vmul.f32 %v3411, %v3213
      %v3413 = vmul.f32 %v3411, %v3214
      %v3414 = vmul.f32 %v3411, %v3215
      %v3415 = vmul.f32 %v3411, %v3216
      %v3416 = vstv %s3410
      %v3417 = vmul.f32 %v3416, %v3213
      %v3418 = vmul.f32 %v3416, %v3214
      %v3419 = vmul.f32 %v3416, %v3215
      %v3420 = vmul.f32 %v3416, %v3216
      %3425 = vrot.lane.b32.xlu0 %v3417, 106
      %v3426 = vpop.permute.xlu0 %3425
      %3427 = vrot.lane.b32.xlu0 %v3418, 106
      %v3428 = vpop.permute.xlu0 %3427
      %3429 = vrot.lane.b32.xlu0 %v3419, 106
      %v3430 = vpop.permute.xlu0 %3429
      %3431 = vrot.lane.b32.xlu0 %v3420, 106
      %v3432 = vpop.permute.xlu0 %3431
      %v3437 = vadd.f32 %v3412, %v3426
      %v3438 = vadd.f32 %v3413, %v3428
      %v3439 = vadd.f32 %v3414, %v3430
      %v3440 = vadd.f32 %v3415, %v3432
      %3445 = vrot.lane.b32.xlu0 %v3437, 124
      %v3446 = vpop.permute.xlu0 %3445
      %3447 = vrot.lane.b32.xlu0 %v3438, 124
      %v3448 = vpop.permute.xlu0 %3447
      %3449 = vrot.lane.b32.xlu0 %v3439, 124
      %v3450 = vpop.permute.xlu0 %3449
      %3451 = vrot.lane.b32.xlu0 %v3440, 124
      %v3452 = vpop.permute.xlu0 %3451
      %v3457 = vadd.f32 %v3405, %v3446
      %v3458 = vadd.f32 %v3406, %v3448
      %v3459 = vadd.f32 %v3407, %v3450
      %v3460 = vadd.f32 %v3408, %v3452
      %s3461 = sld [smem:[#allocation9 + $0x2f]]
      %s3462 = sld [smem:[#allocation9 + $0x60]]
      %v3463 = vstv %s3461
      %v3464 = vmul.f32 %v3463, %v3213
      %v3465 = vmul.f32 %v3463, %v3214
      %v3466 = vmul.f32 %v3463, %v3215
      %v3467 = vmul.f32 %v3463, %v3216
      %v3468 = vstv %s3462
      %v3469 = vmul.f32 %v3468, %v3213
      %v3470 = vmul.f32 %v3468, %v3214
      %v3471 = vmul.f32 %v3468, %v3215
      %v3472 = vmul.f32 %v3468, %v3216
      %3477 = vrot.lane.b32.xlu0 %v3469, 106
      %v3478 = vpop.permute.xlu0 %3477
      %3479 = vrot.lane.b32.xlu0 %v3470, 106
      %v3480 = vpop.permute.xlu0 %3479
      %3481 = vrot.lane.b32.xlu0 %v3471, 106
      %v3482 = vpop.permute.xlu0 %3481
      %3483 = vrot.lane.b32.xlu0 %v3472, 106
      %v3484 = vpop.permute.xlu0 %3483
      %v3489 = vadd.f32 %v3464, %v3478
      %v3490 = vadd.f32 %v3465, %v3480
      %v3491 = vadd.f32 %v3466, %v3482
      %v3492 = vadd.f32 %v3467, %v3484
      %3497 = vrot.lane.b32.xlu0 %v3489, 123
      %v3498 = vpop.permute.xlu0 %3497
      %3499 = vrot.lane.b32.xlu0 %v3490, 123
      %v3500 = vpop.permute.xlu0 %3499
      %3501 = vrot.lane.b32.xlu0 %v3491, 123
      %v3502 = vpop.permute.xlu0 %3501
      %3503 = vrot.lane.b32.xlu0 %v3492, 123
      %v3504 = vpop.permute.xlu0 %3503
      %v3509 = vadd.f32 %v3457, %v3498
      %v3510 = vadd.f32 %v3458, %v3500
      %v3511 = vadd.f32 %v3459, %v3502
      %v3512 = vadd.f32 %v3460, %v3504
      %s3513 = sld [smem:[#allocation9 + $0x30]]
      %s3514 = sld [smem:[#allocation9 + $0x61]]
      %v3515 = vstv %s3513
      %v3516 = vmul.f32 %v3515, %v3213
      %v3517 = vmul.f32 %v3515, %v3214
      %v3518 = vmul.f32 %v3515, %v3215
      %v3519 = vmul.f32 %v3515, %v3216
      %v3520 = vstv %s3514
      %v3521 = vmul.f32 %v3520, %v3213
      %v3522 = vmul.f32 %v3520, %v3214
      %v3523 = vmul.f32 %v3520, %v3215
      %v3524 = vmul.f32 %v3520, %v3216
      %3529 = vrot.lane.b32.xlu0 %v3521, 106
      %v3530 = vpop.permute.xlu0 %3529
      %3531 = vrot.lane.b32.xlu0 %v3522, 106
      %v3532 = vpop.permute.xlu0 %3531
      %3533 = vrot.lane.b32.xlu0 %v3523, 106
      %v3534 = vpop.permute.xlu0 %3533
      %3535 = vrot.lane.b32.xlu0 %v3524, 106
      %v3536 = vpop.permute.xlu0 %3535
      %v3541 = vadd.f32 %v3516, %v3530
      %v3542 = vadd.f32 %v3517, %v3532
      %v3543 = vadd.f32 %v3518, %v3534
      %v3544 = vadd.f32 %v3519, %v3536
      %3549 = vrot.lane.b32.xlu0 %v3541, 122
      %v3550 = vpop.permute.xlu0 %3549
      %3551 = vrot.lane.b32.xlu0 %v3542, 122
      %v3552 = vpop.permute.xlu0 %3551
      %3553 = vrot.lane.b32.xlu0 %v3543, 122
      %v3554 = vpop.permute.xlu0 %3553
      %3555 = vrot.lane.b32.xlu0 %v3544, 122
      %v3556 = vpop.permute.xlu0 %3555
      %v3561 = vadd.f32 %v3509, %v3550
      %v3562 = vadd.f32 %v3510, %v3552
      %v3563 = vadd.f32 %v3511, %v3554
      %v3564 = vadd.f32 %v3512, %v3556
      %v3565 = vmul.f32 %v3561, 0.5
      %v3566 = vmul.f32 %v3562, 0.5
      %v3567 = vmul.f32 %v3563, 0.5
      %v3568 = vmul.f32 %v3564, 0.5
      %v3569 = vtanh.pop %v3565
      %v3570 = vtanh.pop %v3566
      %v3571 = vtanh.pop %v3567
      %v3572 = vtanh.pop %v3568
      %v3573 = vadd.f32 %v3569, 1.0
      %v3574 = vadd.f32 %v3570, 1.0
      %v3575 = vadd.f32 %v3571, 1.0
      %v3576 = vadd.f32 %v3572, 1.0
      %v3577 = vmul.f32 %v3573, 0.5
      %v3578 = vmul.f32 %v3574, 0.5
      %v3579 = vmul.f32 %v3575, 0.5
      %v3580 = vmul.f32 %v3576, 0.5
      %v3581 = vlaneseq
      %vm3582 = vcmp.ge.s32.totalorder %v3581, 0
      %vm3583 = vcmp.lt.s32.totalorder %v3581, 16
      %vm3584 = vmand %vm3582, %vm3583
      %3585 = vst.msk [vmem:[#allocation10] sm:$0x1] %vm3584, %v3577
      %3586 = vst.msk [vmem:[#allocation10 + $0x2] sm:$0x1] %vm3584, %v3579
      %v3590 = vunpack.c.l.s4 1966171168
      %v3591 = vunpack.c.0.s8 %v3590
      %v3592 = vlaneseq
      %v3593 = vshrl.u32 %v3592, 7
      %v3594 = vsub.s32 %v3591, %v3593
      %v3595 = vrot.slane %v3577, %v3594
      %v3596 = vcombine.high %v3595, %v3595
      %v3598 = vunpack.c.l.s4 1966171168
      %v3599 = vunpack.c.0.s8 %v3598
      %v3600 = vlaneseq
      %v3601 = vshrl.u32 %v3600, 7
      %v3602 = vsub.s32 %v3599, %v3601
      %v3603 = vrot.slane %v3595, %v3602
      %v3605 = vunpack.c.l.s4 1966171168
      %v3606 = vunpack.c.0.s8 %v3605
      %v3607 = vlaneseq
      %v3608 = vshrl.u32 %v3607, 7
      %v3609 = vsub.s32 %v3606, %v3608
      %v3610 = vrot.slane %v3596, %v3609
      %v3612 = vunpack.c.l.s4 1966171168
      %v3613 = vunpack.c.0.s8 %v3612
      %v3614 = vlaneseq
      %v3615 = vshrl.u32 %v3614, 7
      %v3616 = vsub.s32 %v3613, %v3615
      %v3617 = vrot.slane %v3579, %v3616
      %v3618 = vcombine.high %v3617, %v3617
      %v3620 = vunpack.c.l.s4 1966171168
      %v3621 = vunpack.c.0.s8 %v3620
      %v3622 = vlaneseq
      %v3623 = vshrl.u32 %v3622, 7
      %v3624 = vsub.s32 %v3621, %v3623
      %v3625 = vrot.slane %v3617, %v3624
      %v3627 = vunpack.c.l.s4 1966171168
      %v3628 = vunpack.c.0.s8 %v3627
      %v3629 = vlaneseq
      %v3630 = vshrl.u32 %v3629, 7
      %v3631 = vsub.s32 %v3628, %v3630
      %v3632 = vrot.slane %v3618, %v3631
      %3633 = vrot.lane.b32.xlu0 %v3610, 16
      %v3634 = vpop.permute.xlu0 %3633
      %3635 = vrot.lane.b32.xlu0 %v3632, 16
      %v3636 = vpop.permute.xlu0 %3635
      %vm3639 = vcmp.ge.s32.totalorder %v3581, 16
      %vm3640 = vcmp.lt.s32.totalorder %v3581, 32
      %vm3641 = vmand %vm3639, %vm3640
      %3642 = vst.msk [vmem:[#allocation10] sm:$0x1] %vm3641, %v3634
      %3643 = vst.msk [vmem:[#allocation10 + $0x2] sm:$0x1] %vm3641, %v3636
      %v3644 = vcombine.high %v3603, %v3603
      %v3645 = vcombine.high %v3625, %v3625
      %3646 = vrot.lane.b32.xlu0 %v3644, 32
      %v3647 = vpop.permute.xlu0 %3646
      %3648 = vrot.lane.b32.xlu0 %v3645, 32
      %v3649 = vpop.permute.xlu0 %3648
      %vm3652 = vcmp.ge.s32.totalorder %v3581, 32
      %vm3653 = vcmp.lt.s32.totalorder %v3581, 48
      %vm3654 = vmand %vm3652, %vm3653
      %3655 = vst.msk [vmem:[#allocation10] sm:$0x1] %vm3654, %v3647
      %3656 = vst.msk [vmem:[#allocation10 + $0x2] sm:$0x1] %vm3654, %v3649
      %v3657 = vcombine.high %v3610, %v3610
      %v3658 = vcombine.high %v3632, %v3632
      %3659 = vrot.lane.b32.xlu0 %v3657, 48
      %v3660 = vpop.permute.xlu0 %3659
      %3661 = vrot.lane.b32.xlu0 %v3658, 48
      %v3662 = vpop.permute.xlu0 %3661
      %vm3665 = vcmp.ge.s32.totalorder %v3581, 48
      %vm3666 = vcmp.lt.s32.totalorder %v3581, 64
      %vm3667 = vmand %vm3665, %vm3666
      %3668 = vst.msk [vmem:[#allocation10] sm:$0x1] %vm3667, %v3660
      %3669 = vst.msk [vmem:[#allocation10 + $0x2] sm:$0x1] %vm3667, %v3662
      %v3670 = vcombine.high %v3577, %v3577
      %v3672 = vunpack.c.l.s4 1966171168
      %v3673 = vunpack.c.0.s8 %v3672
      %v3674 = vlaneseq
      %v3675 = vshrl.u32 %v3674, 7
      %v3676 = vsub.s32 %v3673, %v3675
      %v3677 = vrot.slane %v3670, %v3676
      %v3679 = vunpack.c.l.s4 1966171168
      %v3680 = vunpack.c.0.s8 %v3679
      %v3681 = vlaneseq
      %v3682 = vshrl.u32 %v3681, 7
      %v3683 = vsub.s32 %v3680, %v3682
      %v3684 = vrot.slane %v3677, %v3683
      %v3685 = vcombine.high %v3579, %v3579
      %v3687 = vunpack.c.l.s4 1966171168
      %v3688 = vunpack.c.0.s8 %v3687
      %v3689 = vlaneseq
      %v3690 = vshrl.u32 %v3689, 7
      %v3691 = vsub.s32 %v3688, %v3690
      %v3692 = vrot.slane %v3685, %v3691
      %v3694 = vunpack.c.l.s4 1966171168
      %v3695 = vunpack.c.0.s8 %v3694
      %v3696 = vlaneseq
      %v3697 = vshrl.u32 %v3696, 7
      %v3698 = vsub.s32 %v3695, %v3697
      %v3699 = vrot.slane %v3692, %v3698
      %3700 = vrot.lane.b32.xlu0 %v3684, 64
      %v3701 = vpop.permute.xlu0 %3700
      %3702 = vrot.lane.b32.xlu0 %v3699, 64
      %v3703 = vpop.permute.xlu0 %3702
      %vm3706 = vcmp.ge.s32.totalorder %v3581, 64
      %vm3707 = vcmp.lt.s32.totalorder %v3581, 80
      %vm3708 = vmand %vm3706, %vm3707
      %3709 = vst.msk [vmem:[#allocation10] sm:$0x1] %vm3708, %v3701
      %3710 = vst.msk [vmem:[#allocation10 + $0x2] sm:$0x1] %vm3708, %v3703
      %v3711 = vcombine.high %v3677, %v3677
      %v3713 = vunpack.c.l.s4 1966171168
      %v3714 = vunpack.c.0.s8 %v3713
      %v3715 = vlaneseq
      %v3716 = vshrl.u32 %v3715, 7
      %v3717 = vsub.s32 %v3714, %v3716
      %v3718 = vrot.slane %v3711, %v3717
      %v3719 = vcombine.high %v3692, %v3692
      %v3721 = vunpack.c.l.s4 1966171168
      %v3722 = vunpack.c.0.s8 %v3721
      %v3723 = vlaneseq
      %v3724 = vshrl.u32 %v3723, 7
      %v3725 = vsub.s32 %v3722, %v3724
      %v3726 = vrot.slane %v3719, %v3725
      %3727 = vrot.lane.b32.xlu0 %v3718, 80
      %v3728 = vpop.permute.xlu0 %3727
      %3729 = vrot.lane.b32.xlu0 %v3726, 80
      %v3730 = vpop.permute.xlu0 %3729
      %vm3733 = vcmp.ge.s32.totalorder %v3581, 80
      %vm3734 = vcmp.lt.s32.totalorder %v3581, 96
      %vm3735 = vmand %vm3733, %vm3734
      %3736 = vst.msk [vmem:[#allocation10] sm:$0x1] %vm3735, %v3728
      %3737 = vst.msk [vmem:[#allocation10 + $0x2] sm:$0x1] %vm3735, %v3730
      %v3738 = vcombine.high %v3684, %v3684
      %v3739 = vcombine.high %v3699, %v3699
      %3740 = vrot.lane.b32.xlu0 %v3738, 96
      %v3741 = vpop.permute.xlu0 %3740
      %3742 = vrot.lane.b32.xlu0 %v3739, 96
      %v3743 = vpop.permute.xlu0 %3742
      %vm3746 = vcmp.ge.s32.totalorder %v3581, 96
      %vm3747 = vcmp.lt.s32.totalorder %v3581, 112
      %vm3748 = vmand %vm3746, %vm3747
      %3749 = vst.msk [vmem:[#allocation10] sm:$0x1] %vm3748, %v3741
      %3750 = vst.msk [vmem:[#allocation10 + $0x2] sm:$0x1] %vm3748, %v3743
      %v3751 = vcombine.high %v3718, %v3718
      %v3752 = vcombine.high %v3726, %v3726
      %3753 = vrot.lane.b32.xlu0 %v3751, 112
      %v3754 = vpop.permute.xlu0 %3753
      %3755 = vrot.lane.b32.xlu0 %v3752, 112
      %v3756 = vpop.permute.xlu0 %3755
      %vm3759 = vcmp.ge.s32.totalorder %v3581, 112
      %vm3760 = vcmp.lt.s32.totalorder %v3581, 128
      %vm3761 = vmand %vm3759, %vm3760
      %3762 = vst.msk [vmem:[#allocation10] sm:$0x1] %vm3761, %v3754
      %3763 = vst.msk [vmem:[#allocation10 + $0x2] sm:$0x1] %vm3761, %v3756
      %3764 = vst.msk [vmem:[#allocation10 + $0x1] sm:$0x1] %vm3584, %v3578
      %3765 = vst.msk [vmem:[#allocation10 + $0x3] sm:$0x1] %vm3584, %v3580
      %v3769 = vunpack.c.l.s4 1966171168
      %v3770 = vunpack.c.0.s8 %v3769
      %v3771 = vlaneseq
      %v3772 = vshrl.u32 %v3771, 7
      %v3773 = vsub.s32 %v3770, %v3772
      %v3774 = vrot.slane %v3578, %v3773
      %v3775 = vcombine.high %v3774, %v3774
      %v3777 = vunpack.c.l.s4 1966171168
      %v3778 = vunpack.c.0.s8 %v3777
      %v3779 = vlaneseq
      %v3780 = vshrl.u32 %v3779, 7
      %v3781 = vsub.s32 %v3778, %v3780
      %v3782 = vrot.slane %v3774, %v3781
      %v3784 = vunpack.c.l.s4 1966171168
      %v3785 = vunpack.c.0.s8 %v3784
      %v3786 = vlaneseq
      %v3787 = vshrl.u32 %v3786, 7
      %v3788 = vsub.s32 %v3785, %v3787
      %v3789 = vrot.slane %v3775, %v3788
      %v3791 = vunpack.c.l.s4 1966171168
      %v3792 = vunpack.c.0.s8 %v3791
      %v3793 = vlaneseq
      %v3794 = vshrl.u32 %v3793, 7
      %v3795 = vsub.s32 %v3792, %v3794
      %v3796 = vrot.slane %v3580, %v3795
      %v3797 = vcombine.high %v3796, %v3796
      %v3799 = vunpack.c.l.s4 1966171168
      %v3800 = vunpack.c.0.s8 %v3799
      %v3801 = vlaneseq
      %v3802 = vshrl.u32 %v3801, 7
      %v3803 = vsub.s32 %v3800, %v3802
      %v3804 = vrot.slane %v3796, %v3803
      %v3806 = vunpack.c.l.s4 1966171168
      %v3807 = vunpack.c.0.s8 %v3806
      %v3808 = vlaneseq
      %v3809 = vshrl.u32 %v3808, 7
      %v3810 = vsub.s32 %v3807, %v3809
      %v3811 = vrot.slane %v3797, %v3810
      %3812 = vrot.lane.b32.xlu0 %v3789, 16
      %v3813 = vpop.permute.xlu0 %3812
      %3814 = vrot.lane.b32.xlu0 %v3811, 16
      %v3815 = vpop.permute.xlu0 %3814
      %3818 = vst.msk [vmem:[#allocation10 + $0x1] sm:$0x1] %vm3641, %v3813
      %3819 = vst.msk [vmem:[#allocation10 + $0x3] sm:$0x1] %vm3641, %v3815
      %v3820 = vcombine.high %v3782, %v3782
      %v3821 = vcombine.high %v3804, %v3804
      %3822 = vrot.lane.b32.xlu0 %v3820, 32
      %v3823 = vpop.permute.xlu0 %3822
      %3824 = vrot.lane.b32.xlu0 %v3821, 32
      %v3825 = vpop.permute.xlu0 %3824
      %3828 = vst.msk [vmem:[#allocation10 + $0x1] sm:$0x1] %vm3654, %v3823
      %3829 = vst.msk [vmem:[#allocation10 + $0x3] sm:$0x1] %vm3654, %v3825
      %v3830 = vcombine.high %v3789, %v3789
      %v3831 = vcombine.high %v3811, %v3811
      %3832 = vrot.lane.b32.xlu0 %v3830, 48
      %v3833 = vpop.permute.xlu0 %3832
      %3834 = vrot.lane.b32.xlu0 %v3831, 48
      %v3835 = vpop.permute.xlu0 %3834
      %3838 = vst.msk [vmem:[#allocation10 + $0x1] sm:$0x1] %vm3667, %v3833
      %3839 = vst.msk [vmem:[#allocation10 + $0x3] sm:$0x1] %vm3667, %v3835
      %v3840 = vcombine.high %v3578, %v3578
      %v3842 = vunpack.c.l.s4 1966171168
      %v3843 = vunpack.c.0.s8 %v3842
      %v3844 = vlaneseq
      %v3845 = vshrl.u32 %v3844, 7
      %v3846 = vsub.s32 %v3843, %v3845
      %v3847 = vrot.slane %v3840, %v3846
      %v3849 = vunpack.c.l.s4 1966171168
      %v3850 = vunpack.c.0.s8 %v3849
      %v3851 = vlaneseq
      %v3852 = vshrl.u32 %v3851, 7
      %v3853 = vsub.s32 %v3850, %v3852
      %v3854 = vrot.slane %v3847, %v3853
      %v3855 = vcombine.high %v3580, %v3580
      %v3857 = vunpack.c.l.s4 1966171168
      %v3858 = vunpack.c.0.s8 %v3857
      %v3859 = vlaneseq
      %v3860 = vshrl.u32 %v3859, 7
      %v3861 = vsub.s32 %v3858, %v3860
      %v3862 = vrot.slane %v3855, %v3861
      %v3864 = vunpack.c.l.s4 1966171168
      %v3865 = vunpack.c.0.s8 %v3864
      %v3866 = vlaneseq
      %v3867 = vshrl.u32 %v3866, 7
      %v3868 = vsub.s32 %v3865, %v3867
      %v3869 = vrot.slane %v3862, %v3868
      %3870 = vrot.lane.b32.xlu0 %v3854, 64
      %v3871 = vpop.permute.xlu0 %3870
      %3872 = vrot.lane.b32.xlu0 %v3869, 64
      %v3873 = vpop.permute.xlu0 %3872
      %3876 = vst.msk [vmem:[#allocation10 + $0x1] sm:$0x1] %vm3708, %v3871
      %3877 = vst.msk [vmem:[#allocation10 + $0x3] sm:$0x1] %vm3708, %v3873
      %v3878 = vcombine.high %v3847, %v3847
      %v3880 = vunpack.c.l.s4 1966171168
      %v3881 = vunpack.c.0.s8 %v3880
      %v3882 = vlaneseq
      %v3883 = vshrl.u32 %v3882, 7
      %v3884 = vsub.s32 %v3881, %v3883
      %v3885 = vrot.slane %v3878, %v3884
      %v3886 = vcombine.high %v3862, %v3862
      %v3888 = vunpack.c.l.s4 1966171168
      %v3889 = vunpack.c.0.s8 %v3888
      %v3890 = vlaneseq
      %v3891 = vshrl.u32 %v3890, 7
      %v3892 = vsub.s32 %v3889, %v3891
      %v3893 = vrot.slane %v3886, %v3892
      %3894 = vrot.lane.b32.xlu0 %v3885, 80
      %v3895 = vpop.permute.xlu0 %3894
      %3896 = vrot.lane.b32.xlu0 %v3893, 80
      %v3897 = vpop.permute.xlu0 %3896
      %3900 = vst.msk [vmem:[#allocation10 + $0x1] sm:$0x1] %vm3735, %v3895
      %3901 = vst.msk [vmem:[#allocation10 + $0x3] sm:$0x1] %vm3735, %v3897
      %v3902 = vcombine.high %v3854, %v3854
      %v3903 = vcombine.high %v3869, %v3869
      %3904 = vrot.lane.b32.xlu0 %v3902, 96
      %v3905 = vpop.permute.xlu0 %3904
      %3906 = vrot.lane.b32.xlu0 %v3903, 96
      %v3907 = vpop.permute.xlu0 %3906
      %3910 = vst.msk [vmem:[#allocation10 + $0x1] sm:$0x1] %vm3748, %v3905
      %3911 = vst.msk [vmem:[#allocation10 + $0x3] sm:$0x1] %vm3748, %v3907
      %v3912 = vcombine.high %v3885, %v3885
      %v3913 = vcombine.high %v3893, %v3893
      %3914 = vrot.lane.b32.xlu0 %v3912, 112
      %v3915 = vpop.permute.xlu0 %3914
      %3916 = vrot.lane.b32.xlu0 %v3913, 112
      %v3917 = vpop.permute.xlu0 %3916
      %3920 = vst.msk [vmem:[#allocation10 + $0x1] sm:$0x1] %vm3761, %v3915
      %3921 = vst.msk [vmem:[#allocation10 + $0x3] sm:$0x1] %vm3761, %v3917
    $region29: #{tpu_custom_call.1} parent=1 // pred_fallthru
      _
    // Predicated region
    $region30: #{tpu_custom_call.1} parent=1 // pred_check
      _
    $region31: #{tpu_custom_call.1} parent=1 // pred_check_branch
      %3923 = sbr.rel (0) target = $region33
    $region32: #{tpu_custom_call.1} parent=1 // pred_region
      %s3925 = ssub.s32 64, 64
      %3926 = vsyncadd [#allocation7], %s3925
      %s3927 = sshll.u32 [#allocation10], 4
      %s3928 = int_to_ptr.vmem [resolvable:$true] %s3927
      %3933 = dma.vmem_to_hbm [thread:$0]  %s3928, 64, %s2, [#allocation7], 32, 32, 2
    $region33: #{tpu_custom_call.1} parent=1 // pred_fallthru
      _
    // Predicated region
    $region34: #{tpu_custom_call.1} parent=1 // pred_check
      _
    $region35: #{tpu_custom_call.1} parent=1 // pred_check_branch
      %3935 = sbr.rel (0) target = $region37
    $region36: #{tpu_custom_call.1} parent=1 // pred_region
      %3936 = dma.done [#allocation7], 64
    $region37: #{tpu_custom_call.1} parent=1 // pred_fallthru
      _
    %3937 = vsyncpa [#allocation6], 1
    %3938 = vsyncpa [#allocation7], 1
    %3939 = vsyncpa [#allocation8], 1

</llo_original>
